<compile_context>
chip_gen: v7x
topology: tpu7x:2x2x1
jax: 0.10.0
libtpu: 0.0.40
codegen_flags: <defaults>
</compile_context>

<pallas_src>
import jax
import jax.numpy as jnp
from jax.experimental import pallas as pl
from jax.experimental.pallas import tpu as pltpu

# ----- config (cfg.* values, small & consistent with the module) -----
D_MODEL = 32
D_FF = 64
NUM_HEADS = 4
D_K = D_MODEL // NUM_HEADS
NUM_LAYERS = 2
EPSILON = 1e-6
DROPOUT = 0.0  # TODO(synk): dropout omitted (inference/eval mode -> identity)

BATCH = 2
SEQ = 8

# packed-slab column offsets for the per-layer "A" weight slab [Wq|Wk|Wv|Wo|W_ff1]
_QKV_END = 3 * D_MODEL            # 96
_WO_END = _QKV_END + D_MODEL      # 128
_W1_END = _WO_END + D_FF          # 192
_VEC_ROWS = 8                     # bias / LayerNorm rows per layer
_VEC_WIDTH = 3 * D_MODEL          # 96 (widest packed vector = b_qkv)


def _layer_norm(h, gamma, beta):
    # nn.LayerNorm-style: biased variance over last dim.
    mu = jnp.mean(h, axis=-1, keepdims=True)
    var = jnp.mean((h - mu) ** 2, axis=-1, keepdims=True)
    return (h - mu) * jax.lax.rsqrt(var + EPSILON) * gamma + beta


def encoder_kernel(x_ref, wa_ref, w2_ref, vec_ref, out_ref, ctx_ref):
    """All NUM_LAYERS encoder layers fused in a single invocation.

    x_ref   : (B*S, D)       activations, batch*seq flattened into matmul rows
    wa_ref  : (L, D, 192)    [Wq | Wk | Wv | Wo | W_ff1] per layer
    w2_ref  : (L, D_FF, D)   W_ff2 per layer
    vec_ref : (L, 8, 96)     packed bias / LayerNorm rows per layer
    ctx_ref : (B, S, D)      VMEM scratch for the attention context (no concat)
    """
    x = x_ref[...]                                     # (BS, D)
    scale = 1.0 / jnp.sqrt(jnp.float32(D_K))

    for l in range(NUM_LAYERS):        # static unroll; activations stay on-chip
        wa = wa_ref[l]                 # (D, 192)
        w2 = w2_ref[l]                 # (D_FF, D)
        vec = vec_ref[l]               # (8, 96)

        w_qkv = wa[:, 0:_QKV_END]      # (D, 3D)
        w_o = wa[:, _QKV_END:_WO_END]  # (D, D)
        w_1 = wa[:, _WO_END:_W1_END]   # (D, D_FF)

        b_qkv = vec[0:1, 0:3 * D_MODEL]   # (1, 3D)
        b_o = vec[1:2, 0:D_MODEL]
        ln1_g = vec[2:3, 0:D_MODEL]
        ln1_b = vec[3:4, 0:D_MODEL]
        b_1 = vec[4:5, 0:D_FF]
        b_2 = vec[5:6, 0:D_MODEL]
        ln2_g = vec[6:7, 0:D_MODEL]
        ln2_b = vec[7:8, 0:D_MODEL]

        # ---- fused Q/K/V projection: one (BS,D)@(D,3D) matmul + one bias add ----
        qkv = jnp.dot(x, w_qkv, preferred_element_type=jnp.float32) + b_qkv
        q = qkv[:, 0:D_MODEL].reshape(BATCH, SEQ, D_MODEL)
        k = qkv[:, D_MODEL:2 * D_MODEL].reshape(BATCH, SEQ, D_MODEL)
        v = qkv[:, 2 * D_MODEL:3 * D_MODEL].reshape(BATCH, SEQ, D_MODEL)

        # ---- multi-head attention: batched over B, heads assembled into scratch ----
        for h in range(NUM_HEADS):
            sl = slice(h * D_K, (h + 1) * D_K)
            s = jnp.einsum("bsd,btd->bst", q[:, :, sl], k[:, :, sl],
                           preferred_element_type=jnp.float32) * scale
            s = s - jnp.max(s, axis=-1, keepdims=True)
            p = jnp.exp(s)
            p = p * pl.reciprocal(jnp.sum(p, axis=-1, keepdims=True), approx=True)
            ctx_ref[:, :, sl] = jnp.einsum("bst,btd->bsd", p, v[:, :, sl],
                                           preferred_element_type=jnp.float32)
        ctx = ctx_ref[...].reshape(BATCH * SEQ, D_MODEL)

        attn = jnp.dot(ctx, w_o, preferred_element_type=jnp.float32) + b_o

        # residual + LayerNorm 1
        h1 = _layer_norm(attn + x, ln1_g, ln1_b)

        # ---- feed forward (dropout = identity in eval) ----
        ff = jnp.dot(h1, w_1, preferred_element_type=jnp.float32) + b_1
        ff = jnp.maximum(ff, 0.0)
        ff = jnp.dot(ff, w2, preferred_element_type=jnp.float32) + b_2

        # residual + LayerNorm 2
        x = _layer_norm(ff + h1, ln2_g, ln2_b)

    out_ref[...] = x


@jax.jit
def encoder_forward(x, packed):
    wa, w2, vec = packed
    B, S, D = x.shape
    x2d = x.reshape(B * S, D)  # flatten batch into matmul rows (free, leading dims)
    out2d = pl.pallas_call(
        encoder_kernel,
        out_shape=jax.ShapeDtypeStruct((B * S, D), jnp.float32),
        # Single fused grid step. If B*S grows, add a leading "parallel" batch
        # axis so v7x's second TensorCore gets work; pointless at B=2,S=8.
        grid=(1,),
        in_specs=[
            pl.BlockSpec((B * S, D), lambda i: (0, 0)),        # activations
            pl.BlockSpec(wa.shape, lambda i: (0, 0, 0)),       # [Wq|Wk|Wv|Wo|W1] slab
            pl.BlockSpec(w2.shape, lambda i: (0, 0, 0)),       # W_ff2 slab
            pl.BlockSpec(vec.shape, lambda i: (0, 0, 0)),      # bias/LN slab
        ],
        out_specs=pl.BlockSpec((B * S, D), lambda i: (0, 0)),
        scratch_shapes=[pltpu.VMEM((B, S, D), jnp.float32)],   # attention context
        compiler_params=pltpu.CompilerParams(dimension_semantics=("arbitrary",)),
    )(x2d, wa, w2, vec)
    return out2d.reshape(B, S, D)


# ----------------- deterministic parameter init -----------------
def init_layer_params(key):
    ks = jax.random.split(key, 16)

    def lin(kw, kb, fan_in, fan_out):
        w = 0.05 * jax.random.normal(kw, (fan_in, fan_out), jnp.float32)
        b = 0.05 * jax.random.normal(kb, (1, fan_out), jnp.float32)
        return w, b

    wq, bq = lin(ks[0], ks[1], D_MODEL, D_MODEL)
    wk, bk = lin(ks[2], ks[3], D_MODEL, D_MODEL)
    wv, bv = lin(ks[4], ks[5], D_MODEL, D_MODEL)
    wo, bo = lin(ks[6], ks[7], D_MODEL, D_MODEL)
    ln1_g = 1.0 + 0.1 * jax.random.normal(ks[8], (1, D_MODEL), jnp.float32)
    ln1_b = 0.1 * jax.random.normal(ks[9], (1, D_MODEL), jnp.float32)
    ff_w1, ff_b1 = lin(ks[10], ks[11], D_MODEL, D_FF)
    ff_w2, ff_b2 = lin(ks[12], ks[13], D_FF, D_MODEL)
    ln2_g = 1.0 + 0.1 * jax.random.normal(ks[14], (1, D_MODEL), jnp.float32)
    ln2_b = 0.1 * jax.random.normal(ks[15], (1, D_MODEL), jnp.float32)
    return (wq, bq, wk, bk, wv, bv, wo, bo,
            ln1_g, ln1_b, ff_w1, ff_b1, ff_w2, ff_b2, ln2_g, ln2_b)


def pack_params(all_params):
    """Pack per-layer params into 3 stacked slabs (weights-A, W_ff2, bias/LN rows)."""
    wa_list, w2_list, vec_list = [], [], []
    for p in all_params:
        (wq, bq, wk, bk, wv, bv, wo, bo,
         ln1_g, ln1_b, ff_w1, ff_b1, ff_w2, ff_b2, ln2_g, ln2_b) = p
        wa = jnp.concatenate([wq, wk, wv, wo, ff_w1], axis=1)      # (D, 192)
        vec = jnp.zeros((_VEC_ROWS, _VEC_WIDTH), jnp.float32)
        vec = vec.at[0, :3 * D_MODEL].set(jnp.concatenate([bq, bk, bv], axis=1)[0])
        vec = vec.at[1, :D_MODEL].set(bo[0])
        vec = vec.at[2, :D_MODEL].set(ln1_g[0])
        vec = vec.at[3, :D_MODEL].set(ln1_b[0])
        vec = vec.at[4, :D_FF].set(ff_b1[0])
        vec = vec.at[5, :D_MODEL].set(ff_b2[0])
        vec = vec.at[6, :D_MODEL].set(ln2_g[0])
        vec = vec.at[7, :D_MODEL].set(ln2_b[0])
        wa_list.append(wa)
        w2_list.append(ff_w2)
        vec_list.append(vec)
    return (jnp.stack(wa_list),   # (L, D, 192)
            jnp.stack(w2_list),   # (L, D_FF, D)
            jnp.stack(vec_list))  # (L, 8, 96)


# ----------------- pure-JAX reference for a sanity check -----------------
def reference_layer(x, p):
    (wq, bq, wk, bk, wv, bv, wo, bo,
     ln1_g, ln1_b, ff_w1, ff_b1, ff_w2, ff_b2, ln2_g, ln2_b) = p
    q = x @ wq + bq
    k = x @ wk + bk
    v = x @ wv + bv
    B, S, D = x.shape

    def split(t):  # (B,S,D) -> (B,H,S,dk)
        return t.reshape(B, S, NUM_HEADS, D_K).transpose(0, 2, 1, 3)

    qh, kh, vh = split(q), split(k), split(v)
    s = jnp.einsum("bhsd,bhtd->bhst", qh, kh) / jnp.sqrt(jnp.float32(D_K))
    p_attn = jax.nn.softmax(s, axis=-1)
    ctx = jnp.einsum("bhst,bhtd->bhsd", p_attn, vh)
    ctx = ctx.transpose(0, 2, 1, 3).reshape(B, S, D)
    attn_out = ctx @ wo + bo
    h1 = _layer_norm(attn_out + x, ln1_g, ln1_b)
    ff = jnp.maximum(h1 @ ff_w1 + ff_b1, 0.0) @ ff_w2 + ff_b2
    return _layer_norm(ff + h1, ln2_g, ln2_b)


def reference_encoder(x, all_params):
    for p in all_params:
        x = reference_layer(x, p)
    return x


if __name__ == "__main__":
    key = jax.random.PRNGKey(0)
    kx, kp = jax.random.split(key)
    x = jax.random.normal(kx, (BATCH, SEQ, D_MODEL), jnp.float32)

    layer_keys = jax.random.split(kp, NUM_LAYERS)
    all_params = tuple(init_layer_params(k) for k in layer_keys)
    packed = pack_params(all_params)

    out = encoder_forward(x, packed)
    out = jax.block_until_ready(out)

    ref = reference_encoder(x, all_params)
    assert out.shape == (BATCH, SEQ, D_MODEL)
    assert jnp.allclose(out, ref, rtol=2e-3, atol=2e-3), "mismatch vs JAX reference"

    print("KERNEL_OK")
</pallas_src>

<mosaic_0001>
module attributes {stable_mosaic.version = 11 : i64} {
  func.func @encoder_kernel(%arg0: i32, %arg1: memref<16x32xf32, #tpu.memory_space<vmem>>, %arg2: memref<2x32x192xf32, #tpu.memory_space<vmem>>, %arg3: memref<2x64x32xf32, #tpu.memory_space<vmem>>, %arg4: memref<2x8x96xf32, #tpu.memory_space<vmem>>, %arg5: memref<16x32xf32, #tpu.memory_space<vmem>>, %arg6: memref<2x8x32xf32, #tpu.memory_space<vmem>>) attributes {dimension_semantics = [#tpu.dimension_semantics<arbitrary>], iteration_bounds = array<i64: 1>, scalar_prefetch = 0 : i64, scratch_operands = 1 : i64, tpu.core_type = #tpu.core_type<tc>, window_params = [{pipeline_mode = #tpu.pipeline_mode<synchronous>, transform_indices = @transform_0, window_bounds = array<i64: 16, 32>}, {pipeline_mode = #tpu.pipeline_mode<synchronous>, transform_indices = @transform_1, window_bounds = array<i64: 2, 32, 192>}, {pipeline_mode = #tpu.pipeline_mode<synchronous>, transform_indices = @transform_2, window_bounds = array<i64: 2, 64, 32>}, {pipeline_mode = #tpu.pipeline_mode<synchronous>, transform_indices = @transform_3, window_bounds = array<i64: 2, 8, 96>}, {pipeline_mode = #tpu.pipeline_mode<synchronous>, transform_indices = @transform_4, window_bounds = array<i64: 16, 32>}]} {
    %c0 = arith.constant 0 : index
    %c0_0 = arith.constant 0 : index
    %0 = vector.load %arg1[%c0, %c0_0] : memref<16x32xf32, #tpu.memory_space<vmem>>, vector<16x32xf32>
    %cst = arith.constant 8.000000e+00 : f32
    %1 = math.sqrt %cst : f32
    %cst_1 = arith.constant 1.000000e+00 : f32
    %2 = arith.divf %cst_1, %1 : f32
    %c0_2 = arith.constant 0 : index
    %c0_3 = arith.constant 0 : index
    %c0_4 = arith.constant 0 : index
    %3 = vector.load %arg2[%c0_2, %c0_3, %c0_4] : memref<2x32x192xf32, #tpu.memory_space<vmem>>, vector<1x32x192xf32>
    %4 = vector.shape_cast %3 : vector<1x32x192xf32> to vector<32x192xf32>
    %c0_5 = arith.constant 0 : index
    %c0_6 = arith.constant 0 : index
    %c0_7 = arith.constant 0 : index
    %5 = vector.load %arg3[%c0_5, %c0_6, %c0_7] : memref<2x64x32xf32, #tpu.memory_space<vmem>>, vector<1x64x32xf32>
    %6 = vector.shape_cast %5 : vector<1x64x32xf32> to vector<64x32xf32>
    %c0_8 = arith.constant 0 : index
    %c0_9 = arith.constant 0 : index
    %c0_10 = arith.constant 0 : index
    %7 = vector.load %arg4[%c0_8, %c0_9, %c0_10] : memref<2x8x96xf32, #tpu.memory_space<vmem>>, vector<1x8x96xf32>
    %8 = vector.shape_cast %7 : vector<1x8x96xf32> to vector<8x96xf32>
    %9 = vector.extract_strided_slice %4 {offsets = [0, 0], sizes = [32, 96], strides = [1, 1]} : vector<32x192xf32> to vector<32x96xf32>
    %10 = vector.extract_strided_slice %4 {offsets = [0, 96], sizes = [32, 32], strides = [1, 1]} : vector<32x192xf32> to vector<32x32xf32>
    %11 = vector.extract_strided_slice %4 {offsets = [0, 128], sizes = [32, 64], strides = [1, 1]} : vector<32x192xf32> to vector<32x64xf32>
    %12 = vector.extract_strided_slice %8 {offsets = [0, 0], sizes = [1, 96], strides = [1, 1]} : vector<8x96xf32> to vector<1x96xf32>
    %13 = vector.extract_strided_slice %8 {offsets = [1, 0], sizes = [1, 32], strides = [1, 1]} : vector<8x96xf32> to vector<1x32xf32>
    %14 = vector.extract_strided_slice %8 {offsets = [2, 0], sizes = [1, 32], strides = [1, 1]} : vector<8x96xf32> to vector<1x32xf32>
    %15 = vector.extract_strided_slice %8 {offsets = [3, 0], sizes = [1, 32], strides = [1, 1]} : vector<8x96xf32> to vector<1x32xf32>
    %16 = vector.extract_strided_slice %8 {offsets = [4, 0], sizes = [1, 64], strides = [1, 1]} : vector<8x96xf32> to vector<1x64xf32>
    %17 = vector.extract_strided_slice %8 {offsets = [5, 0], sizes = [1, 32], strides = [1, 1]} : vector<8x96xf32> to vector<1x32xf32>
    %18 = vector.extract_strided_slice %8 {offsets = [6, 0], sizes = [1, 32], strides = [1, 1]} : vector<8x96xf32> to vector<1x32xf32>
    %19 = vector.extract_strided_slice %8 {offsets = [7, 0], sizes = [1, 32], strides = [1, 1]} : vector<8x96xf32> to vector<1x32xf32>
    %cst_11 = arith.constant dense<0.000000e+00> : vector<16x96xf32>
    %20 = tpu.matmul %0, %9, %cst_11 {dimension_numbers = #tpu.dot_dimension_numbers<[1], [0], [0], [1], [0, 0, 1, 1], [], []>} : vector<16x32xf32>, vector<32x96xf32>, vector<16x96xf32> -> vector<16x96xf32>
    %21 = vector.broadcast %12 : vector<1x96xf32> to vector<16x96xf32>
    %22 = arith.addf %20, %21 : vector<16x96xf32>
    %23 = vector.extract_strided_slice %22 {offsets = [0, 0], sizes = [16, 32], strides = [1, 1]} : vector<16x96xf32> to vector<16x32xf32>
    %24 = vector.shape_cast %23 : vector<16x32xf32> to vector<2x8x32xf32>
    %25 = vector.extract_strided_slice %22 {offsets = [0, 32], sizes = [16, 32], strides = [1, 1]} : vector<16x96xf32> to vector<16x32xf32>
    %26 = vector.shape_cast %25 : vector<16x32xf32> to vector<2x8x32xf32>
    %27 = vector.extract_strided_slice %22 {offsets = [0, 64], sizes = [16, 32], strides = [1, 1]} : vector<16x96xf32> to vector<16x32xf32>
    %28 = vector.shape_cast %27 : vector<16x32xf32> to vector<2x8x32xf32>
    %29 = vector.extract_strided_slice %24 {offsets = [0, 0, 0], sizes = [2, 8, 8], strides = [1, 1, 1]} : vector<2x8x32xf32> to vector<2x8x8xf32>
    %30 = vector.extract_strided_slice %26 {offsets = [0, 0, 0], sizes = [2, 8, 8], strides = [1, 1, 1]} : vector<2x8x32xf32> to vector<2x8x8xf32>
    "tpu.trace_start"() <{level = 10 : i32, message = "bsd,btd->bst"}> : () -> ()
    %cst_12 = arith.constant dense<0.000000e+00> : vector<2x8x8xf32>
    %31 = tpu.matmul %29, %30, %cst_12 {dimension_numbers = #tpu.dot_dimension_numbers<[2], [2], [1], [1], [0, 0, 0, 1, 1, 1], [0], [0]>} : vector<2x8x8xf32>, vector<2x8x8xf32>, vector<2x8x8xf32> -> vector<2x8x8xf32>
    "tpu.trace_stop"() : () -> ()
    %32 = vector.broadcast %2 : f32 to vector<2x8x8xf32>
    %33 = arith.mulf %31, %32 : vector<2x8x8xf32>
    %cst_13 = arith.constant dense<0xFF800000> : vector<2x8xf32>
    %34 = vector.multi_reduction <maximumf>, %33, %cst_13 [2] : vector<2x8x8xf32> to vector<2x8xf32>
    %35 = vector.shape_cast %34 : vector<2x8xf32> to vector<2x8x1xf32>
    %36 = vector.broadcast %35 : vector<2x8x1xf32> to vector<2x8x8xf32>
    %37 = arith.subf %33, %36 : vector<2x8x8xf32>
    %38 = math.exp %37 : vector<2x8x8xf32>
    %cst_14 = arith.constant dense<0.000000e+00> : vector<2x8xf32>
    %39 = vector.multi_reduction <add>, %38, %cst_14 [2] : vector<2x8x8xf32> to vector<2x8xf32>
    %40 = vector.shape_cast %39 : vector<2x8xf32> to vector<2x8x1xf32>
    %41 = tpu.reciprocal %40 {approx = true} : vector<2x8x1xf32> -> vector<2x8x1xf32>
    %42 = vector.broadcast %41 : vector<2x8x1xf32> to vector<2x8x8xf32>
    %43 = arith.mulf %38, %42 : vector<2x8x8xf32>
    %44 = vector.extract_strided_slice %28 {offsets = [0, 0, 0], sizes = [2, 8, 8], strides = [1, 1, 1]} : vector<2x8x32xf32> to vector<2x8x8xf32>
    "tpu.trace_start"() <{level = 10 : i32, message = "bst,btd->bsd"}> : () -> ()
    %cst_15 = arith.constant dense<0.000000e+00> : vector<2x8x8xf32>
    %45 = tpu.matmul %43, %44, %cst_15 {dimension_numbers = #tpu.dot_dimension_numbers<[2], [1], [1], [2], [0, 0, 0, 1, 1, 2], [0], [0]>} : vector<2x8x8xf32>, vector<2x8x8xf32>, vector<2x8x8xf32> -> vector<2x8x8xf32>
    "tpu.trace_stop"() : () -> ()
    %c0_16 = arith.constant 0 : index
    %c0_17 = arith.constant 0 : index
    %c0_18 = arith.constant 0 : index
    %46 = vector.load %arg6[%c0_16, %c0_17, %c0_18] : memref<2x8x32xf32, #tpu.memory_space<vmem>>, vector<2x8x8xf32>
    tpu.vector_store %arg6[%c0_16, %c0_17, %c0_18], %45 {strides = array<i32>} : memref<2x8x32xf32, #tpu.memory_space<vmem>>, vector<2x8x8xf32>,
    %47 = vector.extract_strided_slice %24 {offsets = [0, 0, 8], sizes = [2, 8, 8], strides = [1, 1, 1]} : vector<2x8x32xf32> to vector<2x8x8xf32>
    %48 = vector.extract_strided_slice %26 {offsets = [0, 0, 8], sizes = [2, 8, 8], strides = [1, 1, 1]} : vector<2x8x32xf32> to vector<2x8x8xf32>
    "tpu.trace_start"() <{level = 10 : i32, message = "bsd,btd->bst"}> : () -> ()
    %cst_19 = arith.constant dense<0.000000e+00> : vector<2x8x8xf32>
    %49 = tpu.matmul %47, %48, %cst_19 {dimension_numbers = #tpu.dot_dimension_numbers<[2], [2], [1], [1], [0, 0, 0, 1, 1, 1], [0], [0]>} : vector<2x8x8xf32>, vector<2x8x8xf32>, vector<2x8x8xf32> -> vector<2x8x8xf32>
    "tpu.trace_stop"() : () -> ()
    %50 = vector.broadcast %2 : f32 to vector<2x8x8xf32>
    %51 = arith.mulf %49, %50 : vector<2x8x8xf32>
    %cst_20 = arith.constant dense<0xFF800000> : vector<2x8xf32>
    %52 = vector.multi_reduction <maximumf>, %51, %cst_20 [2] : vector<2x8x8xf32> to vector<2x8xf32>
    %53 = vector.shape_cast %52 : vector<2x8xf32> to vector<2x8x1xf32>
    %54 = vector.broadcast %53 : vector<2x8x1xf32> to vector<2x8x8xf32>
    %55 = arith.subf %51, %54 : vector<2x8x8xf32>
    %56 = math.exp %55 : vector<2x8x8xf32>
    %cst_21 = arith.constant dense<0.000000e+00> : vector<2x8xf32>
    %57 = vector.multi_reduction <add>, %56, %cst_21 [2] : vector<2x8x8xf32> to vector<2x8xf32>
    %58 = vector.shape_cast %57 : vector<2x8xf32> to vector<2x8x1xf32>
    %59 = tpu.reciprocal %58 {approx = true} : vector<2x8x1xf32> -> vector<2x8x1xf32>
    %60 = vector.broadcast %59 : vector<2x8x1xf32> to vector<2x8x8xf32>
    %61 = arith.mulf %56, %60 : vector<2x8x8xf32>
    %62 = vector.extract_strided_slice %28 {offsets = [0, 0, 8], sizes = [2, 8, 8], strides = [1, 1, 1]} : vector<2x8x32xf32> to vector<2x8x8xf32>
    "tpu.trace_start"() <{level = 10 : i32, message = "bst,btd->bsd"}> : () -> ()
    %cst_22 = arith.constant dense<0.000000e+00> : vector<2x8x8xf32>
    %63 = tpu.matmul %61, %62, %cst_22 {dimension_numbers = #tpu.dot_dimension_numbers<[2], [1], [1], [2], [0, 0, 0, 1, 1, 2], [0], [0]>} : vector<2x8x8xf32>, vector<2x8x8xf32>, vector<2x8x8xf32> -> vector<2x8x8xf32>
    "tpu.trace_stop"() : () -> ()
    %c0_23 = arith.constant 0 : index
    %c0_24 = arith.constant 0 : index
    %c8 = arith.constant 8 : index
    %64 = vector.load %arg6[%c0_23, %c0_24, %c8] : memref<2x8x32xf32, #tpu.memory_space<vmem>>, vector<2x8x8xf32>
    tpu.vector_store %arg6[%c0_23, %c0_24, %c8], %63 {strides = array<i32>} : memref<2x8x32xf32, #tpu.memory_space<vmem>>, vector<2x8x8xf32>,
    %65 = vector.extract_strided_slice %24 {offsets = [0, 0, 16], sizes = [2, 8, 8], strides = [1, 1, 1]} : vector<2x8x32xf32> to vector<2x8x8xf32>
    %66 = vector.extract_strided_slice %26 {offsets = [0, 0, 16], sizes = [2, 8, 8], strides = [1, 1, 1]} : vector<2x8x32xf32> to vector<2x8x8xf32>
    "tpu.trace_start"() <{level = 10 : i32, message = "bsd,btd->bst"}> : () -> ()
    %cst_25 = arith.constant dense<0.000000e+00> : vector<2x8x8xf32>
    %67 = tpu.matmul %65, %66, %cst_25 {dimension_numbers = #tpu.dot_dimension_numbers<[2], [2], [1], [1], [0, 0, 0, 1, 1, 1], [0], [0]>} : vector<2x8x8xf32>, vector<2x8x8xf32>, vector<2x8x8xf32> -> vector<2x8x8xf32>
    "tpu.trace_stop"() : () -> ()
    %68 = vector.broadcast %2 : f32 to vector<2x8x8xf32>
    %69 = arith.mulf %67, %68 : vector<2x8x8xf32>
    %cst_26 = arith.constant dense<0xFF800000> : vector<2x8xf32>
    %70 = vector.multi_reduction <maximumf>, %69, %cst_26 [2] : vector<2x8x8xf32> to vector<2x8xf32>
    %71 = vector.shape_cast %70 : vector<2x8xf32> to vector<2x8x1xf32>
    %72 = vector.broadcast %71 : vector<2x8x1xf32> to vector<2x8x8xf32>
    %73 = arith.subf %69, %72 : vector<2x8x8xf32>
    %74 = math.exp %73 : vector<2x8x8xf32>
    %cst_27 = arith.constant dense<0.000000e+00> : vector<2x8xf32>
    %75 = vector.multi_reduction <add>, %74, %cst_27 [2] : vector<2x8x8xf32> to vector<2x8xf32>
    %76 = vector.shape_cast %75 : vector<2x8xf32> to vector<2x8x1xf32>
    %77 = tpu.reciprocal %76 {approx = true} : vector<2x8x1xf32> -> vector<2x8x1xf32>
    %78 = vector.broadcast %77 : vector<2x8x1xf32> to vector<2x8x8xf32>
    %79 = arith.mulf %74, %78 : vector<2x8x8xf32>
    %80 = vector.extract_strided_slice %28 {offsets = [0, 0, 16], sizes = [2, 8, 8], strides = [1, 1, 1]} : vector<2x8x32xf32> to vector<2x8x8xf32>
    "tpu.trace_start"() <{level = 10 : i32, message = "bst,btd->bsd"}> : () -> ()
    %cst_28 = arith.constant dense<0.000000e+00> : vector<2x8x8xf32>
    %81 = tpu.matmul %79, %80, %cst_28 {dimension_numbers = #tpu.dot_dimension_numbers<[2], [1], [1], [2], [0, 0, 0, 1, 1, 2], [0], [0]>} : vector<2x8x8xf32>, vector<2x8x8xf32>, vector<2x8x8xf32> -> vector<2x8x8xf32>
    "tpu.trace_stop"() : () -> ()
    %c0_29 = arith.constant 0 : index
    %c0_30 = arith.constant 0 : index
    %c16 = arith.constant 16 : index
    %82 = vector.load %arg6[%c0_29, %c0_30, %c16] : memref<2x8x32xf32, #tpu.memory_space<vmem>>, vector<2x8x8xf32>
    tpu.vector_store %arg6[%c0_29, %c0_30, %c16], %81 {strides = array<i32>} : memref<2x8x32xf32, #tpu.memory_space<vmem>>, vector<2x8x8xf32>,
    %83 = vector.extract_strided_slice %24 {offsets = [0, 0, 24], sizes = [2, 8, 8], strides = [1, 1, 1]} : vector<2x8x32xf32> to vector<2x8x8xf32>
    %84 = vector.extract_strided_slice %26 {offsets = [0, 0, 24], sizes = [2, 8, 8], strides = [1, 1, 1]} : vector<2x8x32xf32> to vector<2x8x8xf32>
    "tpu.trace_start"() <{level = 10 : i32, message = "bsd,btd->bst"}> : () -> ()
    %cst_31 = arith.constant dense<0.000000e+00> : vector<2x8x8xf32>
    %85 = tpu.matmul %83, %84, %cst_31 {dimension_numbers = #tpu.dot_dimension_numbers<[2], [2], [1], [1], [0, 0, 0, 1, 1, 1], [0], [0]>} : vector<2x8x8xf32>, vector<2x8x8xf32>, vector<2x8x8xf32> -> vector<2x8x8xf32>
    "tpu.trace_stop"() : () -> ()
    %86 = vector.broadcast %2 : f32 to vector<2x8x8xf32>
    %87 = arith.mulf %85, %86 : vector<2x8x8xf32>
    %cst_32 = arith.constant dense<0xFF800000> : vector<2x8xf32>
    %88 = vector.multi_reduction <maximumf>, %87, %cst_32 [2] : vector<2x8x8xf32> to vector<2x8xf32>
    %89 = vector.shape_cast %88 : vector<2x8xf32> to vector<2x8x1xf32>
    %90 = vector.broadcast %89 : vector<2x8x1xf32> to vector<2x8x8xf32>
    %91 = arith.subf %87, %90 : vector<2x8x8xf32>
    %92 = math.exp %91 : vector<2x8x8xf32>
    %cst_33 = arith.constant dense<0.000000e+00> : vector<2x8xf32>
    %93 = vector.multi_reduction <add>, %92, %cst_33 [2] : vector<2x8x8xf32> to vector<2x8xf32>
    %94 = vector.shape_cast %93 : vector<2x8xf32> to vector<2x8x1xf32>
    %95 = tpu.reciprocal %94 {approx = true} : vector<2x8x1xf32> -> vector<2x8x1xf32>
    %96 = vector.broadcast %95 : vector<2x8x1xf32> to vector<2x8x8xf32>
    %97 = arith.mulf %92, %96 : vector<2x8x8xf32>
    %98 = vector.extract_strided_slice %28 {offsets = [0, 0, 24], sizes = [2, 8, 8], strides = [1, 1, 1]} : vector<2x8x32xf32> to vector<2x8x8xf32>
    "tpu.trace_start"() <{level = 10 : i32, message = "bst,btd->bsd"}> : () -> ()
    %cst_34 = arith.constant dense<0.000000e+00> : vector<2x8x8xf32>
    %99 = tpu.matmul %97, %98, %cst_34 {dimension_numbers = #tpu.dot_dimension_numbers<[2], [1], [1], [2], [0, 0, 0, 1, 1, 2], [0], [0]>} : vector<2x8x8xf32>, vector<2x8x8xf32>, vector<2x8x8xf32> -> vector<2x8x8xf32>
    "tpu.trace_stop"() : () -> ()
    %c0_35 = arith.constant 0 : index
    %c0_36 = arith.constant 0 : index
    %c24 = arith.constant 24 : index
    %100 = vector.load %arg6[%c0_35, %c0_36, %c24] : memref<2x8x32xf32, #tpu.memory_space<vmem>>, vector<2x8x8xf32>
    tpu.vector_store %arg6[%c0_35, %c0_36, %c24], %99 {strides = array<i32>} : memref<2x8x32xf32, #tpu.memory_space<vmem>>, vector<2x8x8xf32>,
    %c0_37 = arith.constant 0 : index
    %c0_38 = arith.constant 0 : index
    %c0_39 = arith.constant 0 : index
    %101 = vector.load %arg6[%c0_37, %c0_38, %c0_39] : memref<2x8x32xf32, #tpu.memory_space<vmem>>, vector<2x8x32xf32>
    %102 = vector.shape_cast %101 : vector<2x8x32xf32> to vector<16x32xf32>
    %cst_40 = arith.constant dense<0.000000e+00> : vector<16x32xf32>
    %103 = tpu.matmul %102, %10, %cst_40 {dimension_numbers = #tpu.dot_dimension_numbers<[1], [0], [0], [1], [0, 0, 1, 1], [], []>} : vector<16x32xf32>, vector<32x32xf32>, vector<16x32xf32> -> vector<16x32xf32>
    %104 = vector.broadcast %13 : vector<1x32xf32> to vector<16x32xf32>
    %105 = arith.addf %103, %104 : vector<16x32xf32>
    %106 = arith.addf %105, %0 : vector<16x32xf32>
    %cst_41 = arith.constant dense<0.000000e+00> : vector<16xf32>
    %107 = vector.multi_reduction <add>, %106, %cst_41 [1] : vector<16x32xf32> to vector<16xf32>
    %108 = vector.shape_cast %107 : vector<16xf32> to vector<16x1xf32>
    %cst_42 = arith.constant 3.200000e+01 : f32
    %109 = vector.broadcast %cst_42 : f32 to vector<16x1xf32>
    %110 = arith.divf %108, %109 : vector<16x1xf32>
    %111 = vector.broadcast %110 : vector<16x1xf32> to vector<16x32xf32>
    %112 = arith.subf %106, %111 : vector<16x32xf32>
    %113 = arith.mulf %112, %112 : vector<16x32xf32>
    %cst_43 = arith.constant dense<0.000000e+00> : vector<16xf32>
    %114 = vector.multi_reduction <add>, %113, %cst_43 [1] : vector<16x32xf32> to vector<16xf32>
    %115 = vector.shape_cast %114 : vector<16xf32> to vector<16x1xf32>
    %cst_44 = arith.constant 3.200000e+01 : f32
    %116 = vector.broadcast %cst_44 : f32 to vector<16x1xf32>
    %117 = arith.divf %115, %116 : vector<16x1xf32>
    %118 = vector.broadcast %110 : vector<16x1xf32> to vector<16x32xf32>
    %119 = arith.subf %106, %118 : vector<16x32xf32>
    %cst_45 = arith.constant 9.99999997E-7 : f32
    %120 = vector.broadcast %cst_45 : f32 to vector<16x1xf32>
    %121 = arith.addf %117, %120 : vector<16x1xf32>
    %122 = math.rsqrt %121 : vector<16x1xf32>
    %123 = vector.broadcast %122 : vector<16x1xf32> to vector<16x32xf32>
    %124 = arith.mulf %119, %123 : vector<16x32xf32>
    %125 = vector.broadcast %14 : vector<1x32xf32> to vector<16x32xf32>
    %126 = arith.mulf %124, %125 : vector<16x32xf32>
    %127 = vector.broadcast %15 : vector<1x32xf32> to vector<16x32xf32>
    %128 = arith.addf %126, %127 : vector<16x32xf32>
    %cst_46 = arith.constant dense<0.000000e+00> : vector<16x64xf32>
    %129 = tpu.matmul %128, %11, %cst_46 {dimension_numbers = #tpu.dot_dimension_numbers<[1], [0], [0], [1], [0, 0, 1, 1], [], []>} : vector<16x32xf32>, vector<32x64xf32>, vector<16x64xf32> -> vector<16x64xf32>
    %130 = vector.broadcast %16 : vector<1x64xf32> to vector<16x64xf32>
    %131 = arith.addf %129, %130 : vector<16x64xf32>
    %cst_47 = arith.constant 0.000000e+00 : f32
    %132 = vector.broadcast %cst_47 : f32 to vector<16x64xf32>
    %133 = arith.maximumf %131, %132 : vector<16x64xf32>
    %cst_48 = arith.constant dense<0.000000e+00> : vector<16x32xf32>
    %134 = tpu.matmul %133, %6, %cst_48 {dimension_numbers = #tpu.dot_dimension_numbers<[1], [0], [0], [1], [0, 0, 1, 1], [], []>} : vector<16x64xf32>, vector<64x32xf32>, vector<16x32xf32> -> vector<16x32xf32>
    %135 = vector.broadcast %17 : vector<1x32xf32> to vector<16x32xf32>
    %136 = arith.addf %134, %135 : vector<16x32xf32>
    %137 = arith.addf %136, %128 : vector<16x32xf32>
    %cst_49 = arith.constant dense<0.000000e+00> : vector<16xf32>
    %138 = vector.multi_reduction <add>, %137, %cst_49 [1] : vector<16x32xf32> to vector<16xf32>
    %139 = vector.shape_cast %138 : vector<16xf32> to vector<16x1xf32>
    %cst_50 = arith.constant 3.200000e+01 : f32
    %140 = vector.broadcast %cst_50 : f32 to vector<16x1xf32>
    %141 = arith.divf %139, %140 : vector<16x1xf32>
    %142 = vector.broadcast %141 : vector<16x1xf32> to vector<16x32xf32>
    %143 = arith.subf %137, %142 : vector<16x32xf32>
    %144 = arith.mulf %143, %143 : vector<16x32xf32>
    %cst_51 = arith.constant dense<0.000000e+00> : vector<16xf32>
    %145 = vector.multi_reduction <add>, %144, %cst_51 [1] : vector<16x32xf32> to vector<16xf32>
    %146 = vector.shape_cast %145 : vector<16xf32> to vector<16x1xf32>
    %cst_52 = arith.constant 3.200000e+01 : f32
    %147 = vector.broadcast %cst_52 : f32 to vector<16x1xf32>
    %148 = arith.divf %146, %147 : vector<16x1xf32>
    %149 = vector.broadcast %141 : vector<16x1xf32> to vector<16x32xf32>
    %150 = arith.subf %137, %149 : vector<16x32xf32>
    %cst_53 = arith.constant 9.99999997E-7 : f32
    %151 = vector.broadcast %cst_53 : f32 to vector<16x1xf32>
    %152 = arith.addf %148, %151 : vector<16x1xf32>
    %153 = math.rsqrt %152 : vector<16x1xf32>
    %154 = vector.broadcast %153 : vector<16x1xf32> to vector<16x32xf32>
    %155 = arith.mulf %150, %154 : vector<16x32xf32>
    %156 = vector.broadcast %18 : vector<1x32xf32> to vector<16x32xf32>
    %157 = arith.mulf %155, %156 : vector<16x32xf32>
    %158 = vector.broadcast %19 : vector<1x32xf32> to vector<16x32xf32>
    %159 = arith.addf %157, %158 : vector<16x32xf32>
    %c1 = arith.constant 1 : index
    %c0_54 = arith.constant 0 : index
    %c0_55 = arith.constant 0 : index
    %160 = vector.load %arg2[%c1, %c0_54, %c0_55] : memref<2x32x192xf32, #tpu.memory_space<vmem>>, vector<1x32x192xf32>
    %161 = vector.shape_cast %160 : vector<1x32x192xf32> to vector<32x192xf32>
    %c1_56 = arith.constant 1 : index
    %c0_57 = arith.constant 0 : index
    %c0_58 = arith.constant 0 : index
    %162 = vector.load %arg3[%c1_56, %c0_57, %c0_58] : memref<2x64x32xf32, #tpu.memory_space<vmem>>, vector<1x64x32xf32>
    %163 = vector.shape_cast %162 : vector<1x64x32xf32> to vector<64x32xf32>
    %c1_59 = arith.constant 1 : index
    %c0_60 = arith.constant 0 : index
    %c0_61 = arith.constant 0 : index
    %164 = vector.load %arg4[%c1_59, %c0_60, %c0_61] : memref<2x8x96xf32, #tpu.memory_space<vmem>>, vector<1x8x96xf32>
    %165 = vector.shape_cast %164 : vector<1x8x96xf32> to vector<8x96xf32>
    %166 = vector.extract_strided_slice %161 {offsets = [0, 0], sizes = [32, 96], strides = [1, 1]} : vector<32x192xf32> to vector<32x96xf32>
    %167 = vector.extract_strided_slice %161 {offsets = [0, 96], sizes = [32, 32], strides = [1, 1]} : vector<32x192xf32> to vector<32x32xf32>
    %168 = vector.extract_strided_slice %161 {offsets = [0, 128], sizes = [32, 64], strides = [1, 1]} : vector<32x192xf32> to vector<32x64xf32>
    %169 = vector.extract_strided_slice %165 {offsets = [0, 0], sizes = [1, 96], strides = [1, 1]} : vector<8x96xf32> to vector<1x96xf32>
    %170 = vector.extract_strided_slice %165 {offsets = [1, 0], sizes = [1, 32], strides = [1, 1]} : vector<8x96xf32> to vector<1x32xf32>
    %171 = vector.extract_strided_slice %165 {offsets = [2, 0], sizes = [1, 32], strides = [1, 1]} : vector<8x96xf32> to vector<1x32xf32>
    %172 = vector.extract_strided_slice %165 {offsets = [3, 0], sizes = [1, 32], strides = [1, 1]} : vector<8x96xf32> to vector<1x32xf32>
    %173 = vector.extract_strided_slice %165 {offsets = [4, 0], sizes = [1, 64], strides = [1, 1]} : vector<8x96xf32> to vector<1x64xf32>
    %174 = vector.extract_strided_slice %165 {offsets = [5, 0], sizes = [1, 32], strides = [1, 1]} : vector<8x96xf32> to vector<1x32xf32>
    %175 = vector.extract_strided_slice %165 {offsets = [6, 0], sizes = [1, 32], strides = [1, 1]} : vector<8x96xf32> to vector<1x32xf32>
    %176 = vector.extract_strided_slice %165 {offsets = [7, 0], sizes = [1, 32], strides = [1, 1]} : vector<8x96xf32> to vector<1x32xf32>
    %cst_62 = arith.constant dense<0.000000e+00> : vector<16x96xf32>
    %177 = tpu.matmul %159, %166, %cst_62 {dimension_numbers = #tpu.dot_dimension_numbers<[1], [0], [0], [1], [0, 0, 1, 1], [], []>} : vector<16x32xf32>, vector<32x96xf32>, vector<16x96xf32> -> vector<16x96xf32>
    %178 = vector.broadcast %169 : vector<1x96xf32> to vector<16x96xf32>
    %179 = arith.addf %177, %178 : vector<16x96xf32>
    %180 = vector.extract_strided_slice %179 {offsets = [0, 0], sizes = [16, 32], strides = [1, 1]} : vector<16x96xf32> to vector<16x32xf32>
    %181 = vector.shape_cast %180 : vector<16x32xf32> to vector<2x8x32xf32>
    %182 = vector.extract_strided_slice %179 {offsets = [0, 32], sizes = [16, 32], strides = [1, 1]} : vector<16x96xf32> to vector<16x32xf32>
    %183 = vector.shape_cast %182 : vector<16x32xf32> to vector<2x8x32xf32>
    %184 = vector.extract_strided_slice %179 {offsets = [0, 64], sizes = [16, 32], strides = [1, 1]} : vector<16x96xf32> to vector<16x32xf32>
    %185 = vector.shape_cast %184 : vector<16x32xf32> to vector<2x8x32xf32>
    %186 = vector.extract_strided_slice %181 {offsets = [0, 0, 0], sizes = [2, 8, 8], strides = [1, 1, 1]} : vector<2x8x32xf32> to vector<2x8x8xf32>
    %187 = vector.extract_strided_slice %183 {offsets = [0, 0, 0], sizes = [2, 8, 8], strides = [1, 1, 1]} : vector<2x8x32xf32> to vector<2x8x8xf32>
    "tpu.trace_start"() <{level = 10 : i32, message = "bsd,btd->bst"}> : () -> ()
    %cst_63 = arith.constant dense<0.000000e+00> : vector<2x8x8xf32>
    %188 = tpu.matmul %186, %187, %cst_63 {dimension_numbers = #tpu.dot_dimension_numbers<[2], [2], [1], [1], [0, 0, 0, 1, 1, 1], [0], [0]>} : vector<2x8x8xf32>, vector<2x8x8xf32>, vector<2x8x8xf32> -> vector<2x8x8xf32>
    "tpu.trace_stop"() : () -> ()
    %189 = vector.broadcast %2 : f32 to vector<2x8x8xf32>
    %190 = arith.mulf %188, %189 : vector<2x8x8xf32>
    %cst_64 = arith.constant dense<0xFF800000> : vector<2x8xf32>
    %191 = vector.multi_reduction <maximumf>, %190, %cst_64 [2] : vector<2x8x8xf32> to vector<2x8xf32>
    %192 = vector.shape_cast %191 : vector<2x8xf32> to vector<2x8x1xf32>
    %193 = vector.broadcast %192 : vector<2x8x1xf32> to vector<2x8x8xf32>
    %194 = arith.subf %190, %193 : vector<2x8x8xf32>
    %195 = math.exp %194 : vector<2x8x8xf32>
    %cst_65 = arith.constant dense<0.000000e+00> : vector<2x8xf32>
    %196 = vector.multi_reduction <add>, %195, %cst_65 [2] : vector<2x8x8xf32> to vector<2x8xf32>
    %197 = vector.shape_cast %196 : vector<2x8xf32> to vector<2x8x1xf32>
    %198 = tpu.reciprocal %197 {approx = true} : vector<2x8x1xf32> -> vector<2x8x1xf32>
    %199 = vector.broadcast %198 : vector<2x8x1xf32> to vector<2x8x8xf32>
    %200 = arith.mulf %195, %199 : vector<2x8x8xf32>
    %201 = vector.extract_strided_slice %185 {offsets = [0, 0, 0], sizes = [2, 8, 8], strides = [1, 1, 1]} : vector<2x8x32xf32> to vector<2x8x8xf32>
    "tpu.trace_start"() <{level = 10 : i32, message = "bst,btd->bsd"}> : () -> ()
    %cst_66 = arith.constant dense<0.000000e+00> : vector<2x8x8xf32>
    %202 = tpu.matmul %200, %201, %cst_66 {dimension_numbers = #tpu.dot_dimension_numbers<[2], [1], [1], [2], [0, 0, 0, 1, 1, 2], [0], [0]>} : vector<2x8x8xf32>, vector<2x8x8xf32>, vector<2x8x8xf32> -> vector<2x8x8xf32>
    "tpu.trace_stop"() : () -> ()
    %c0_67 = arith.constant 0 : index
    %c0_68 = arith.constant 0 : index
    %c0_69 = arith.constant 0 : index
    %203 = vector.load %arg6[%c0_67, %c0_68, %c0_69] : memref<2x8x32xf32, #tpu.memory_space<vmem>>, vector<2x8x8xf32>
    tpu.vector_store %arg6[%c0_67, %c0_68, %c0_69], %202 {strides = array<i32>} : memref<2x8x32xf32, #tpu.memory_space<vmem>>, vector<2x8x8xf32>,
    %204 = vector.extract_strided_slice %181 {offsets = [0, 0, 8], sizes = [2, 8, 8], strides = [1, 1, 1]} : vector<2x8x32xf32> to vector<2x8x8xf32>
    %205 = vector.extract_strided_slice %183 {offsets = [0, 0, 8], sizes = [2, 8, 8], strides = [1, 1, 1]} : vector<2x8x32xf32> to vector<2x8x8xf32>
    "tpu.trace_start"() <{level = 10 : i32, message = "bsd,btd->bst"}> : () -> ()
    %cst_70 = arith.constant dense<0.000000e+00> : vector<2x8x8xf32>
    %206 = tpu.matmul %204, %205, %cst_70 {dimension_numbers = #tpu.dot_dimension_numbers<[2], [2], [1], [1], [0, 0, 0, 1, 1, 1], [0], [0]>} : vector<2x8x8xf32>, vector<2x8x8xf32>, vector<2x8x8xf32> -> vector<2x8x8xf32>
    "tpu.trace_stop"() : () -> ()
    %207 = vector.broadcast %2 : f32 to vector<2x8x8xf32>
    %208 = arith.mulf %206, %207 : vector<2x8x8xf32>
    %cst_71 = arith.constant dense<0xFF800000> : vector<2x8xf32>
    %209 = vector.multi_reduction <maximumf>, %208, %cst_71 [2] : vector<2x8x8xf32> to vector<2x8xf32>
    %210 = vector.shape_cast %209 : vector<2x8xf32> to vector<2x8x1xf32>
    %211 = vector.broadcast %210 : vector<2x8x1xf32> to vector<2x8x8xf32>
    %212 = arith.subf %208, %211 : vector<2x8x8xf32>
    %213 = math.exp %212 : vector<2x8x8xf32>
    %cst_72 = arith.constant dense<0.000000e+00> : vector<2x8xf32>
    %214 = vector.multi_reduction <add>, %213, %cst_72 [2] : vector<2x8x8xf32> to vector<2x8xf32>
    %215 = vector.shape_cast %214 : vector<2x8xf32> to vector<2x8x1xf32>
    %216 = tpu.reciprocal %215 {approx = true} : vector<2x8x1xf32> -> vector<2x8x1xf32>
    %217 = vector.broadcast %216 : vector<2x8x1xf32> to vector<2x8x8xf32>
    %218 = arith.mulf %213, %217 : vector<2x8x8xf32>
    %219 = vector.extract_strided_slice %185 {offsets = [0, 0, 8], sizes = [2, 8, 8], strides = [1, 1, 1]} : vector<2x8x32xf32> to vector<2x8x8xf32>
    "tpu.trace_start"() <{level = 10 : i32, message = "bst,btd->bsd"}> : () -> ()
    %cst_73 = arith.constant dense<0.000000e+00> : vector<2x8x8xf32>
    %220 = tpu.matmul %218, %219, %cst_73 {dimension_numbers = #tpu.dot_dimension_numbers<[2], [1], [1], [2], [0, 0, 0, 1, 1, 2], [0], [0]>} : vector<2x8x8xf32>, vector<2x8x8xf32>, vector<2x8x8xf32> -> vector<2x8x8xf32>
    "tpu.trace_stop"() : () -> ()
    %c0_74 = arith.constant 0 : index
    %c0_75 = arith.constant 0 : index
    %c8_76 = arith.constant 8 : index
    %221 = vector.load %arg6[%c0_74, %c0_75, %c8_76] : memref<2x8x32xf32, #tpu.memory_space<vmem>>, vector<2x8x8xf32>
    tpu.vector_store %arg6[%c0_74, %c0_75, %c8_76], %220 {strides = array<i32>} : memref<2x8x32xf32, #tpu.memory_space<vmem>>, vector<2x8x8xf32>,
    %222 = vector.extract_strided_slice %181 {offsets = [0, 0, 16], sizes = [2, 8, 8], strides = [1, 1, 1]} : vector<2x8x32xf32> to vector<2x8x8xf32>
    %223 = vector.extract_strided_slice %183 {offsets = [0, 0, 16], sizes = [2, 8, 8], strides = [1, 1, 1]} : vector<2x8x32xf32> to vector<2x8x8xf32>
    "tpu.trace_start"() <{level = 10 : i32, message = "bsd,btd->bst"}> : () -> ()
    %cst_77 = arith.constant dense<0.000000e+00> : vector<2x8x8xf32>
    %224 = tpu.matmul %222, %223, %cst_77 {dimension_numbers = #tpu.dot_dimension_numbers<[2], [2], [1], [1], [0, 0, 0, 1, 1, 1], [0], [0]>} : vector<2x8x8xf32>, vector<2x8x8xf32>, vector<2x8x8xf32> -> vector<2x8x8xf32>
    "tpu.trace_stop"() : () -> ()
    %225 = vector.broadcast %2 : f32 to vector<2x8x8xf32>
    %226 = arith.mulf %224, %225 : vector<2x8x8xf32>
    %cst_78 = arith.constant dense<0xFF800000> : vector<2x8xf32>
    %227 = vector.multi_reduction <maximumf>, %226, %cst_78 [2] : vector<2x8x8xf32> to vector<2x8xf32>
    %228 = vector.shape_cast %227 : vector<2x8xf32> to vector<2x8x1xf32>
    %229 = vector.broadcast %228 : vector<2x8x1xf32> to vector<2x8x8xf32>
    %230 = arith.subf %226, %229 : vector<2x8x8xf32>
    %231 = math.exp %230 : vector<2x8x8xf32>
    %cst_79 = arith.constant dense<0.000000e+00> : vector<2x8xf32>
    %232 = vector.multi_reduction <add>, %231, %cst_79 [2] : vector<2x8x8xf32> to vector<2x8xf32>
    %233 = vector.shape_cast %232 : vector<2x8xf32> to vector<2x8x1xf32>
    %234 = tpu.reciprocal %233 {approx = true} : vector<2x8x1xf32> -> vector<2x8x1xf32>
    %235 = vector.broadcast %234 : vector<2x8x1xf32> to vector<2x8x8xf32>
    %236 = arith.mulf %231, %235 : vector<2x8x8xf32>
    %237 = vector.extract_strided_slice %185 {offsets = [0, 0, 16], sizes = [2, 8, 8], strides = [1, 1, 1]} : vector<2x8x32xf32> to vector<2x8x8xf32>
    "tpu.trace_start"() <{level = 10 : i32, message = "bst,btd->bsd"}> : () -> ()
    %cst_80 = arith.constant dense<0.000000e+00> : vector<2x8x8xf32>
    %238 = tpu.matmul %236, %237, %cst_80 {dimension_numbers = #tpu.dot_dimension_numbers<[2], [1], [1], [2], [0, 0, 0, 1, 1, 2], [0], [0]>} : vector<2x8x8xf32>, vector<2x8x8xf32>, vector<2x8x8xf32> -> vector<2x8x8xf32>
    "tpu.trace_stop"() : () -> ()
    %c0_81 = arith.constant 0 : index
    %c0_82 = arith.constant 0 : index
    %c16_83 = arith.constant 16 : index
    %239 = vector.load %arg6[%c0_81, %c0_82, %c16_83] : memref<2x8x32xf32, #tpu.memory_space<vmem>>, vector<2x8x8xf32>
    tpu.vector_store %arg6[%c0_81, %c0_82, %c16_83], %238 {strides = array<i32>} : memref<2x8x32xf32, #tpu.memory_space<vmem>>, vector<2x8x8xf32>,
    %240 = vector.extract_strided_slice %181 {offsets = [0, 0, 24], sizes = [2, 8, 8], strides = [1, 1, 1]} : vector<2x8x32xf32> to vector<2x8x8xf32>
    %241 = vector.extract_strided_slice %183 {offsets = [0, 0, 24], sizes = [2, 8, 8], strides = [1, 1, 1]} : vector<2x8x32xf32> to vector<2x8x8xf32>
    "tpu.trace_start"() <{level = 10 : i32, message = "bsd,btd->bst"}> : () -> ()
    %cst_84 = arith.constant dense<0.000000e+00> : vector<2x8x8xf32>
    %242 = tpu.matmul %240, %241, %cst_84 {dimension_numbers = #tpu.dot_dimension_numbers<[2], [2], [1], [1], [0, 0, 0, 1, 1, 1], [0], [0]>} : vector<2x8x8xf32>, vector<2x8x8xf32>, vector<2x8x8xf32> -> vector<2x8x8xf32>
    "tpu.trace_stop"() : () -> ()
    %243 = vector.broadcast %2 : f32 to vector<2x8x8xf32>
    %244 = arith.mulf %242, %243 : vector<2x8x8xf32>
    %cst_85 = arith.constant dense<0xFF800000> : vector<2x8xf32>
    %245 = vector.multi_reduction <maximumf>, %244, %cst_85 [2] : vector<2x8x8xf32> to vector<2x8xf32>
    %246 = vector.shape_cast %245 : vector<2x8xf32> to vector<2x8x1xf32>
    %247 = vector.broadcast %246 : vector<2x8x1xf32> to vector<2x8x8xf32>
    %248 = arith.subf %244, %247 : vector<2x8x8xf32>
    %249 = math.exp %248 : vector<2x8x8xf32>
    %cst_86 = arith.constant dense<0.000000e+00> : vector<2x8xf32>
    %250 = vector.multi_reduction <add>, %249, %cst_86 [2] : vector<2x8x8xf32> to vector<2x8xf32>
    %251 = vector.shape_cast %250 : vector<2x8xf32> to vector<2x8x1xf32>
    %252 = tpu.reciprocal %251 {approx = true} : vector<2x8x1xf32> -> vector<2x8x1xf32>
    %253 = vector.broadcast %252 : vector<2x8x1xf32> to vector<2x8x8xf32>
    %254 = arith.mulf %249, %253 : vector<2x8x8xf32>
    %255 = vector.extract_strided_slice %185 {offsets = [0, 0, 24], sizes = [2, 8, 8], strides = [1, 1, 1]} : vector<2x8x32xf32> to vector<2x8x8xf32>
    "tpu.trace_start"() <{level = 10 : i32, message = "bst,btd->bsd"}> : () -> ()
    %cst_87 = arith.constant dense<0.000000e+00> : vector<2x8x8xf32>
    %256 = tpu.matmul %254, %255, %cst_87 {dimension_numbers = #tpu.dot_dimension_numbers<[2], [1], [1], [2], [0, 0, 0, 1, 1, 2], [0], [0]>} : vector<2x8x8xf32>, vector<2x8x8xf32>, vector<2x8x8xf32> -> vector<2x8x8xf32>
    "tpu.trace_stop"() : () -> ()
    %c0_88 = arith.constant 0 : index
    %c0_89 = arith.constant 0 : index
    %c24_90 = arith.constant 24 : index
    %257 = vector.load %arg6[%c0_88, %c0_89, %c24_90] : memref<2x8x32xf32, #tpu.memory_space<vmem>>, vector<2x8x8xf32>
    tpu.vector_store %arg6[%c0_88, %c0_89, %c24_90], %256 {strides = array<i32>} : memref<2x8x32xf32, #tpu.memory_space<vmem>>, vector<2x8x8xf32>,
    %c0_91 = arith.constant 0 : index
    %c0_92 = arith.constant 0 : index
    %c0_93 = arith.constant 0 : index
    %258 = vector.load %arg6[%c0_91, %c0_92, %c0_93] : memref<2x8x32xf32, #tpu.memory_space<vmem>>, vector<2x8x32xf32>
    %259 = vector.shape_cast %258 : vector<2x8x32xf32> to vector<16x32xf32>
    %cst_94 = arith.constant dense<0.000000e+00> : vector<16x32xf32>
    %260 = tpu.matmul %259, %167, %cst_94 {dimension_numbers = #tpu.dot_dimension_numbers<[1], [0], [0], [1], [0, 0, 1, 1], [], []>} : vector<16x32xf32>, vector<32x32xf32>, vector<16x32xf32> -> vector<16x32xf32>
    %261 = vector.broadcast %170 : vector<1x32xf32> to vector<16x32xf32>
    %262 = arith.addf %260, %261 : vector<16x32xf32>
    %263 = arith.addf %262, %159 : vector<16x32xf32>
    %cst_95 = arith.constant dense<0.000000e+00> : vector<16xf32>
    %264 = vector.multi_reduction <add>, %263, %cst_95 [1] : vector<16x32xf32> to vector<16xf32>
    %265 = vector.shape_cast %264 : vector<16xf32> to vector<16x1xf32>
    %cst_96 = arith.constant 3.200000e+01 : f32
    %266 = vector.broadcast %cst_96 : f32 to vector<16x1xf32>
    %267 = arith.divf %265, %266 : vector<16x1xf32>
    %268 = vector.broadcast %267 : vector<16x1xf32> to vector<16x32xf32>
    %269 = arith.subf %263, %268 : vector<16x32xf32>
    %270 = arith.mulf %269, %269 : vector<16x32xf32>
    %cst_97 = arith.constant dense<0.000000e+00> : vector<16xf32>
    %271 = vector.multi_reduction <add>, %270, %cst_97 [1] : vector<16x32xf32> to vector<16xf32>
    %272 = vector.shape_cast %271 : vector<16xf32> to vector<16x1xf32>
    %cst_98 = arith.constant 3.200000e+01 : f32
    %273 = vector.broadcast %cst_98 : f32 to vector<16x1xf32>
    %274 = arith.divf %272, %273 : vector<16x1xf32>
    %275 = vector.broadcast %267 : vector<16x1xf32> to vector<16x32xf32>
    %276 = arith.subf %263, %275 : vector<16x32xf32>
    %cst_99 = arith.constant 9.99999997E-7 : f32
    %277 = vector.broadcast %cst_99 : f32 to vector<16x1xf32>
    %278 = arith.addf %274, %277 : vector<16x1xf32>
    %279 = math.rsqrt %278 : vector<16x1xf32>
    %280 = vector.broadcast %279 : vector<16x1xf32> to vector<16x32xf32>
    %281 = arith.mulf %276, %280 : vector<16x32xf32>
    %282 = vector.broadcast %171 : vector<1x32xf32> to vector<16x32xf32>
    %283 = arith.mulf %281, %282 : vector<16x32xf32>
    %284 = vector.broadcast %172 : vector<1x32xf32> to vector<16x32xf32>
    %285 = arith.addf %283, %284 : vector<16x32xf32>
    %cst_100 = arith.constant dense<0.000000e+00> : vector<16x64xf32>
    %286 = tpu.matmul %285, %168, %cst_100 {dimension_numbers = #tpu.dot_dimension_numbers<[1], [0], [0], [1], [0, 0, 1, 1], [], []>} : vector<16x32xf32>, vector<32x64xf32>, vector<16x64xf32> -> vector<16x64xf32>
    %287 = vector.broadcast %173 : vector<1x64xf32> to vector<16x64xf32>
    %288 = arith.addf %286, %287 : vector<16x64xf32>
    %cst_101 = arith.constant 0.000000e+00 : f32
    %289 = vector.broadcast %cst_101 : f32 to vector<16x64xf32>
    %290 = arith.maximumf %288, %289 : vector<16x64xf32>
    %cst_102 = arith.constant dense<0.000000e+00> : vector<16x32xf32>
    %291 = tpu.matmul %290, %163, %cst_102 {dimension_numbers = #tpu.dot_dimension_numbers<[1], [0], [0], [1], [0, 0, 1, 1], [], []>} : vector<16x64xf32>, vector<64x32xf32>, vector<16x32xf32> -> vector<16x32xf32>
    %292 = vector.broadcast %174 : vector<1x32xf32> to vector<16x32xf32>
    %293 = arith.addf %291, %292 : vector<16x32xf32>
    %294 = arith.addf %293, %285 : vector<16x32xf32>
    %cst_103 = arith.constant dense<0.000000e+00> : vector<16xf32>
    %295 = vector.multi_reduction <add>, %294, %cst_103 [1] : vector<16x32xf32> to vector<16xf32>
    %296 = vector.shape_cast %295 : vector<16xf32> to vector<16x1xf32>
    %cst_104 = arith.constant 3.200000e+01 : f32
    %297 = vector.broadcast %cst_104 : f32 to vector<16x1xf32>
    %298 = arith.divf %296, %297 : vector<16x1xf32>
    %299 = vector.broadcast %298 : vector<16x1xf32> to vector<16x32xf32>
    %300 = arith.subf %294, %299 : vector<16x32xf32>
    %301 = arith.mulf %300, %300 : vector<16x32xf32>
    %cst_105 = arith.constant dense<0.000000e+00> : vector<16xf32>
    %302 = vector.multi_reduction <add>, %301, %cst_105 [1] : vector<16x32xf32> to vector<16xf32>
    %303 = vector.shape_cast %302 : vector<16xf32> to vector<16x1xf32>
    %cst_106 = arith.constant 3.200000e+01 : f32
    %304 = vector.broadcast %cst_106 : f32 to vector<16x1xf32>
    %305 = arith.divf %303, %304 : vector<16x1xf32>
    %306 = vector.broadcast %298 : vector<16x1xf32> to vector<16x32xf32>
    %307 = arith.subf %294, %306 : vector<16x32xf32>
    %cst_107 = arith.constant 9.99999997E-7 : f32
    %308 = vector.broadcast %cst_107 : f32 to vector<16x1xf32>
    %309 = arith.addf %305, %308 : vector<16x1xf32>
    %310 = math.rsqrt %309 : vector<16x1xf32>
    %311 = vector.broadcast %310 : vector<16x1xf32> to vector<16x32xf32>
    %312 = arith.mulf %307, %311 : vector<16x32xf32>
    %313 = vector.broadcast %175 : vector<1x32xf32> to vector<16x32xf32>
    %314 = arith.mulf %312, %313 : vector<16x32xf32>
    %315 = vector.broadcast %176 : vector<1x32xf32> to vector<16x32xf32>
    %316 = arith.addf %314, %315 : vector<16x32xf32>
    %c0_108 = arith.constant 0 : index
    %c0_109 = arith.constant 0 : index
    %317 = vector.load %arg5[%c0_108, %c0_109] : memref<16x32xf32, #tpu.memory_space<vmem>>, vector<16x32xf32>
    tpu.vector_store %arg5[%c0_108, %c0_109], %316 {strides = array<i32>} : memref<16x32xf32, #tpu.memory_space<vmem>>, vector<16x32xf32>,
    return
  }
  func.func @transform_0(%arg0: i32) -> (i32, i32) {
    %c0_i32 = arith.constant 0 : i32
    %c0_i32_0 = arith.constant 0 : i32
    %c0_i32_1 = arith.constant 0 : i32
    return %c0_i32, %c0_i32_0 : i32, i32
  }
  func.func @transform_1(%arg0: i32) -> (i32, i32, i32) {
    %c0_i32 = arith.constant 0 : i32
    %c0_i32_0 = arith.constant 0 : i32
    %c0_i32_1 = arith.constant 0 : i32
    %c0_i32_2 = arith.constant 0 : i32
    return %c0_i32, %c0_i32_0, %c0_i32_1 : i32, i32, i32
  }
  func.func @transform_2(%arg0: i32) -> (i32, i32, i32) {
    %c0_i32 = arith.constant 0 : i32
    %c0_i32_0 = arith.constant 0 : i32
    %c0_i32_1 = arith.constant 0 : i32
    %c0_i32_2 = arith.constant 0 : i32
    return %c0_i32, %c0_i32_0, %c0_i32_1 : i32, i32, i32
  }
  func.func @transform_3(%arg0: i32) -> (i32, i32, i32) {
    %c0_i32 = arith.constant 0 : i32
    %c0_i32_0 = arith.constant 0 : i32
    %c0_i32_1 = arith.constant 0 : i32
    %c0_i32_2 = arith.constant 0 : i32
    return %c0_i32, %c0_i32_0, %c0_i32_1 : i32, i32, i32
  }
  func.func @transform_4(%arg0: i32) -> (i32, i32) {
    %c0_i32 = arith.constant 0 : i32
    %c0_i32_0 = arith.constant 0 : i32
    %c0_i32_1 = arith.constant 0 : i32
    return %c0_i32, %c0_i32_0 : i32, i32
  }
}

</mosaic_0001>

<llo_original>
// kernel: encoder_forward.1
$region0: #{encoder_forward.1}
  #allocation0 [shape = 'u32[]', space=smem, size = 0x4, offset = 0x4, fixed_abs, tag = 'smem constant byte address 0x4 - core index']
  #allocation1 [shape = 'u32[144,128]{1,0:T(1,128)}', space=vmem, size = 0x12000, scoped, tag = 'internal scratch']
  #allocation2 [shape = 'f32[2,8,32]{2,1,0:T(8,128)}', space=vmem, size = 0x2000, scoped, tag = 'scratch operand']
  %s0 = inlined_call_operand.vmem [shape: f32[16,32], index: 0, kind: input, shape index: {}]
  %s1 = inlined_call_operand.vmem [shape: f32[2,32,192], index: 1, kind: input, shape index: {}]
  %s2 = inlined_call_operand.vmem [shape: f32[2,64,32], index: 2, kind: input, shape index: {}]
  %s3 = inlined_call_operand.vmem [shape: f32[2,8,96], index: 3, kind: input, shape index: {}]
  %s4 = inlined_call_operand.hbm [shape: f32[16,32], index: 4, kind: output, shape index: {}]
  %s5 = sld [smem:[#allocation0]]
  $region26: #{encoder_forward.1} parent=0
    _
  %s7 = ssub.s32 1, %s5
  %s8 = scalar_select 0, %s7, %s5
  $region1: #{encoder_forward.1} parent=0
    #allocation3 [shape = 'u8[8192]{0}', space=vmem, size = 0x2000, scoped, tag = 'output window, operand 0, single buffered']
    #allocation4 [shape = 's32[1]{0}', space=sflag, size = 0x4, scoped, tag = 'scoped memory for encoder_forward.1']
    %9 = vsyncpa [#allocation4], 0
    // Predicated region
    $region2: #{encoder_forward.1} parent=1 // pred_check
      _
    $region3: #{encoder_forward.1} parent=1 // pred_check_branch
      %11 = sbr.rel (0) target = $region5
    $region4: #{encoder_forward.1} parent=1 // pred_region
      _
    $region5: #{encoder_forward.1} parent=1 // pred_fallthru
      _
    // Predicated region
    $region6: #{encoder_forward.1} parent=1 // pred_check
      _
    $region7: #{encoder_forward.1} parent=1 // pred_check_branch
      %13 = sbr.rel (0) target = $region9
    $region8: #{encoder_forward.1} parent=1 // pred_region
      _
    $region9: #{encoder_forward.1} parent=1 // pred_fallthru
      _
    // Predicated region
    $region10: #{encoder_forward.1} parent=1 // pred_check
      _
    $region11: #{encoder_forward.1} parent=1 // pred_check_branch
      %15 = sbr.rel (0) target = $region13
    $region12: #{encoder_forward.1} parent=1 // pred_region
      _
    $region13: #{encoder_forward.1} parent=1 // pred_fallthru
      _
    // Predicated region
    $region14: #{encoder_forward.1} parent=1 // pred_check
      _
    $region15: #{encoder_forward.1} parent=1 // pred_check_branch
      %17 = sbr.rel (0) target = $region17
    $region16: #{encoder_forward.1} parent=1 // pred_region
      _
    $region17: #{encoder_forward.1} parent=1 // pred_fallthru
      _
    %v18 = vld [vmem:[%s0] sm:$0xff]
    %v19 = vld [vmem:[%s0 + $0x8] sm:$0xff]
    %v20 = vld [vmem:[%s1] sm:$0xff]
    %v21 = vld [vmem:[%s1 + $0x8] sm:$0xff]
    %v22 = vld [vmem:[%s1 + $0x10] sm:$0xff]
    %v23 = vld [vmem:[%s1 + $0x18] sm:$0xff]
    %v24 = vld [vmem:[%s1 + $0x20] sm:$0xff]
    %v25 = vld [vmem:[%s1 + $0x28] sm:$0xff]
    %v26 = vld [vmem:[%s1 + $0x30] sm:$0xff]
    %v27 = vld [vmem:[%s1 + $0x38] sm:$0xff]
    %v28 = vld [vmem:[%s2] sm:$0xff]
    %v29 = vld [vmem:[%s2 + $0x8] sm:$0xff]
    %v30 = vld [vmem:[%s2 + $0x10] sm:$0xff]
    %v31 = vld [vmem:[%s2 + $0x18] sm:$0xff]
    %v32 = vld [vmem:[%s2 + $0x20] sm:$0xff]
    %v33 = vld [vmem:[%s2 + $0x28] sm:$0xff]
    %v34 = vld [vmem:[%s2 + $0x30] sm:$0xff]
    %v35 = vld [vmem:[%s2 + $0x38] sm:$0xff]
    %v36 = vld [vmem:[%s3] sm:$0xff]
    %v37 = vlaneseq
    %v38 = vshrl.u32 %v37, 7
    %v39 = vsub.s32 0, %v38
    %v40 = vrot.slane %v36, %v39
    %vm41 = vcmask 261120
    %v43 = vsel %vm41, %v18, 0
    %v46 = vsel %vm41, %v19, 0
    %48 = vmatprep.subr.mxu0 0.0
    %49 = vmatpush1.msra.mxu0 %v20
    %50 = vmatprep.subr.mxu0 0.0
    %51 = vmatpush1.msra.mxu0 %v22
    %52 = vmatprep.subr.mxu0 0.0
    %53 = vmatpush1.msra.mxu0 %v24
    %54 = vmatprep.subr.mxu0 0.0
    %55 = vmatpush1.msra.mxu0 %v26
    %56 = vmatprep.subr.mxu0 0.0
    %57 = vmatpush1.msra.mxu0 0.0
    %58 = vmatprep.subr.mxu0 0.0
    %59 = vmatpush1.msra.mxu0 0.0
    %60 = vmatprep.subr.mxu0 0.0
    %61 = vmatpush1.msra.mxu0 0.0
    %62 = vmatprep.subr.mxu0 0.0
    %63 = vmatpush1.msra.mxu0 0.0
    %64 = vmatprep.subr.mxu0 0.0
    %65 = vmatpush1.msra.mxu0 0.0
    %66 = vmatprep.subr.mxu0 0.0
    %67 = vmatpush1.msra.mxu0 0.0
    %68 = vmatprep.subr.mxu0 0.0
    %69 = vmatpush1.msra.mxu0 0.0
    %70 = vmatprep.subr.mxu0 0.0
    %71 = vmatpush1.msra.mxu0 0.0
    %72 = vmatprep.subr.mxu0 0.0
    %73 = vmatpush1.msra.mxu0 0.0
    %74 = vmatprep.subr.mxu0 0.0
    %75 = vmatpush1.msra.mxu0 0.0
    %76 = vmatprep.subr.mxu0 0.0
    %77 = vmatpush1.msra.mxu0 0.0
    %78 = vmatprep.subr.mxu0 0.0
    %79 = vmatpush1.msra.mxu0 0.0
    %80 = vmatprep.subr.mxu0 0.0
    %81 = vmatpush1.msra.mxu0 0.0
    %82 = vmatprep.subr.mxu0 0.0
    %83 = vmatpush1.msra.mxu0 0.0
    %84 = vmatprep.subr.mxu0 0.0
    %85 = vmatpush1.msra.mxu0 0.0
    %86 = vmatprep.subr.mxu0 0.0
    %87 = vmatpush1.msra.mxu0 0.0
    %88 = vmatprep.subr.mxu0 0.0
    %89 = vmatpush1.msra.mxu0 0.0
    %90 = vmatprep.subr.mxu0 0.0
    %91 = vmatpush1.msra.mxu0 0.0
    %92 = vmatprep.subr.mxu0 0.0
    %93 = vmatpush1.msra.mxu0 0.0
    %94 = vmatprep.subr.mxu0 0.0
    %95 = vmatpush1.msra.mxu0 0.0
    %96 = vmatprep.subr.mxu0 0.0
    %97 = vmatpush1.msra.mxu0 0.0
    %98 = vmatprep.subr.mxu0 0.0
    %99 = vmatpush1.msra.mxu0 0.0
    %100 = vmatprep.subr.mxu0 0.0
    %101 = vmatpush1.msra.mxu0 0.0
    %102 = vmatprep.subr.mxu0 0.0
    %103 = vmatpush1.msra.mxu0 0.0
    %104 = vmatprep.subr.mxu0 0.0
    %105 = vmatpush1.msra.mxu0 0.0
    %106 = vmatprep.subr.mxu0 0.0
    %107 = vmatpush1.msra.mxu0 0.0
    %108 = vmatprep.subr.mxu0 0.0
    %109 = vmatpush1.msra.mxu0 0.0
    %110 = vmatprep.subr.mxu0 0.0
    %111 = vmatpush1.msra.mxu0 0.0
    %112 = vmatprep.mubr.f32.mxu0 0.0
    %113 = vmatmul.mubr.f32.gmra.mrb[0].mxu0 %v43
    %v114 = vpop.f32.mrb[0].mxu0
    %v115 = vadd.f32 %v40, %v114
    %v116 = vpop.f32.mrb[0].mxu0
    %117 = vmatprep.mubr.f32.mxu0 0.0
    %118 = vmatmul.mubr.f32.gmra.mrb[0].mxu0 %v46
    %v119 = vpop.f32.mrb[0].mxu0
    %v120 = vadd.f32 %v40, %v119
    %v121 = vpop.f32.mrb[0].mxu0
    %122 = vdwg.mxu0
    %124 = vrot.lane.b32.xlu0 %v115, 96
    %v125 = vpop.permute.xlu0 %124
    %vm126 = vcmask 64512
    %v127 = vsel %vm126, %v115, 0
    %v129 = vsel %vm126, %v125, 0
    %131 = vmatprep.subr.mxu0 0.0
    %132 = vmatpush1.xpose.msra.mxu0 %v129
    %133 = vmatprep.subr.mxu0 0.0
    %134 = vmatpush1.xpose.msra.mxu0 0.0
    %135 = vmatprep.subr.mxu0 0.0
    %136 = vmatpush1.xpose.msra.mxu0 0.0
    %137 = vmatprep.subr.mxu0 0.0
    %138 = vmatpush1.xpose.msra.mxu0 0.0
    %139 = vmatprep.subr.mxu0 0.0
    %140 = vmatpush1.xpose.msra.mxu0 0.0
    %141 = vmatprep.subr.mxu0 0.0
    %142 = vmatpush1.xpose.msra.mxu0 0.0
    %143 = vmatprep.subr.mxu0 0.0
    %144 = vmatpush1.xpose.msra.mxu0 0.0
    %145 = vmatprep.subr.mxu0 0.0
    %146 = vmatpush1.xpose.msra.mxu0 0.0
    %147 = vmatprep.subr.mxu0 0.0
    %148 = vmatpush1.xpose.msra.mxu0 0.0
    %149 = vmatprep.subr.mxu0 0.0
    %150 = vmatpush1.xpose.msra.mxu0 0.0
    %151 = vmatprep.subr.mxu0 0.0
    %152 = vmatpush1.xpose.msra.mxu0 0.0
    %153 = vmatprep.subr.mxu0 0.0
    %154 = vmatpush1.xpose.msra.mxu0 0.0
    %155 = vmatprep.subr.mxu0 0.0
    %156 = vmatpush1.xpose.msra.mxu0 0.0
    %157 = vmatprep.subr.mxu0 0.0
    %158 = vmatpush1.xpose.msra.mxu0 0.0
    %159 = vmatprep.subr.mxu0 0.0
    %160 = vmatpush1.xpose.msra.mxu0 0.0
    %161 = vmatprep.subr.mxu0 0.0
    %162 = vmatpush1.xpose.msra.mxu0 0.0
    %163 = vmatprep.subr.mxu0 0.0
    %164 = vmatpush1.xpose.msra.mxu0 0.0
    %165 = vmatprep.subr.mxu0 0.0
    %166 = vmatpush1.xpose.msra.mxu0 0.0
    %167 = vmatprep.subr.mxu0 0.0
    %168 = vmatpush1.xpose.msra.mxu0 0.0
    %169 = vmatprep.subr.mxu0 0.0
    %170 = vmatpush1.xpose.msra.mxu0 0.0
    %171 = vmatprep.subr.mxu0 0.0
    %172 = vmatpush1.xpose.msra.mxu0 0.0
    %173 = vmatprep.subr.mxu0 0.0
    %174 = vmatpush1.xpose.msra.mxu0 0.0
    %175 = vmatprep.subr.mxu0 0.0
    %176 = vmatpush1.xpose.msra.mxu0 0.0
    %177 = vmatprep.subr.mxu0 0.0
    %178 = vmatpush1.xpose.msra.mxu0 0.0
    %179 = vmatprep.subr.mxu0 0.0
    %180 = vmatpush1.xpose.msra.mxu0 0.0
    %181 = vmatprep.subr.mxu0 0.0
    %182 = vmatpush1.xpose.msra.mxu0 0.0
    %183 = vmatprep.subr.mxu0 0.0
    %184 = vmatpush1.xpose.msra.mxu0 0.0
    %185 = vmatprep.subr.mxu0 0.0
    %186 = vmatpush1.xpose.msra.mxu0 0.0
    %187 = vmatprep.subr.mxu0 0.0
    %188 = vmatpush1.xpose.msra.mxu0 0.0
    %189 = vmatprep.subr.mxu0 0.0
    %190 = vmatpush1.xpose.msra.mxu0 0.0
    %191 = vmatprep.subr.mxu0 0.0
    %192 = vmatpush1.xpose.msra.mxu0 0.0
    %193 = vmatprep.subr.mxu0 0.0
    %194 = vmatpush1.xpose.msra.mxu0 0.0
    %195 = vmatprep.mubr.f32.mxu0 0.0
    %196 = vmatmul.mubr.f32.gmra.mrb[0].mxu0 %v127
    %v197 = vpop.f32.mrb[0].mxu0
    %v198 = vadd.f32 0.0, %v197
    %v199 = vpop.f32.mrb[0].mxu0
    %200 = vdwg.mxu0
    %202 = vrot.lane.b32.xlu0 %v120, 96
    %v203 = vpop.permute.xlu0 %202
    %v204 = vsel %vm126, %v120, 0
    %v206 = vsel %vm126, %v203, 0
    %208 = vmatprep.subr.mxu0 0.0
    %209 = vmatpush1.xpose.msra.mxu0 %v206
    %210 = vmatprep.subr.mxu0 0.0
    %211 = vmatpush1.xpose.msra.mxu0 0.0
    %212 = vmatprep.subr.mxu0 0.0
    %213 = vmatpush1.xpose.msra.mxu0 0.0
    %214 = vmatprep.subr.mxu0 0.0
    %215 = vmatpush1.xpose.msra.mxu0 0.0
    %216 = vmatprep.subr.mxu0 0.0
    %217 = vmatpush1.xpose.msra.mxu0 0.0
    %218 = vmatprep.subr.mxu0 0.0
    %219 = vmatpush1.xpose.msra.mxu0 0.0
    %220 = vmatprep.subr.mxu0 0.0
    %221 = vmatpush1.xpose.msra.mxu0 0.0
    %222 = vmatprep.subr.mxu0 0.0
    %223 = vmatpush1.xpose.msra.mxu0 0.0
    %224 = vmatprep.subr.mxu0 0.0
    %225 = vmatpush1.xpose.msra.mxu0 0.0
    %226 = vmatprep.subr.mxu0 0.0
    %227 = vmatpush1.xpose.msra.mxu0 0.0
    %228 = vmatprep.subr.mxu0 0.0
    %229 = vmatpush1.xpose.msra.mxu0 0.0
    %230 = vmatprep.subr.mxu0 0.0
    %231 = vmatpush1.xpose.msra.mxu0 0.0
    %232 = vmatprep.subr.mxu0 0.0
    %233 = vmatpush1.xpose.msra.mxu0 0.0
    %234 = vmatprep.subr.mxu0 0.0
    %235 = vmatpush1.xpose.msra.mxu0 0.0
    %236 = vmatprep.subr.mxu0 0.0
    %237 = vmatpush1.xpose.msra.mxu0 0.0
    %238 = vmatprep.subr.mxu0 0.0
    %239 = vmatpush1.xpose.msra.mxu0 0.0
    %240 = vmatprep.subr.mxu0 0.0
    %241 = vmatpush1.xpose.msra.mxu0 0.0
    %242 = vmatprep.subr.mxu0 0.0
    %243 = vmatpush1.xpose.msra.mxu0 0.0
    %244 = vmatprep.subr.mxu0 0.0
    %245 = vmatpush1.xpose.msra.mxu0 0.0
    %246 = vmatprep.subr.mxu0 0.0
    %247 = vmatpush1.xpose.msra.mxu0 0.0
    %248 = vmatprep.subr.mxu0 0.0
    %249 = vmatpush1.xpose.msra.mxu0 0.0
    %250 = vmatprep.subr.mxu0 0.0
    %251 = vmatpush1.xpose.msra.mxu0 0.0
    %252 = vmatprep.subr.mxu0 0.0
    %253 = vmatpush1.xpose.msra.mxu0 0.0
    %254 = vmatprep.subr.mxu0 0.0
    %255 = vmatpush1.xpose.msra.mxu0 0.0
    %256 = vmatprep.subr.mxu0 0.0
    %257 = vmatpush1.xpose.msra.mxu0 0.0
    %258 = vmatprep.subr.mxu0 0.0
    %259 = vmatpush1.xpose.msra.mxu0 0.0
    %260 = vmatprep.subr.mxu0 0.0
    %261 = vmatpush1.xpose.msra.mxu0 0.0
    %262 = vmatprep.subr.mxu0 0.0
    %263 = vmatpush1.xpose.msra.mxu0 0.0
    %264 = vmatprep.subr.mxu0 0.0
    %265 = vmatpush1.xpose.msra.mxu0 0.0
    %266 = vmatprep.subr.mxu0 0.0
    %267 = vmatpush1.xpose.msra.mxu0 0.0
    %268 = vmatprep.subr.mxu0 0.0
    %269 = vmatpush1.xpose.msra.mxu0 0.0
    %270 = vmatprep.subr.mxu0 0.0
    %271 = vmatpush1.xpose.msra.mxu0 0.0
    %272 = vmatprep.mubr.f32.mxu0 0.0
    %273 = vmatmul.mubr.f32.gmra.mrb[0].mxu0 %v204
    %v274 = vpop.f32.mrb[0].mxu0
    %v275 = vadd.f32 0.0, %v274
    %v276 = vpop.f32.mrb[0].mxu0
    %277 = vdwg.mxu0
    %v278 = vmul.f32 %v198, 0.35355338
    %v279 = vmul.f32 %v275, 0.35355338
    %v280 = vsel %vm126, %v278, -inf
    %281 = vmax.xlane.f32.xlu0 %v280
    %v282 = vpop.xlane.xlu0 %281
    %v283 = vsel %vm126, %v279, -inf
    %284 = vmax.xlane.f32.xlu0 %v283
    %v285 = vpop.xlane.xlu0 %284
    %v286 = vsub.f32 %v278, %v282
    %v287 = vsub.f32 %v279, %v285
    %v288 = vmul.f32 %v286, 1.442695
    %v289 = vpow.pop %v288
    %v290 = vmul.f32 %v287, 1.442695
    %v291 = vpow.pop %v290
    %v292 = vsel %vm126, %v289, 0.0
    %293 = vadd.xlane.f32.xlu0 %v292
    %v294 = vpop.xlane.xlu0 %293
    %v295 = vsel %vm126, %v291, 0.0
    %296 = vadd.xlane.f32.xlu0 %v295
    %v297 = vpop.xlane.xlu0 %296
    %v298 = vrcp.pop %v294
    %v299 = vrcp.pop %v297
    %v300 = vmul.f32 %v289, %v298
    %v301 = vmul.f32 %v291, %v299
    %302 = vrot.lane.b32.xlu0 %v115, 64
    %v303 = vpop.permute.xlu0 %302
    %v306 = vsel %vm126, %v300, 0
    %308 = vmatprep.subr.mxu0 0.0
    %309 = vmatpush1.msra.mxu0 %v303
    %310 = vmatprep.subr.mxu0 0.0
    %311 = vmatpush1.msra.mxu0 0.0
    %312 = vmatprep.subr.mxu0 0.0
    %313 = vmatpush1.msra.mxu0 0.0
    %314 = vmatprep.subr.mxu0 0.0
    %315 = vmatpush1.msra.mxu0 0.0
    %316 = vmatprep.subr.mxu0 0.0
    %317 = vmatpush1.msra.mxu0 0.0
    %318 = vmatprep.subr.mxu0 0.0
    %319 = vmatpush1.msra.mxu0 0.0
    %320 = vmatprep.subr.mxu0 0.0
    %321 = vmatpush1.msra.mxu0 0.0
    %322 = vmatprep.subr.mxu0 0.0
    %323 = vmatpush1.msra.mxu0 0.0
    %324 = vmatprep.subr.mxu0 0.0
    %325 = vmatpush1.msra.mxu0 0.0
    %326 = vmatprep.subr.mxu0 0.0
    %327 = vmatpush1.msra.mxu0 0.0
    %328 = vmatprep.subr.mxu0 0.0
    %329 = vmatpush1.msra.mxu0 0.0
    %330 = vmatprep.subr.mxu0 0.0
    %331 = vmatpush1.msra.mxu0 0.0
    %332 = vmatprep.subr.mxu0 0.0
    %333 = vmatpush1.msra.mxu0 0.0
    %334 = vmatprep.subr.mxu0 0.0
    %335 = vmatpush1.msra.mxu0 0.0
    %336 = vmatprep.subr.mxu0 0.0
    %337 = vmatpush1.msra.mxu0 0.0
    %338 = vmatprep.subr.mxu0 0.0
    %339 = vmatpush1.msra.mxu0 0.0
    %340 = vmatprep.subr.mxu0 0.0
    %341 = vmatpush1.msra.mxu0 0.0
    %342 = vmatprep.subr.mxu0 0.0
    %343 = vmatpush1.msra.mxu0 0.0
    %344 = vmatprep.subr.mxu0 0.0
    %345 = vmatpush1.msra.mxu0 0.0
    %346 = vmatprep.subr.mxu0 0.0
    %347 = vmatpush1.msra.mxu0 0.0
    %348 = vmatprep.subr.mxu0 0.0
    %349 = vmatpush1.msra.mxu0 0.0
    %350 = vmatprep.subr.mxu0 0.0
    %351 = vmatpush1.msra.mxu0 0.0
    %352 = vmatprep.subr.mxu0 0.0
    %353 = vmatpush1.msra.mxu0 0.0
    %354 = vmatprep.subr.mxu0 0.0
    %355 = vmatpush1.msra.mxu0 0.0
    %356 = vmatprep.subr.mxu0 0.0
    %357 = vmatpush1.msra.mxu0 0.0
    %358 = vmatprep.subr.mxu0 0.0
    %359 = vmatpush1.msra.mxu0 0.0
    %360 = vmatprep.subr.mxu0 0.0
    %361 = vmatpush1.msra.mxu0 0.0
    %362 = vmatprep.subr.mxu0 0.0
    %363 = vmatpush1.msra.mxu0 0.0
    %364 = vmatprep.subr.mxu0 0.0
    %365 = vmatpush1.msra.mxu0 0.0
    %366 = vmatprep.subr.mxu0 0.0
    %367 = vmatpush1.msra.mxu0 0.0
    %368 = vmatprep.subr.mxu0 0.0
    %369 = vmatpush1.msra.mxu0 0.0
    %370 = vmatprep.subr.mxu0 0.0
    %371 = vmatpush1.msra.mxu0 0.0
    %372 = vmatprep.mubr.f32.mxu0 0.0
    %373 = vmatmul.mubr.f32.gmra.mrb[0].mxu0 %v306
    %v374 = vpop.f32.mrb[0].mxu0
    %v375 = vadd.f32 0.0, %v374
    %v376 = vpop.f32.mrb[0].mxu0
    %377 = vdwg.mxu0
    %378 = vrot.lane.b32.xlu0 %v120, 64
    %v379 = vpop.permute.xlu0 %378
    %v382 = vsel %vm126, %v301, 0
    %384 = vmatprep.subr.mxu0 0.0
    %385 = vmatpush1.msra.mxu0 %v379
    %386 = vmatprep.subr.mxu0 0.0
    %387 = vmatpush1.msra.mxu0 0.0
    %388 = vmatprep.subr.mxu0 0.0
    %389 = vmatpush1.msra.mxu0 0.0
    %390 = vmatprep.subr.mxu0 0.0
    %391 = vmatpush1.msra.mxu0 0.0
    %392 = vmatprep.subr.mxu0 0.0
    %393 = vmatpush1.msra.mxu0 0.0
    %394 = vmatprep.subr.mxu0 0.0
    %395 = vmatpush1.msra.mxu0 0.0
    %396 = vmatprep.subr.mxu0 0.0
    %397 = vmatpush1.msra.mxu0 0.0
    %398 = vmatprep.subr.mxu0 0.0
    %399 = vmatpush1.msra.mxu0 0.0
    %400 = vmatprep.subr.mxu0 0.0
    %401 = vmatpush1.msra.mxu0 0.0
    %402 = vmatprep.subr.mxu0 0.0
    %403 = vmatpush1.msra.mxu0 0.0
    %404 = vmatprep.subr.mxu0 0.0
    %405 = vmatpush1.msra.mxu0 0.0
    %406 = vmatprep.subr.mxu0 0.0
    %407 = vmatpush1.msra.mxu0 0.0
    %408 = vmatprep.subr.mxu0 0.0
    %409 = vmatpush1.msra.mxu0 0.0
    %410 = vmatprep.subr.mxu0 0.0
    %411 = vmatpush1.msra.mxu0 0.0
    %412 = vmatprep.subr.mxu0 0.0
    %413 = vmatpush1.msra.mxu0 0.0
    %414 = vmatprep.subr.mxu0 0.0
    %415 = vmatpush1.msra.mxu0 0.0
    %416 = vmatprep.subr.mxu0 0.0
    %417 = vmatpush1.msra.mxu0 0.0
    %418 = vmatprep.subr.mxu0 0.0
    %419 = vmatpush1.msra.mxu0 0.0
    %420 = vmatprep.subr.mxu0 0.0
    %421 = vmatpush1.msra.mxu0 0.0
    %422 = vmatprep.subr.mxu0 0.0
    %423 = vmatpush1.msra.mxu0 0.0
    %424 = vmatprep.subr.mxu0 0.0
    %425 = vmatpush1.msra.mxu0 0.0
    %426 = vmatprep.subr.mxu0 0.0
    %427 = vmatpush1.msra.mxu0 0.0
    %428 = vmatprep.subr.mxu0 0.0
    %429 = vmatpush1.msra.mxu0 0.0
    %430 = vmatprep.subr.mxu0 0.0
    %431 = vmatpush1.msra.mxu0 0.0
    %432 = vmatprep.subr.mxu0 0.0
    %433 = vmatpush1.msra.mxu0 0.0
    %434 = vmatprep.subr.mxu0 0.0
    %435 = vmatpush1.msra.mxu0 0.0
    %436 = vmatprep.subr.mxu0 0.0
    %437 = vmatpush1.msra.mxu0 0.0
    %438 = vmatprep.subr.mxu0 0.0
    %439 = vmatpush1.msra.mxu0 0.0
    %440 = vmatprep.subr.mxu0 0.0
    %441 = vmatpush1.msra.mxu0 0.0
    %442 = vmatprep.subr.mxu0 0.0
    %443 = vmatpush1.msra.mxu0 0.0
    %444 = vmatprep.subr.mxu0 0.0
    %445 = vmatpush1.msra.mxu0 0.0
    %446 = vmatprep.subr.mxu0 0.0
    %447 = vmatpush1.msra.mxu0 0.0
    %448 = vmatprep.mubr.f32.mxu0 0.0
    %449 = vmatmul.mubr.f32.gmra.mrb[0].mxu0 %v382
    %v450 = vpop.f32.mrb[0].mxu0
    %v451 = vadd.f32 0.0, %v450
    %v452 = vpop.f32.mrb[0].mxu0
    %453 = vdwg.mxu0
    %454 = vst.msk [vmem:[#allocation2] sm:$0xff] %vm126, %v375
    %455 = vst.msk [vmem:[#allocation2 + $0x8] sm:$0xff] %vm126, %v451
    %456 = vrot.lane.b32.xlu0 %v115, 120
    %v457 = vpop.permute.xlu0 %456
    %458 = vrot.lane.b32.xlu0 %v115, 88
    %v459 = vpop.permute.xlu0 %458
    %v460 = vsel %vm126, %v457, 0
    %v462 = vsel %vm126, %v459, 0
    %464 = vmatprep.subr.mxu0 0.0
    %465 = vmatpush1.xpose.msra.mxu0 %v462
    %466 = vmatprep.subr.mxu0 0.0
    %467 = vmatpush1.xpose.msra.mxu0 0.0
    %468 = vmatprep.subr.mxu0 0.0
    %469 = vmatpush1.xpose.msra.mxu0 0.0
    %470 = vmatprep.subr.mxu0 0.0
    %471 = vmatpush1.xpose.msra.mxu0 0.0
    %472 = vmatprep.subr.mxu0 0.0
    %473 = vmatpush1.xpose.msra.mxu0 0.0
    %474 = vmatprep.subr.mxu0 0.0
    %475 = vmatpush1.xpose.msra.mxu0 0.0
    %476 = vmatprep.subr.mxu0 0.0
    %477 = vmatpush1.xpose.msra.mxu0 0.0
    %478 = vmatprep.subr.mxu0 0.0
    %479 = vmatpush1.xpose.msra.mxu0 0.0
    %480 = vmatprep.subr.mxu0 0.0
    %481 = vmatpush1.xpose.msra.mxu0 0.0
    %482 = vmatprep.subr.mxu0 0.0
    %483 = vmatpush1.xpose.msra.mxu0 0.0
    %484 = vmatprep.subr.mxu0 0.0
    %485 = vmatpush1.xpose.msra.mxu0 0.0
    %486 = vmatprep.subr.mxu0 0.0
    %487 = vmatpush1.xpose.msra.mxu0 0.0
    %488 = vmatprep.subr.mxu0 0.0
    %489 = vmatpush1.xpose.msra.mxu0 0.0
    %490 = vmatprep.subr.mxu0 0.0
    %491 = vmatpush1.xpose.msra.mxu0 0.0
    %492 = vmatprep.subr.mxu0 0.0
    %493 = vmatpush1.xpose.msra.mxu0 0.0
    %494 = vmatprep.subr.mxu0 0.0
    %495 = vmatpush1.xpose.msra.mxu0 0.0
    %496 = vmatprep.subr.mxu0 0.0
    %497 = vmatpush1.xpose.msra.mxu0 0.0
    %498 = vmatprep.subr.mxu0 0.0
    %499 = vmatpush1.xpose.msra.mxu0 0.0
    %500 = vmatprep.subr.mxu0 0.0
    %501 = vmatpush1.xpose.msra.mxu0 0.0
    %502 = vmatprep.subr.mxu0 0.0
    %503 = vmatpush1.xpose.msra.mxu0 0.0
    %504 = vmatprep.subr.mxu0 0.0
    %505 = vmatpush1.xpose.msra.mxu0 0.0
    %506 = vmatprep.subr.mxu0 0.0
    %507 = vmatpush1.xpose.msra.mxu0 0.0
    %508 = vmatprep.subr.mxu0 0.0
    %509 = vmatpush1.xpose.msra.mxu0 0.0
    %510 = vmatprep.subr.mxu0 0.0
    %511 = vmatpush1.xpose.msra.mxu0 0.0
    %512 = vmatprep.subr.mxu0 0.0
    %513 = vmatpush1.xpose.msra.mxu0 0.0
    %514 = vmatprep.subr.mxu0 0.0
    %515 = vmatpush1.xpose.msra.mxu0 0.0
    %516 = vmatprep.subr.mxu0 0.0
    %517 = vmatpush1.xpose.msra.mxu0 0.0
    %518 = vmatprep.subr.mxu0 0.0
    %519 = vmatpush1.xpose.msra.mxu0 0.0
    %520 = vmatprep.subr.mxu0 0.0
    %521 = vmatpush1.xpose.msra.mxu0 0.0
    %522 = vmatprep.subr.mxu0 0.0
    %523 = vmatpush1.xpose.msra.mxu0 0.0
    %524 = vmatprep.subr.mxu0 0.0
    %525 = vmatpush1.xpose.msra.mxu0 0.0
    %526 = vmatprep.subr.mxu0 0.0
    %527 = vmatpush1.xpose.msra.mxu0 0.0
    %528 = vmatprep.mubr.f32.mxu0 0.0
    %529 = vmatmul.mubr.f32.gmra.mrb[0].mxu0 %v460
    %v530 = vpop.f32.mrb[0].mxu0
    %v531 = vadd.f32 0.0, %v530
    %v532 = vpop.f32.mrb[0].mxu0
    %533 = vdwg.mxu0
    %534 = vrot.lane.b32.xlu0 %v120, 120
    %v535 = vpop.permute.xlu0 %534
    %536 = vrot.lane.b32.xlu0 %v120, 88
    %v537 = vpop.permute.xlu0 %536
    %v538 = vsel %vm126, %v535, 0
    %v540 = vsel %vm126, %v537, 0
    %542 = vmatprep.subr.mxu0 0.0
    %543 = vmatpush1.xpose.msra.mxu0 %v540
    %544 = vmatprep.subr.mxu0 0.0
    %545 = vmatpush1.xpose.msra.mxu0 0.0
    %546 = vmatprep.subr.mxu0 0.0
    %547 = vmatpush1.xpose.msra.mxu0 0.0
    %548 = vmatprep.subr.mxu0 0.0
    %549 = vmatpush1.xpose.msra.mxu0 0.0
    %550 = vmatprep.subr.mxu0 0.0
    %551 = vmatpush1.xpose.msra.mxu0 0.0
    %552 = vmatprep.subr.mxu0 0.0
    %553 = vmatpush1.xpose.msra.mxu0 0.0
    %554 = vmatprep.subr.mxu0 0.0
    %555 = vmatpush1.xpose.msra.mxu0 0.0
    %556 = vmatprep.subr.mxu0 0.0
    %557 = vmatpush1.xpose.msra.mxu0 0.0
    %558 = vmatprep.subr.mxu0 0.0
    %559 = vmatpush1.xpose.msra.mxu0 0.0
    %560 = vmatprep.subr.mxu0 0.0
    %561 = vmatpush1.xpose.msra.mxu0 0.0
    %562 = vmatprep.subr.mxu0 0.0
    %563 = vmatpush1.xpose.msra.mxu0 0.0
    %564 = vmatprep.subr.mxu0 0.0
    %565 = vmatpush1.xpose.msra.mxu0 0.0
    %566 = vmatprep.subr.mxu0 0.0
    %567 = vmatpush1.xpose.msra.mxu0 0.0
    %568 = vmatprep.subr.mxu0 0.0
    %569 = vmatpush1.xpose.msra.mxu0 0.0
    %570 = vmatprep.subr.mxu0 0.0
    %571 = vmatpush1.xpose.msra.mxu0 0.0
    %572 = vmatprep.subr.mxu0 0.0
    %573 = vmatpush1.xpose.msra.mxu0 0.0
    %574 = vmatprep.subr.mxu0 0.0
    %575 = vmatpush1.xpose.msra.mxu0 0.0
    %576 = vmatprep.subr.mxu0 0.0
    %577 = vmatpush1.xpose.msra.mxu0 0.0
    %578 = vmatprep.subr.mxu0 0.0
    %579 = vmatpush1.xpose.msra.mxu0 0.0
    %580 = vmatprep.subr.mxu0 0.0
    %581 = vmatpush1.xpose.msra.mxu0 0.0
    %582 = vmatprep.subr.mxu0 0.0
    %583 = vmatpush1.xpose.msra.mxu0 0.0
    %584 = vmatprep.subr.mxu0 0.0
    %585 = vmatpush1.xpose.msra.mxu0 0.0
    %586 = vmatprep.subr.mxu0 0.0
    %587 = vmatpush1.xpose.msra.mxu0 0.0
    %588 = vmatprep.subr.mxu0 0.0
    %589 = vmatpush1.xpose.msra.mxu0 0.0
    %590 = vmatprep.subr.mxu0 0.0
    %591 = vmatpush1.xpose.msra.mxu0 0.0
    %592 = vmatprep.subr.mxu0 0.0
    %593 = vmatpush1.xpose.msra.mxu0 0.0
    %594 = vmatprep.subr.mxu0 0.0
    %595 = vmatpush1.xpose.msra.mxu0 0.0
    %596 = vmatprep.subr.mxu0 0.0
    %597 = vmatpush1.xpose.msra.mxu0 0.0
    %598 = vmatprep.subr.mxu0 0.0
    %599 = vmatpush1.xpose.msra.mxu0 0.0
    %600 = vmatprep.subr.mxu0 0.0
    %601 = vmatpush1.xpose.msra.mxu0 0.0
    %602 = vmatprep.subr.mxu0 0.0
    %603 = vmatpush1.xpose.msra.mxu0 0.0
    %604 = vmatprep.subr.mxu0 0.0
    %605 = vmatpush1.xpose.msra.mxu0 0.0
    %606 = vmatprep.mubr.f32.mxu0 0.0
    %607 = vmatmul.mubr.f32.gmra.mrb[0].mxu0 %v538
    %v608 = vpop.f32.mrb[0].mxu0
    %v609 = vadd.f32 0.0, %v608
    %v610 = vpop.f32.mrb[0].mxu0
    %611 = vdwg.mxu0
    %v612 = vmul.f32 %v531, 0.35355338
    %v613 = vmul.f32 %v609, 0.35355338
    %v614 = vsel %vm126, %v612, -inf
    %615 = vmax.xlane.f32.xlu0 %v614
    %v616 = vpop.xlane.xlu0 %615
    %v617 = vsel %vm126, %v613, -inf
    %618 = vmax.xlane.f32.xlu0 %v617
    %v619 = vpop.xlane.xlu0 %618
    %v620 = vsub.f32 %v612, %v616
    %v621 = vsub.f32 %v613, %v619
    %v622 = vmul.f32 %v620, 1.442695
    %v623 = vpow.pop %v622
    %v624 = vmul.f32 %v621, 1.442695
    %v625 = vpow.pop %v624
    %v626 = vsel %vm126, %v623, 0.0
    %627 = vadd.xlane.f32.xlu0 %v626
    %v628 = vpop.xlane.xlu0 %627
    %v629 = vsel %vm126, %v625, 0.0
    %630 = vadd.xlane.f32.xlu0 %v629
    %v631 = vpop.xlane.xlu0 %630
    %v632 = vrcp.pop %v628
    %v633 = vrcp.pop %v631
    %v634 = vmul.f32 %v623, %v632
    %v635 = vmul.f32 %v625, %v633
    %636 = vrot.lane.b32.xlu0 %v115, 56
    %v637 = vpop.permute.xlu0 %636
    %v640 = vsel %vm126, %v634, 0
    %642 = vmatprep.subr.mxu0 0.0
    %643 = vmatpush1.msra.mxu0 %v637
    %644 = vmatprep.subr.mxu0 0.0
    %645 = vmatpush1.msra.mxu0 0.0
    %646 = vmatprep.subr.mxu0 0.0
    %647 = vmatpush1.msra.mxu0 0.0
    %648 = vmatprep.subr.mxu0 0.0
    %649 = vmatpush1.msra.mxu0 0.0
    %650 = vmatprep.subr.mxu0 0.0
    %651 = vmatpush1.msra.mxu0 0.0
    %652 = vmatprep.subr.mxu0 0.0
    %653 = vmatpush1.msra.mxu0 0.0
    %654 = vmatprep.subr.mxu0 0.0
    %655 = vmatpush1.msra.mxu0 0.0
    %656 = vmatprep.subr.mxu0 0.0
    %657 = vmatpush1.msra.mxu0 0.0
    %658 = vmatprep.subr.mxu0 0.0
    %659 = vmatpush1.msra.mxu0 0.0
    %660 = vmatprep.subr.mxu0 0.0
    %661 = vmatpush1.msra.mxu0 0.0
    %662 = vmatprep.subr.mxu0 0.0
    %663 = vmatpush1.msra.mxu0 0.0
    %664 = vmatprep.subr.mxu0 0.0
    %665 = vmatpush1.msra.mxu0 0.0
    %666 = vmatprep.subr.mxu0 0.0
    %667 = vmatpush1.msra.mxu0 0.0
    %668 = vmatprep.subr.mxu0 0.0
    %669 = vmatpush1.msra.mxu0 0.0
    %670 = vmatprep.subr.mxu0 0.0
    %671 = vmatpush1.msra.mxu0 0.0
    %672 = vmatprep.subr.mxu0 0.0
    %673 = vmatpush1.msra.mxu0 0.0
    %674 = vmatprep.subr.mxu0 0.0
    %675 = vmatpush1.msra.mxu0 0.0
    %676 = vmatprep.subr.mxu0 0.0
    %677 = vmatpush1.msra.mxu0 0.0
    %678 = vmatprep.subr.mxu0 0.0
    %679 = vmatpush1.msra.mxu0 0.0
    %680 = vmatprep.subr.mxu0 0.0
    %681 = vmatpush1.msra.mxu0 0.0
    %682 = vmatprep.subr.mxu0 0.0
    %683 = vmatpush1.msra.mxu0 0.0
    %684 = vmatprep.subr.mxu0 0.0
    %685 = vmatpush1.msra.mxu0 0.0
    %686 = vmatprep.subr.mxu0 0.0
    %687 = vmatpush1.msra.mxu0 0.0
    %688 = vmatprep.subr.mxu0 0.0
    %689 = vmatpush1.msra.mxu0 0.0
    %690 = vmatprep.subr.mxu0 0.0
    %691 = vmatpush1.msra.mxu0 0.0
    %692 = vmatprep.subr.mxu0 0.0
    %693 = vmatpush1.msra.mxu0 0.0
    %694 = vmatprep.subr.mxu0 0.0
    %695 = vmatpush1.msra.mxu0 0.0
    %696 = vmatprep.subr.mxu0 0.0
    %697 = vmatpush1.msra.mxu0 0.0
    %698 = vmatprep.subr.mxu0 0.0
    %699 = vmatpush1.msra.mxu0 0.0
    %700 = vmatprep.subr.mxu0 0.0
    %701 = vmatpush1.msra.mxu0 0.0
    %702 = vmatprep.subr.mxu0 0.0
    %703 = vmatpush1.msra.mxu0 0.0
    %704 = vmatprep.subr.mxu0 0.0
    %705 = vmatpush1.msra.mxu0 0.0
    %706 = vmatprep.mubr.f32.mxu0 0.0
    %707 = vmatmul.mubr.f32.gmra.mrb[0].mxu0 %v640
    %v708 = vpop.f32.mrb[0].mxu0
    %v709 = vadd.f32 0.0, %v708
    %v710 = vpop.f32.mrb[0].mxu0
    %711 = vdwg.mxu0
    %712 = vrot.lane.b32.xlu0 %v120, 56
    %v713 = vpop.permute.xlu0 %712
    %v716 = vsel %vm126, %v635, 0
    %718 = vmatprep.subr.mxu0 0.0
    %719 = vmatpush1.msra.mxu0 %v713
    %720 = vmatprep.subr.mxu0 0.0
    %721 = vmatpush1.msra.mxu0 0.0
    %722 = vmatprep.subr.mxu0 0.0
    %723 = vmatpush1.msra.mxu0 0.0
    %724 = vmatprep.subr.mxu0 0.0
    %725 = vmatpush1.msra.mxu0 0.0
    %726 = vmatprep.subr.mxu0 0.0
    %727 = vmatpush1.msra.mxu0 0.0
    %728 = vmatprep.subr.mxu0 0.0
    %729 = vmatpush1.msra.mxu0 0.0
    %730 = vmatprep.subr.mxu0 0.0
    %731 = vmatpush1.msra.mxu0 0.0
    %732 = vmatprep.subr.mxu0 0.0
    %733 = vmatpush1.msra.mxu0 0.0
    %734 = vmatprep.subr.mxu0 0.0
    %735 = vmatpush1.msra.mxu0 0.0
    %736 = vmatprep.subr.mxu0 0.0
    %737 = vmatpush1.msra.mxu0 0.0
    %738 = vmatprep.subr.mxu0 0.0
    %739 = vmatpush1.msra.mxu0 0.0
    %740 = vmatprep.subr.mxu0 0.0
    %741 = vmatpush1.msra.mxu0 0.0
    %742 = vmatprep.subr.mxu0 0.0
    %743 = vmatpush1.msra.mxu0 0.0
    %744 = vmatprep.subr.mxu0 0.0
    %745 = vmatpush1.msra.mxu0 0.0
    %746 = vmatprep.subr.mxu0 0.0
    %747 = vmatpush1.msra.mxu0 0.0
    %748 = vmatprep.subr.mxu0 0.0
    %749 = vmatpush1.msra.mxu0 0.0
    %750 = vmatprep.subr.mxu0 0.0
    %751 = vmatpush1.msra.mxu0 0.0
    %752 = vmatprep.subr.mxu0 0.0
    %753 = vmatpush1.msra.mxu0 0.0
    %754 = vmatprep.subr.mxu0 0.0
    %755 = vmatpush1.msra.mxu0 0.0
    %756 = vmatprep.subr.mxu0 0.0
    %757 = vmatpush1.msra.mxu0 0.0
    %758 = vmatprep.subr.mxu0 0.0
    %759 = vmatpush1.msra.mxu0 0.0
    %760 = vmatprep.subr.mxu0 0.0
    %761 = vmatpush1.msra.mxu0 0.0
    %762 = vmatprep.subr.mxu0 0.0
    %763 = vmatpush1.msra.mxu0 0.0
    %764 = vmatprep.subr.mxu0 0.0
    %765 = vmatpush1.msra.mxu0 0.0
    %766 = vmatprep.subr.mxu0 0.0
    %767 = vmatpush1.msra.mxu0 0.0
    %768 = vmatprep.subr.mxu0 0.0
    %769 = vmatpush1.msra.mxu0 0.0
    %770 = vmatprep.subr.mxu0 0.0
    %771 = vmatpush1.msra.mxu0 0.0
    %772 = vmatprep.subr.mxu0 0.0
    %773 = vmatpush1.msra.mxu0 0.0
    %774 = vmatprep.subr.mxu0 0.0
    %775 = vmatpush1.msra.mxu0 0.0
    %776 = vmatprep.subr.mxu0 0.0
    %777 = vmatpush1.msra.mxu0 0.0
    %778 = vmatprep.subr.mxu0 0.0
    %779 = vmatpush1.msra.mxu0 0.0
    %780 = vmatprep.subr.mxu0 0.0
    %781 = vmatpush1.msra.mxu0 0.0
    %782 = vmatprep.mubr.f32.mxu0 0.0
    %783 = vmatmul.mubr.f32.gmra.mrb[0].mxu0 %v716
    %v784 = vpop.f32.mrb[0].mxu0
    %v785 = vadd.f32 0.0, %v784
    %v786 = vpop.f32.mrb[0].mxu0
    %787 = vdwg.mxu0
    %790 = vrot.lane.b32.xlu0 %v709, 8
    %v791 = vpop.permute.xlu0 %790
    %792 = vrot.lane.b32.xlu0 %v785, 8
    %v793 = vpop.permute.xlu0 %792
    %vm796 = vcmask 130112
    %797 = vst.msk [vmem:[#allocation2] sm:$0xff] %vm796, %v791
    %798 = vst.msk [vmem:[#allocation2 + $0x8] sm:$0xff] %vm796, %v793
    %799 = vrot.lane.b32.xlu0 %v115, 112
    %v800 = vpop.permute.xlu0 %799
    %801 = vrot.lane.b32.xlu0 %v115, 80
    %v802 = vpop.permute.xlu0 %801
    %v803 = vsel %vm126, %v800, 0
    %v805 = vsel %vm126, %v802, 0
    %807 = vmatprep.subr.mxu0 0.0
    %808 = vmatpush1.xpose.msra.mxu0 %v805
    %809 = vmatprep.subr.mxu0 0.0
    %810 = vmatpush1.xpose.msra.mxu0 0.0
    %811 = vmatprep.subr.mxu0 0.0
    %812 = vmatpush1.xpose.msra.mxu0 0.0
    %813 = vmatprep.subr.mxu0 0.0
    %814 = vmatpush1.xpose.msra.mxu0 0.0
    %815 = vmatprep.subr.mxu0 0.0
    %816 = vmatpush1.xpose.msra.mxu0 0.0
    %817 = vmatprep.subr.mxu0 0.0
    %818 = vmatpush1.xpose.msra.mxu0 0.0
    %819 = vmatprep.subr.mxu0 0.0
    %820 = vmatpush1.xpose.msra.mxu0 0.0
    %821 = vmatprep.subr.mxu0 0.0
    %822 = vmatpush1.xpose.msra.mxu0 0.0
    %823 = vmatprep.subr.mxu0 0.0
    %824 = vmatpush1.xpose.msra.mxu0 0.0
    %825 = vmatprep.subr.mxu0 0.0
    %826 = vmatpush1.xpose.msra.mxu0 0.0
    %827 = vmatprep.subr.mxu0 0.0
    %828 = vmatpush1.xpose.msra.mxu0 0.0
    %829 = vmatprep.subr.mxu0 0.0
    %830 = vmatpush1.xpose.msra.mxu0 0.0
    %831 = vmatprep.subr.mxu0 0.0
    %832 = vmatpush1.xpose.msra.mxu0 0.0
    %833 = vmatprep.subr.mxu0 0.0
    %834 = vmatpush1.xpose.msra.mxu0 0.0
    %835 = vmatprep.subr.mxu0 0.0
    %836 = vmatpush1.xpose.msra.mxu0 0.0
    %837 = vmatprep.subr.mxu0 0.0
    %838 = vmatpush1.xpose.msra.mxu0 0.0
    %839 = vmatprep.subr.mxu0 0.0
    %840 = vmatpush1.xpose.msra.mxu0 0.0
    %841 = vmatprep.subr.mxu0 0.0
    %842 = vmatpush1.xpose.msra.mxu0 0.0
    %843 = vmatprep.subr.mxu0 0.0
    %844 = vmatpush1.xpose.msra.mxu0 0.0
    %845 = vmatprep.subr.mxu0 0.0
    %846 = vmatpush1.xpose.msra.mxu0 0.0
    %847 = vmatprep.subr.mxu0 0.0
    %848 = vmatpush1.xpose.msra.mxu0 0.0
    %849 = vmatprep.subr.mxu0 0.0
    %850 = vmatpush1.xpose.msra.mxu0 0.0
    %851 = vmatprep.subr.mxu0 0.0
    %852 = vmatpush1.xpose.msra.mxu0 0.0
    %853 = vmatprep.subr.mxu0 0.0
    %854 = vmatpush1.xpose.msra.mxu0 0.0
    %855 = vmatprep.subr.mxu0 0.0
    %856 = vmatpush1.xpose.msra.mxu0 0.0
    %857 = vmatprep.subr.mxu0 0.0
    %858 = vmatpush1.xpose.msra.mxu0 0.0
    %859 = vmatprep.subr.mxu0 0.0
    %860 = vmatpush1.xpose.msra.mxu0 0.0
    %861 = vmatprep.subr.mxu0 0.0
    %862 = vmatpush1.xpose.msra.mxu0 0.0
    %863 = vmatprep.subr.mxu0 0.0
    %864 = vmatpush1.xpose.msra.mxu0 0.0
    %865 = vmatprep.subr.mxu0 0.0
    %866 = vmatpush1.xpose.msra.mxu0 0.0
    %867 = vmatprep.subr.mxu0 0.0
    %868 = vmatpush1.xpose.msra.mxu0 0.0
    %869 = vmatprep.subr.mxu0 0.0
    %870 = vmatpush1.xpose.msra.mxu0 0.0
    %871 = vmatprep.mubr.f32.mxu0 0.0
    %872 = vmatmul.mubr.f32.gmra.mrb[0].mxu0 %v803
    %v873 = vpop.f32.mrb[0].mxu0
    %v874 = vadd.f32 0.0, %v873
    %v875 = vpop.f32.mrb[0].mxu0
    %876 = vdwg.mxu0
    %877 = vrot.lane.b32.xlu0 %v120, 112
    %v878 = vpop.permute.xlu0 %877
    %879 = vrot.lane.b32.xlu0 %v120, 80
    %v880 = vpop.permute.xlu0 %879
    %v881 = vsel %vm126, %v878, 0
    %v883 = vsel %vm126, %v880, 0
    %885 = vmatprep.subr.mxu0 0.0
    %886 = vmatpush1.xpose.msra.mxu0 %v883
    %887 = vmatprep.subr.mxu0 0.0
    %888 = vmatpush1.xpose.msra.mxu0 0.0
    %889 = vmatprep.subr.mxu0 0.0
    %890 = vmatpush1.xpose.msra.mxu0 0.0
    %891 = vmatprep.subr.mxu0 0.0
    %892 = vmatpush1.xpose.msra.mxu0 0.0
    %893 = vmatprep.subr.mxu0 0.0
    %894 = vmatpush1.xpose.msra.mxu0 0.0
    %895 = vmatprep.subr.mxu0 0.0
    %896 = vmatpush1.xpose.msra.mxu0 0.0
    %897 = vmatprep.subr.mxu0 0.0
    %898 = vmatpush1.xpose.msra.mxu0 0.0
    %899 = vmatprep.subr.mxu0 0.0
    %900 = vmatpush1.xpose.msra.mxu0 0.0
    %901 = vmatprep.subr.mxu0 0.0
    %902 = vmatpush1.xpose.msra.mxu0 0.0
    %903 = vmatprep.subr.mxu0 0.0
    %904 = vmatpush1.xpose.msra.mxu0 0.0
    %905 = vmatprep.subr.mxu0 0.0
    %906 = vmatpush1.xpose.msra.mxu0 0.0
    %907 = vmatprep.subr.mxu0 0.0
    %908 = vmatpush1.xpose.msra.mxu0 0.0
    %909 = vmatprep.subr.mxu0 0.0
    %910 = vmatpush1.xpose.msra.mxu0 0.0
    %911 = vmatprep.subr.mxu0 0.0
    %912 = vmatpush1.xpose.msra.mxu0 0.0
    %913 = vmatprep.subr.mxu0 0.0
    %914 = vmatpush1.xpose.msra.mxu0 0.0
    %915 = vmatprep.subr.mxu0 0.0
    %916 = vmatpush1.xpose.msra.mxu0 0.0
    %917 = vmatprep.subr.mxu0 0.0
    %918 = vmatpush1.xpose.msra.mxu0 0.0
    %919 = vmatprep.subr.mxu0 0.0
    %920 = vmatpush1.xpose.msra.mxu0 0.0
    %921 = vmatprep.subr.mxu0 0.0
    %922 = vmatpush1.xpose.msra.mxu0 0.0
    %923 = vmatprep.subr.mxu0 0.0
    %924 = vmatpush1.xpose.msra.mxu0 0.0
    %925 = vmatprep.subr.mxu0 0.0
    %926 = vmatpush1.xpose.msra.mxu0 0.0
    %927 = vmatprep.subr.mxu0 0.0
    %928 = vmatpush1.xpose.msra.mxu0 0.0
    %929 = vmatprep.subr.mxu0 0.0
    %930 = vmatpush1.xpose.msra.mxu0 0.0
    %931 = vmatprep.subr.mxu0 0.0
    %932 = vmatpush1.xpose.msra.mxu0 0.0
    %933 = vmatprep.subr.mxu0 0.0
    %934 = vmatpush1.xpose.msra.mxu0 0.0
    %935 = vmatprep.subr.mxu0 0.0
    %936 = vmatpush1.xpose.msra.mxu0 0.0
    %937 = vmatprep.subr.mxu0 0.0
    %938 = vmatpush1.xpose.msra.mxu0 0.0
    %939 = vmatprep.subr.mxu0 0.0
    %940 = vmatpush1.xpose.msra.mxu0 0.0
    %941 = vmatprep.subr.mxu0 0.0
    %942 = vmatpush1.xpose.msra.mxu0 0.0
    %943 = vmatprep.subr.mxu0 0.0
    %944 = vmatpush1.xpose.msra.mxu0 0.0
    %945 = vmatprep.subr.mxu0 0.0
    %946 = vmatpush1.xpose.msra.mxu0 0.0
    %947 = vmatprep.subr.mxu0 0.0
    %948 = vmatpush1.xpose.msra.mxu0 0.0
    %949 = vmatprep.mubr.f32.mxu0 0.0
    %950 = vmatmul.mubr.f32.gmra.mrb[0].mxu0 %v881
    %v951 = vpop.f32.mrb[0].mxu0
    %v952 = vadd.f32 0.0, %v951
    %v953 = vpop.f32.mrb[0].mxu0
    %954 = vdwg.mxu0
    %v955 = vmul.f32 %v874, 0.35355338
    %v956 = vmul.f32 %v952, 0.35355338
    %v957 = vsel %vm126, %v955, -inf
    %958 = vmax.xlane.f32.xlu0 %v957
    %v959 = vpop.xlane.xlu0 %958
    %v960 = vsel %vm126, %v956, -inf
    %961 = vmax.xlane.f32.xlu0 %v960
    %v962 = vpop.xlane.xlu0 %961
    %v963 = vsub.f32 %v955, %v959
    %v964 = vsub.f32 %v956, %v962
    %v965 = vmul.f32 %v963, 1.442695
    %v966 = vpow.pop %v965
    %v967 = vmul.f32 %v964, 1.442695
    %v968 = vpow.pop %v967
    %v969 = vsel %vm126, %v966, 0.0
    %970 = vadd.xlane.f32.xlu0 %v969
    %v971 = vpop.xlane.xlu0 %970
    %v972 = vsel %vm126, %v968, 0.0
    %973 = vadd.xlane.f32.xlu0 %v972
    %v974 = vpop.xlane.xlu0 %973
    %v975 = vrcp.pop %v971
    %v976 = vrcp.pop %v974
    %v977 = vmul.f32 %v966, %v975
    %v978 = vmul.f32 %v968, %v976
    %979 = vrot.lane.b32.xlu0 %v115, 48
    %v980 = vpop.permute.xlu0 %979
    %v983 = vsel %vm126, %v977, 0
    %985 = vmatprep.subr.mxu0 0.0
    %986 = vmatpush1.msra.mxu0 %v980
    %987 = vmatprep.subr.mxu0 0.0
    %988 = vmatpush1.msra.mxu0 0.0
    %989 = vmatprep.subr.mxu0 0.0
    %990 = vmatpush1.msra.mxu0 0.0
    %991 = vmatprep.subr.mxu0 0.0
    %992 = vmatpush1.msra.mxu0 0.0
    %993 = vmatprep.subr.mxu0 0.0
    %994 = vmatpush1.msra.mxu0 0.0
    %995 = vmatprep.subr.mxu0 0.0
    %996 = vmatpush1.msra.mxu0 0.0
    %997 = vmatprep.subr.mxu0 0.0
    %998 = vmatpush1.msra.mxu0 0.0
    %999 = vmatprep.subr.mxu0 0.0
    %1000 = vmatpush1.msra.mxu0 0.0
    %1001 = vmatprep.subr.mxu0 0.0
    %1002 = vmatpush1.msra.mxu0 0.0
    %1003 = vmatprep.subr.mxu0 0.0
    %1004 = vmatpush1.msra.mxu0 0.0
    %1005 = vmatprep.subr.mxu0 0.0
    %1006 = vmatpush1.msra.mxu0 0.0
    %1007 = vmatprep.subr.mxu0 0.0
    %1008 = vmatpush1.msra.mxu0 0.0
    %1009 = vmatprep.subr.mxu0 0.0
    %1010 = vmatpush1.msra.mxu0 0.0
    %1011 = vmatprep.subr.mxu0 0.0
    %1012 = vmatpush1.msra.mxu0 0.0
    %1013 = vmatprep.subr.mxu0 0.0
    %1014 = vmatpush1.msra.mxu0 0.0
    %1015 = vmatprep.subr.mxu0 0.0
    %1016 = vmatpush1.msra.mxu0 0.0
    %1017 = vmatprep.subr.mxu0 0.0
    %1018 = vmatpush1.msra.mxu0 0.0
    %1019 = vmatprep.subr.mxu0 0.0
    %1020 = vmatpush1.msra.mxu0 0.0
    %1021 = vmatprep.subr.mxu0 0.0
    %1022 = vmatpush1.msra.mxu0 0.0
    %1023 = vmatprep.subr.mxu0 0.0
    %1024 = vmatpush1.msra.mxu0 0.0
    %1025 = vmatprep.subr.mxu0 0.0
    %1026 = vmatpush1.msra.mxu0 0.0
    %1027 = vmatprep.subr.mxu0 0.0
    %1028 = vmatpush1.msra.mxu0 0.0
    %1029 = vmatprep.subr.mxu0 0.0
    %1030 = vmatpush1.msra.mxu0 0.0
    %1031 = vmatprep.subr.mxu0 0.0
    %1032 = vmatpush1.msra.mxu0 0.0
    %1033 = vmatprep.subr.mxu0 0.0
    %1034 = vmatpush1.msra.mxu0 0.0
    %1035 = vmatprep.subr.mxu0 0.0
    %1036 = vmatpush1.msra.mxu0 0.0
    %1037 = vmatprep.subr.mxu0 0.0
    %1038 = vmatpush1.msra.mxu0 0.0
    %1039 = vmatprep.subr.mxu0 0.0
    %1040 = vmatpush1.msra.mxu0 0.0
    %1041 = vmatprep.subr.mxu0 0.0
    %1042 = vmatpush1.msra.mxu0 0.0
    %1043 = vmatprep.subr.mxu0 0.0
    %1044 = vmatpush1.msra.mxu0 0.0
    %1045 = vmatprep.subr.mxu0 0.0
    %1046 = vmatpush1.msra.mxu0 0.0
    %1047 = vmatprep.subr.mxu0 0.0
    %1048 = vmatpush1.msra.mxu0 0.0
    %1049 = vmatprep.mubr.f32.mxu0 0.0
    %1050 = vmatmul.mubr.f32.gmra.mrb[0].mxu0 %v983
    %v1051 = vpop.f32.mrb[0].mxu0
    %v1052 = vadd.f32 0.0, %v1051
    %v1053 = vpop.f32.mrb[0].mxu0
    %1054 = vdwg.mxu0
    %1055 = vrot.lane.b32.xlu0 %v120, 48
    %v1056 = vpop.permute.xlu0 %1055
    %v1059 = vsel %vm126, %v978, 0
    %1061 = vmatprep.subr.mxu0 0.0
    %1062 = vmatpush1.msra.mxu0 %v1056
    %1063 = vmatprep.subr.mxu0 0.0
    %1064 = vmatpush1.msra.mxu0 0.0
    %1065 = vmatprep.subr.mxu0 0.0
    %1066 = vmatpush1.msra.mxu0 0.0
    %1067 = vmatprep.subr.mxu0 0.0
    %1068 = vmatpush1.msra.mxu0 0.0
    %1069 = vmatprep.subr.mxu0 0.0
    %1070 = vmatpush1.msra.mxu0 0.0
    %1071 = vmatprep.subr.mxu0 0.0
    %1072 = vmatpush1.msra.mxu0 0.0
    %1073 = vmatprep.subr.mxu0 0.0
    %1074 = vmatpush1.msra.mxu0 0.0
    %1075 = vmatprep.subr.mxu0 0.0
    %1076 = vmatpush1.msra.mxu0 0.0
    %1077 = vmatprep.subr.mxu0 0.0
    %1078 = vmatpush1.msra.mxu0 0.0
    %1079 = vmatprep.subr.mxu0 0.0
    %1080 = vmatpush1.msra.mxu0 0.0
    %1081 = vmatprep.subr.mxu0 0.0
    %1082 = vmatpush1.msra.mxu0 0.0
    %1083 = vmatprep.subr.mxu0 0.0
    %1084 = vmatpush1.msra.mxu0 0.0
    %1085 = vmatprep.subr.mxu0 0.0
    %1086 = vmatpush1.msra.mxu0 0.0
    %1087 = vmatprep.subr.mxu0 0.0
    %1088 = vmatpush1.msra.mxu0 0.0
    %1089 = vmatprep.subr.mxu0 0.0
    %1090 = vmatpush1.msra.mxu0 0.0
    %1091 = vmatprep.subr.mxu0 0.0
    %1092 = vmatpush1.msra.mxu0 0.0
    %1093 = vmatprep.subr.mxu0 0.0
    %1094 = vmatpush1.msra.mxu0 0.0
    %1095 = vmatprep.subr.mxu0 0.0
    %1096 = vmatpush1.msra.mxu0 0.0
    %1097 = vmatprep.subr.mxu0 0.0
    %1098 = vmatpush1.msra.mxu0 0.0
    %1099 = vmatprep.subr.mxu0 0.0
    %1100 = vmatpush1.msra.mxu0 0.0
    %1101 = vmatprep.subr.mxu0 0.0
    %1102 = vmatpush1.msra.mxu0 0.0
    %1103 = vmatprep.subr.mxu0 0.0
    %1104 = vmatpush1.msra.mxu0 0.0
    %1105 = vmatprep.subr.mxu0 0.0
    %1106 = vmatpush1.msra.mxu0 0.0
    %1107 = vmatprep.subr.mxu0 0.0
    %1108 = vmatpush1.msra.mxu0 0.0
    %1109 = vmatprep.subr.mxu0 0.0
    %1110 = vmatpush1.msra.mxu0 0.0
    %1111 = vmatprep.subr.mxu0 0.0
    %1112 = vmatpush1.msra.mxu0 0.0
    %1113 = vmatprep.subr.mxu0 0.0
    %1114 = vmatpush1.msra.mxu0 0.0
    %1115 = vmatprep.subr.mxu0 0.0
    %1116 = vmatpush1.msra.mxu0 0.0
    %1117 = vmatprep.subr.mxu0 0.0
    %1118 = vmatpush1.msra.mxu0 0.0
    %1119 = vmatprep.subr.mxu0 0.0
    %1120 = vmatpush1.msra.mxu0 0.0
    %1121 = vmatprep.subr.mxu0 0.0
    %1122 = vmatpush1.msra.mxu0 0.0
    %1123 = vmatprep.subr.mxu0 0.0
    %1124 = vmatpush1.msra.mxu0 0.0
    %1125 = vmatprep.mubr.f32.mxu0 0.0
    %1126 = vmatmul.mubr.f32.gmra.mrb[0].mxu0 %v1059
    %v1127 = vpop.f32.mrb[0].mxu0
    %v1128 = vadd.f32 0.0, %v1127
    %v1129 = vpop.f32.mrb[0].mxu0
    %1130 = vdwg.mxu0
    %1133 = vrot.lane.b32.xlu0 %v1052, 16
    %v1134 = vpop.permute.xlu0 %1133
    %1135 = vrot.lane.b32.xlu0 %v1128, 16
    %v1136 = vpop.permute.xlu0 %1135
    %vm1139 = vcmask 195712
    %1140 = vst.msk [vmem:[#allocation2] sm:$0xff] %vm1139, %v1134
    %1141 = vst.msk [vmem:[#allocation2 + $0x8] sm:$0xff] %vm1139, %v1136
    %1142 = vrot.lane.b32.xlu0 %v115, 104
    %v1143 = vpop.permute.xlu0 %1142
    %1144 = vrot.lane.b32.xlu0 %v115, 72
    %v1145 = vpop.permute.xlu0 %1144
    %v1146 = vsel %vm126, %v1143, 0
    %v1148 = vsel %vm126, %v1145, 0
    %1150 = vmatprep.subr.mxu0 0.0
    %1151 = vmatpush1.xpose.msra.mxu0 %v1148
    %1152 = vmatprep.subr.mxu0 0.0
    %1153 = vmatpush1.xpose.msra.mxu0 0.0
    %1154 = vmatprep.subr.mxu0 0.0
    %1155 = vmatpush1.xpose.msra.mxu0 0.0
    %1156 = vmatprep.subr.mxu0 0.0
    %1157 = vmatpush1.xpose.msra.mxu0 0.0
    %1158 = vmatprep.subr.mxu0 0.0
    %1159 = vmatpush1.xpose.msra.mxu0 0.0
    %1160 = vmatprep.subr.mxu0 0.0
    %1161 = vmatpush1.xpose.msra.mxu0 0.0
    %1162 = vmatprep.subr.mxu0 0.0
    %1163 = vmatpush1.xpose.msra.mxu0 0.0
    %1164 = vmatprep.subr.mxu0 0.0
    %1165 = vmatpush1.xpose.msra.mxu0 0.0
    %1166 = vmatprep.subr.mxu0 0.0
    %1167 = vmatpush1.xpose.msra.mxu0 0.0
    %1168 = vmatprep.subr.mxu0 0.0
    %1169 = vmatpush1.xpose.msra.mxu0 0.0
    %1170 = vmatprep.subr.mxu0 0.0
    %1171 = vmatpush1.xpose.msra.mxu0 0.0
    %1172 = vmatprep.subr.mxu0 0.0
    %1173 = vmatpush1.xpose.msra.mxu0 0.0
    %1174 = vmatprep.subr.mxu0 0.0
    %1175 = vmatpush1.xpose.msra.mxu0 0.0
    %1176 = vmatprep.subr.mxu0 0.0
    %1177 = vmatpush1.xpose.msra.mxu0 0.0
    %1178 = vmatprep.subr.mxu0 0.0
    %1179 = vmatpush1.xpose.msra.mxu0 0.0
    %1180 = vmatprep.subr.mxu0 0.0
    %1181 = vmatpush1.xpose.msra.mxu0 0.0
    %1182 = vmatprep.subr.mxu0 0.0
    %1183 = vmatpush1.xpose.msra.mxu0 0.0
    %1184 = vmatprep.subr.mxu0 0.0
    %1185 = vmatpush1.xpose.msra.mxu0 0.0
    %1186 = vmatprep.subr.mxu0 0.0
    %1187 = vmatpush1.xpose.msra.mxu0 0.0
    %1188 = vmatprep.subr.mxu0 0.0
    %1189 = vmatpush1.xpose.msra.mxu0 0.0
    %1190 = vmatprep.subr.mxu0 0.0
    %1191 = vmatpush1.xpose.msra.mxu0 0.0
    %1192 = vmatprep.subr.mxu0 0.0
    %1193 = vmatpush1.xpose.msra.mxu0 0.0
    %1194 = vmatprep.subr.mxu0 0.0
    %1195 = vmatpush1.xpose.msra.mxu0 0.0
    %1196 = vmatprep.subr.mxu0 0.0
    %1197 = vmatpush1.xpose.msra.mxu0 0.0
    %1198 = vmatprep.subr.mxu0 0.0
    %1199 = vmatpush1.xpose.msra.mxu0 0.0
    %1200 = vmatprep.subr.mxu0 0.0
    %1201 = vmatpush1.xpose.msra.mxu0 0.0
    %1202 = vmatprep.subr.mxu0 0.0
    %1203 = vmatpush1.xpose.msra.mxu0 0.0
    %1204 = vmatprep.subr.mxu0 0.0
    %1205 = vmatpush1.xpose.msra.mxu0 0.0
    %1206 = vmatprep.subr.mxu0 0.0
    %1207 = vmatpush1.xpose.msra.mxu0 0.0
    %1208 = vmatprep.subr.mxu0 0.0
    %1209 = vmatpush1.xpose.msra.mxu0 0.0
    %1210 = vmatprep.subr.mxu0 0.0
    %1211 = vmatpush1.xpose.msra.mxu0 0.0
    %1212 = vmatprep.subr.mxu0 0.0
    %1213 = vmatpush1.xpose.msra.mxu0 0.0
    %1214 = vmatprep.mubr.f32.mxu0 0.0
    %1215 = vmatmul.mubr.f32.gmra.mrb[0].mxu0 %v1146
    %v1216 = vpop.f32.mrb[0].mxu0
    %v1217 = vadd.f32 0.0, %v1216
    %v1218 = vpop.f32.mrb[0].mxu0
    %1219 = vdwg.mxu0
    %1220 = vrot.lane.b32.xlu0 %v120, 104
    %v1221 = vpop.permute.xlu0 %1220
    %1222 = vrot.lane.b32.xlu0 %v120, 72
    %v1223 = vpop.permute.xlu0 %1222
    %v1224 = vsel %vm126, %v1221, 0
    %v1226 = vsel %vm126, %v1223, 0
    %1228 = vmatprep.subr.mxu0 0.0
    %1229 = vmatpush1.xpose.msra.mxu0 %v1226
    %1230 = vmatprep.subr.mxu0 0.0
    %1231 = vmatpush1.xpose.msra.mxu0 0.0
    %1232 = vmatprep.subr.mxu0 0.0
    %1233 = vmatpush1.xpose.msra.mxu0 0.0
    %1234 = vmatprep.subr.mxu0 0.0
    %1235 = vmatpush1.xpose.msra.mxu0 0.0
    %1236 = vmatprep.subr.mxu0 0.0
    %1237 = vmatpush1.xpose.msra.mxu0 0.0
    %1238 = vmatprep.subr.mxu0 0.0
    %1239 = vmatpush1.xpose.msra.mxu0 0.0
    %1240 = vmatprep.subr.mxu0 0.0
    %1241 = vmatpush1.xpose.msra.mxu0 0.0
    %1242 = vmatprep.subr.mxu0 0.0
    %1243 = vmatpush1.xpose.msra.mxu0 0.0
    %1244 = vmatprep.subr.mxu0 0.0
    %1245 = vmatpush1.xpose.msra.mxu0 0.0
    %1246 = vmatprep.subr.mxu0 0.0
    %1247 = vmatpush1.xpose.msra.mxu0 0.0
    %1248 = vmatprep.subr.mxu0 0.0
    %1249 = vmatpush1.xpose.msra.mxu0 0.0
    %1250 = vmatprep.subr.mxu0 0.0
    %1251 = vmatpush1.xpose.msra.mxu0 0.0
    %1252 = vmatprep.subr.mxu0 0.0
    %1253 = vmatpush1.xpose.msra.mxu0 0.0
    %1254 = vmatprep.subr.mxu0 0.0
    %1255 = vmatpush1.xpose.msra.mxu0 0.0
    %1256 = vmatprep.subr.mxu0 0.0
    %1257 = vmatpush1.xpose.msra.mxu0 0.0
    %1258 = vmatprep.subr.mxu0 0.0
    %1259 = vmatpush1.xpose.msra.mxu0 0.0
    %1260 = vmatprep.subr.mxu0 0.0
    %1261 = vmatpush1.xpose.msra.mxu0 0.0
    %1262 = vmatprep.subr.mxu0 0.0
    %1263 = vmatpush1.xpose.msra.mxu0 0.0
    %1264 = vmatprep.subr.mxu0 0.0
    %1265 = vmatpush1.xpose.msra.mxu0 0.0
    %1266 = vmatprep.subr.mxu0 0.0
    %1267 = vmatpush1.xpose.msra.mxu0 0.0
    %1268 = vmatprep.subr.mxu0 0.0
    %1269 = vmatpush1.xpose.msra.mxu0 0.0
    %1270 = vmatprep.subr.mxu0 0.0
    %1271 = vmatpush1.xpose.msra.mxu0 0.0
    %1272 = vmatprep.subr.mxu0 0.0
    %1273 = vmatpush1.xpose.msra.mxu0 0.0
    %1274 = vmatprep.subr.mxu0 0.0
    %1275 = vmatpush1.xpose.msra.mxu0 0.0
    %1276 = vmatprep.subr.mxu0 0.0
    %1277 = vmatpush1.xpose.msra.mxu0 0.0
    %1278 = vmatprep.subr.mxu0 0.0
    %1279 = vmatpush1.xpose.msra.mxu0 0.0
    %1280 = vmatprep.subr.mxu0 0.0
    %1281 = vmatpush1.xpose.msra.mxu0 0.0
    %1282 = vmatprep.subr.mxu0 0.0
    %1283 = vmatpush1.xpose.msra.mxu0 0.0
    %1284 = vmatprep.subr.mxu0 0.0
    %1285 = vmatpush1.xpose.msra.mxu0 0.0
    %1286 = vmatprep.subr.mxu0 0.0
    %1287 = vmatpush1.xpose.msra.mxu0 0.0
    %1288 = vmatprep.subr.mxu0 0.0
    %1289 = vmatpush1.xpose.msra.mxu0 0.0
    %1290 = vmatprep.subr.mxu0 0.0
    %1291 = vmatpush1.xpose.msra.mxu0 0.0
    %1292 = vmatprep.mubr.f32.mxu0 0.0
    %1293 = vmatmul.mubr.f32.gmra.mrb[0].mxu0 %v1224
    %v1294 = vpop.f32.mrb[0].mxu0
    %v1295 = vadd.f32 0.0, %v1294
    %v1296 = vpop.f32.mrb[0].mxu0
    %1297 = vdwg.mxu0
    %v1298 = vmul.f32 %v1217, 0.35355338
    %v1299 = vmul.f32 %v1295, 0.35355338
    %v1300 = vsel %vm126, %v1298, -inf
    %1301 = vmax.xlane.f32.xlu0 %v1300
    %v1302 = vpop.xlane.xlu0 %1301
    %v1303 = vsel %vm126, %v1299, -inf
    %1304 = vmax.xlane.f32.xlu0 %v1303
    %v1305 = vpop.xlane.xlu0 %1304
    %v1306 = vsub.f32 %v1298, %v1302
    %v1307 = vsub.f32 %v1299, %v1305
    %v1308 = vmul.f32 %v1306, 1.442695
    %v1309 = vpow.pop %v1308
    %v1310 = vmul.f32 %v1307, 1.442695
    %v1311 = vpow.pop %v1310
    %v1312 = vsel %vm126, %v1309, 0.0
    %1313 = vadd.xlane.f32.xlu0 %v1312
    %v1314 = vpop.xlane.xlu0 %1313
    %v1315 = vsel %vm126, %v1311, 0.0
    %1316 = vadd.xlane.f32.xlu0 %v1315
    %v1317 = vpop.xlane.xlu0 %1316
    %v1318 = vrcp.pop %v1314
    %v1319 = vrcp.pop %v1317
    %v1320 = vmul.f32 %v1309, %v1318
    %v1321 = vmul.f32 %v1311, %v1319
    %1322 = vrot.lane.b32.xlu0 %v115, 40
    %v1323 = vpop.permute.xlu0 %1322
    %v1326 = vsel %vm126, %v1320, 0
    %1328 = vmatprep.subr.mxu0 0.0
    %1329 = vmatpush1.msra.mxu0 %v1323
    %1330 = vmatprep.subr.mxu0 0.0
    %1331 = vmatpush1.msra.mxu0 0.0
    %1332 = vmatprep.subr.mxu0 0.0
    %1333 = vmatpush1.msra.mxu0 0.0
    %1334 = vmatprep.subr.mxu0 0.0
    %1335 = vmatpush1.msra.mxu0 0.0
    %1336 = vmatprep.subr.mxu0 0.0
    %1337 = vmatpush1.msra.mxu0 0.0
    %1338 = vmatprep.subr.mxu0 0.0
    %1339 = vmatpush1.msra.mxu0 0.0
    %1340 = vmatprep.subr.mxu0 0.0
    %1341 = vmatpush1.msra.mxu0 0.0
    %1342 = vmatprep.subr.mxu0 0.0
    %1343 = vmatpush1.msra.mxu0 0.0
    %1344 = vmatprep.subr.mxu0 0.0
    %1345 = vmatpush1.msra.mxu0 0.0
    %1346 = vmatprep.subr.mxu0 0.0
    %1347 = vmatpush1.msra.mxu0 0.0
    %1348 = vmatprep.subr.mxu0 0.0
    %1349 = vmatpush1.msra.mxu0 0.0
    %1350 = vmatprep.subr.mxu0 0.0
    %1351 = vmatpush1.msra.mxu0 0.0
    %1352 = vmatprep.subr.mxu0 0.0
    %1353 = vmatpush1.msra.mxu0 0.0
    %1354 = vmatprep.subr.mxu0 0.0
    %1355 = vmatpush1.msra.mxu0 0.0
    %1356 = vmatprep.subr.mxu0 0.0
    %1357 = vmatpush1.msra.mxu0 0.0
    %1358 = vmatprep.subr.mxu0 0.0
    %1359 = vmatpush1.msra.mxu0 0.0
    %1360 = vmatprep.subr.mxu0 0.0
    %1361 = vmatpush1.msra.mxu0 0.0
    %1362 = vmatprep.subr.mxu0 0.0
    %1363 = vmatpush1.msra.mxu0 0.0
    %1364 = vmatprep.subr.mxu0 0.0
    %1365 = vmatpush1.msra.mxu0 0.0
    %1366 = vmatprep.subr.mxu0 0.0
    %1367 = vmatpush1.msra.mxu0 0.0
    %1368 = vmatprep.subr.mxu0 0.0
    %1369 = vmatpush1.msra.mxu0 0.0
    %1370 = vmatprep.subr.mxu0 0.0
    %1371 = vmatpush1.msra.mxu0 0.0
    %1372 = vmatprep.subr.mxu0 0.0
    %1373 = vmatpush1.msra.mxu0 0.0
    %1374 = vmatprep.subr.mxu0 0.0
    %1375 = vmatpush1.msra.mxu0 0.0
    %1376 = vmatprep.subr.mxu0 0.0
    %1377 = vmatpush1.msra.mxu0 0.0
    %1378 = vmatprep.subr.mxu0 0.0
    %1379 = vmatpush1.msra.mxu0 0.0
    %1380 = vmatprep.subr.mxu0 0.0
    %1381 = vmatpush1.msra.mxu0 0.0
    %1382 = vmatprep.subr.mxu0 0.0
    %1383 = vmatpush1.msra.mxu0 0.0
    %1384 = vmatprep.subr.mxu0 0.0
    %1385 = vmatpush1.msra.mxu0 0.0
    %1386 = vmatprep.subr.mxu0 0.0
    %1387 = vmatpush1.msra.mxu0 0.0
    %1388 = vmatprep.subr.mxu0 0.0
    %1389 = vmatpush1.msra.mxu0 0.0
    %1390 = vmatprep.subr.mxu0 0.0
    %1391 = vmatpush1.msra.mxu0 0.0
    %1392 = vmatprep.mubr.f32.mxu0 0.0
    %1393 = vmatmul.mubr.f32.gmra.mrb[0].mxu0 %v1326
    %v1394 = vpop.f32.mrb[0].mxu0
    %v1395 = vadd.f32 0.0, %v1394
    %v1396 = vpop.f32.mrb[0].mxu0
    %1397 = vdwg.mxu0
    %1398 = vrot.lane.b32.xlu0 %v120, 40
    %v1399 = vpop.permute.xlu0 %1398
    %v1402 = vsel %vm126, %v1321, 0
    %1404 = vmatprep.subr.mxu0 0.0
    %1405 = vmatpush1.msra.mxu0 %v1399
    %1406 = vmatprep.subr.mxu0 0.0
    %1407 = vmatpush1.msra.mxu0 0.0
    %1408 = vmatprep.subr.mxu0 0.0
    %1409 = vmatpush1.msra.mxu0 0.0
    %1410 = vmatprep.subr.mxu0 0.0
    %1411 = vmatpush1.msra.mxu0 0.0
    %1412 = vmatprep.subr.mxu0 0.0
    %1413 = vmatpush1.msra.mxu0 0.0
    %1414 = vmatprep.subr.mxu0 0.0
    %1415 = vmatpush1.msra.mxu0 0.0
    %1416 = vmatprep.subr.mxu0 0.0
    %1417 = vmatpush1.msra.mxu0 0.0
    %1418 = vmatprep.subr.mxu0 0.0
    %1419 = vmatpush1.msra.mxu0 0.0
    %1420 = vmatprep.subr.mxu0 0.0
    %1421 = vmatpush1.msra.mxu0 0.0
    %1422 = vmatprep.subr.mxu0 0.0
    %1423 = vmatpush1.msra.mxu0 0.0
    %1424 = vmatprep.subr.mxu0 0.0
    %1425 = vmatpush1.msra.mxu0 0.0
    %1426 = vmatprep.subr.mxu0 0.0
    %1427 = vmatpush1.msra.mxu0 0.0
    %1428 = vmatprep.subr.mxu0 0.0
    %1429 = vmatpush1.msra.mxu0 0.0
    %1430 = vmatprep.subr.mxu0 0.0
    %1431 = vmatpush1.msra.mxu0 0.0
    %1432 = vmatprep.subr.mxu0 0.0
    %1433 = vmatpush1.msra.mxu0 0.0
    %1434 = vmatprep.subr.mxu0 0.0
    %1435 = vmatpush1.msra.mxu0 0.0
    %1436 = vmatprep.subr.mxu0 0.0
    %1437 = vmatpush1.msra.mxu0 0.0
    %1438 = vmatprep.subr.mxu0 0.0
    %1439 = vmatpush1.msra.mxu0 0.0
    %1440 = vmatprep.subr.mxu0 0.0
    %1441 = vmatpush1.msra.mxu0 0.0
    %1442 = vmatprep.subr.mxu0 0.0
    %1443 = vmatpush1.msra.mxu0 0.0
    %1444 = vmatprep.subr.mxu0 0.0
    %1445 = vmatpush1.msra.mxu0 0.0
    %1446 = vmatprep.subr.mxu0 0.0
    %1447 = vmatpush1.msra.mxu0 0.0
    %1448 = vmatprep.subr.mxu0 0.0
    %1449 = vmatpush1.msra.mxu0 0.0
    %1450 = vmatprep.subr.mxu0 0.0
    %1451 = vmatpush1.msra.mxu0 0.0
    %1452 = vmatprep.subr.mxu0 0.0
    %1453 = vmatpush1.msra.mxu0 0.0
    %1454 = vmatprep.subr.mxu0 0.0
    %1455 = vmatpush1.msra.mxu0 0.0
    %1456 = vmatprep.subr.mxu0 0.0
    %1457 = vmatpush1.msra.mxu0 0.0
    %1458 = vmatprep.subr.mxu0 0.0
    %1459 = vmatpush1.msra.mxu0 0.0
    %1460 = vmatprep.subr.mxu0 0.0
    %1461 = vmatpush1.msra.mxu0 0.0
    %1462 = vmatprep.subr.mxu0 0.0
    %1463 = vmatpush1.msra.mxu0 0.0
    %1464 = vmatprep.subr.mxu0 0.0
    %1465 = vmatpush1.msra.mxu0 0.0
    %1466 = vmatprep.subr.mxu0 0.0
    %1467 = vmatpush1.msra.mxu0 0.0
    %1468 = vmatprep.mubr.f32.mxu0 0.0
    %1469 = vmatmul.mubr.f32.gmra.mrb[0].mxu0 %v1402
    %v1470 = vpop.f32.mrb[0].mxu0
    %v1471 = vadd.f32 0.0, %v1470
    %v1472 = vpop.f32.mrb[0].mxu0
    %1473 = vdwg.mxu0
    %1476 = vrot.lane.b32.xlu0 %v1395, 24
    %v1477 = vpop.permute.xlu0 %1476
    %1478 = vrot.lane.b32.xlu0 %v1471, 24
    %v1479 = vpop.permute.xlu0 %1478
    %vm1482 = vcmask 261312
    %1483 = vst.msk [vmem:[#allocation2] sm:$0xff] %vm1482, %v1477
    %1484 = vst.msk [vmem:[#allocation2 + $0x8] sm:$0xff] %vm1482, %v1479
    %v1485 = vld [vmem:[#allocation2] sm:$0xff]
    %v1486 = vld [vmem:[#allocation2 + $0x8] sm:$0xff]
    %v1487 = vlaneseq
    %v1488 = vshrl.u32 %v1487, 7
    %v1489 = vsub.s32 1, %v1488
    %v1490 = vrot.slane %v36, %v1489
    %1495 = vrot.lane.b32.xlu0 %v20, 32
    %v1496 = vpop.permute.xlu0 %1495
    %1497 = vrot.lane.b32.xlu0 %v22, 32
    %v1498 = vpop.permute.xlu0 %1497
    %1499 = vrot.lane.b32.xlu0 %v24, 32
    %v1500 = vpop.permute.xlu0 %1499
    %1501 = vrot.lane.b32.xlu0 %v26, 32
    %v1502 = vpop.permute.xlu0 %1501
    %v1508 = vsel %vm41, %v1485, 0
    %v1511 = vsel %vm41, %v1486, 0
    %1513 = vmatprep.subr.mxu0 0.0
    %1514 = vmatpush1.msra.mxu0 %v1496
    %1515 = vmatprep.subr.mxu0 0.0
    %1516 = vmatpush1.msra.mxu0 %v1498
    %1517 = vmatprep.subr.mxu0 0.0
    %1518 = vmatpush1.msra.mxu0 %v1500
    %1519 = vmatprep.subr.mxu0 0.0
    %1520 = vmatpush1.msra.mxu0 %v1502
    %1521 = vmatprep.subr.mxu0 0.0
    %1522 = vmatpush1.msra.mxu0 0.0
    %1523 = vmatprep.subr.mxu0 0.0
    %1524 = vmatpush1.msra.mxu0 0.0
    %1525 = vmatprep.subr.mxu0 0.0
    %1526 = vmatpush1.msra.mxu0 0.0
    %1527 = vmatprep.subr.mxu0 0.0
    %1528 = vmatpush1.msra.mxu0 0.0
    %1529 = vmatprep.subr.mxu0 0.0
    %1530 = vmatpush1.msra.mxu0 0.0
    %1531 = vmatprep.subr.mxu0 0.0
    %1532 = vmatpush1.msra.mxu0 0.0
    %1533 = vmatprep.subr.mxu0 0.0
    %1534 = vmatpush1.msra.mxu0 0.0
    %1535 = vmatprep.subr.mxu0 0.0
    %1536 = vmatpush1.msra.mxu0 0.0
    %1537 = vmatprep.subr.mxu0 0.0
    %1538 = vmatpush1.msra.mxu0 0.0
    %1539 = vmatprep.subr.mxu0 0.0
    %1540 = vmatpush1.msra.mxu0 0.0
    %1541 = vmatprep.subr.mxu0 0.0
    %1542 = vmatpush1.msra.mxu0 0.0
    %1543 = vmatprep.subr.mxu0 0.0
    %1544 = vmatpush1.msra.mxu0 0.0
    %1545 = vmatprep.subr.mxu0 0.0
    %1546 = vmatpush1.msra.mxu0 0.0
    %1547 = vmatprep.subr.mxu0 0.0
    %1548 = vmatpush1.msra.mxu0 0.0
    %1549 = vmatprep.subr.mxu0 0.0
    %1550 = vmatpush1.msra.mxu0 0.0
    %1551 = vmatprep.subr.mxu0 0.0
    %1552 = vmatpush1.msra.mxu0 0.0
    %1553 = vmatprep.subr.mxu0 0.0
    %1554 = vmatpush1.msra.mxu0 0.0
    %1555 = vmatprep.subr.mxu0 0.0
    %1556 = vmatpush1.msra.mxu0 0.0
    %1557 = vmatprep.subr.mxu0 0.0
    %1558 = vmatpush1.msra.mxu0 0.0
    %1559 = vmatprep.subr.mxu0 0.0
    %1560 = vmatpush1.msra.mxu0 0.0
    %1561 = vmatprep.subr.mxu0 0.0
    %1562 = vmatpush1.msra.mxu0 0.0
    %1563 = vmatprep.subr.mxu0 0.0
    %1564 = vmatpush1.msra.mxu0 0.0
    %1565 = vmatprep.subr.mxu0 0.0
    %1566 = vmatpush1.msra.mxu0 0.0
    %1567 = vmatprep.subr.mxu0 0.0
    %1568 = vmatpush1.msra.mxu0 0.0
    %1569 = vmatprep.subr.mxu0 0.0
    %1570 = vmatpush1.msra.mxu0 0.0
    %1571 = vmatprep.subr.mxu0 0.0
    %1572 = vmatpush1.msra.mxu0 0.0
    %1573 = vmatprep.subr.mxu0 0.0
    %1574 = vmatpush1.msra.mxu0 0.0
    %1575 = vmatprep.subr.mxu0 0.0
    %1576 = vmatpush1.msra.mxu0 0.0
    %1577 = vmatprep.mubr.f32.mxu0 0.0
    %1578 = vmatmul.mubr.f32.gmra.mrb[0].mxu0 %v1508
    %v1579 = vpop.f32.mrb[0].mxu0
    %v1580 = vadd.f32 %v1490, %v1579
    %v1581 = vpop.f32.mrb[0].mxu0
    %1582 = vmatprep.mubr.f32.mxu0 0.0
    %1583 = vmatmul.mubr.f32.gmra.mrb[0].mxu0 %v1511
    %v1584 = vpop.f32.mrb[0].mxu0
    %v1585 = vadd.f32 %v1490, %v1584
    %v1586 = vpop.f32.mrb[0].mxu0
    %1587 = vdwg.mxu0
    %v1588 = vadd.f32 %v1580, %v18
    %v1589 = vadd.f32 %v1585, %v19
    %v1590 = vsel %vm41, %v1588, 0.0
    %1591 = vadd.xlane.f32.xlu0 %v1590
    %v1592 = vpop.xlane.xlu0 %1591
    %v1593 = vsel %vm41, %v1589, 0.0
    %1594 = vadd.xlane.f32.xlu0 %v1593
    %v1595 = vpop.xlane.xlu0 %1594
    %v1596 = vrcp.pop 32.0
    %v1597 = vmul.f32 %v1592, %v1596
    %v1598 = vmul.f32 %v1595, %v1596
    %v1599 = vsub.f32 %v1588, %v1597
    %v1600 = vsub.f32 %v1589, %v1598
    %v1601 = vmul.f32 %v1599, %v1599
    %v1602 = vmul.f32 %v1600, %v1600
    %v1603 = vsel %vm41, %v1601, 0.0
    %1604 = vadd.xlane.f32.xlu0 %v1603
    %v1605 = vpop.xlane.xlu0 %1604
    %v1606 = vsel %vm41, %v1602, 0.0
    %1607 = vadd.xlane.f32.xlu0 %v1606
    %v1608 = vpop.xlane.xlu0 %1607
    %v1609 = vmul.f32 %v1605, %v1596
    %v1610 = vmul.f32 %v1608, %v1596
    %v1611 = vadd.f32 %v1609, 1e-06
    %v1612 = vadd.f32 %v1610, 1e-06
    %v1613 = vrsqrt.pop %v1611
    %v1614 = vrsqrt.pop %v1612
    %v1615 = vmul.f32 %v1599, %v1613
    %v1616 = vmul.f32 %v1600, %v1614
    %v1617 = vlaneseq
    %v1618 = vshrl.u32 %v1617, 7
    %v1619 = vsub.s32 2, %v1618
    %v1620 = vrot.slane %v36, %v1619
    %v1621 = vmul.f32 %v1615, %v1620
    %v1622 = vmul.f32 %v1616, %v1620
    %v1623 = vlaneseq
    %v1624 = vshrl.u32 %v1623, 7
    %v1625 = vsub.s32 3, %v1624
    %v1626 = vrot.slane %v36, %v1625
    %v1627 = vadd.f32 %v1621, %v1626
    %v1628 = vadd.f32 %v1622, %v1626
    %v1629 = vlaneseq
    %v1630 = vshrl.u32 %v1629, 7
    %v1631 = vsub.s32 4, %v1630
    %v1632 = vrot.slane %v36, %v1631
    %v1634 = vsel %vm41, %v1627, 0
    %v1637 = vsel %vm41, %v1628, 0
    %1639 = vmatprep.subr.mxu0 0.0
    %1640 = vmatpush1.msra.mxu0 %v21
    %1641 = vmatprep.subr.mxu0 0.0
    %1642 = vmatpush1.msra.mxu0 %v23
    %1643 = vmatprep.subr.mxu0 0.0
    %1644 = vmatpush1.msra.mxu0 %v25
    %1645 = vmatprep.subr.mxu0 0.0
    %1646 = vmatpush1.msra.mxu0 %v27
    %1647 = vmatprep.subr.mxu0 0.0
    %1648 = vmatpush1.msra.mxu0 0.0
    %1649 = vmatprep.subr.mxu0 0.0
    %1650 = vmatpush1.msra.mxu0 0.0
    %1651 = vmatprep.subr.mxu0 0.0
    %1652 = vmatpush1.msra.mxu0 0.0
    %1653 = vmatprep.subr.mxu0 0.0
    %1654 = vmatpush1.msra.mxu0 0.0
    %1655 = vmatprep.subr.mxu0 0.0
    %1656 = vmatpush1.msra.mxu0 0.0
    %1657 = vmatprep.subr.mxu0 0.0
    %1658 = vmatpush1.msra.mxu0 0.0
    %1659 = vmatprep.subr.mxu0 0.0
    %1660 = vmatpush1.msra.mxu0 0.0
    %1661 = vmatprep.subr.mxu0 0.0
    %1662 = vmatpush1.msra.mxu0 0.0
    %1663 = vmatprep.subr.mxu0 0.0
    %1664 = vmatpush1.msra.mxu0 0.0
    %1665 = vmatprep.subr.mxu0 0.0
    %1666 = vmatpush1.msra.mxu0 0.0
    %1667 = vmatprep.subr.mxu0 0.0
    %1668 = vmatpush1.msra.mxu0 0.0
    %1669 = vmatprep.subr.mxu0 0.0
    %1670 = vmatpush1.msra.mxu0 0.0
    %1671 = vmatprep.subr.mxu0 0.0
    %1672 = vmatpush1.msra.mxu0 0.0
    %1673 = vmatprep.subr.mxu0 0.0
    %1674 = vmatpush1.msra.mxu0 0.0
    %1675 = vmatprep.subr.mxu0 0.0
    %1676 = vmatpush1.msra.mxu0 0.0
    %1677 = vmatprep.subr.mxu0 0.0
    %1678 = vmatpush1.msra.mxu0 0.0
    %1679 = vmatprep.subr.mxu0 0.0
    %1680 = vmatpush1.msra.mxu0 0.0
    %1681 = vmatprep.subr.mxu0 0.0
    %1682 = vmatpush1.msra.mxu0 0.0
    %1683 = vmatprep.subr.mxu0 0.0
    %1684 = vmatpush1.msra.mxu0 0.0
    %1685 = vmatprep.subr.mxu0 0.0
    %1686 = vmatpush1.msra.mxu0 0.0
    %1687 = vmatprep.subr.mxu0 0.0
    %1688 = vmatpush1.msra.mxu0 0.0
    %1689 = vmatprep.subr.mxu0 0.0
    %1690 = vmatpush1.msra.mxu0 0.0
    %1691 = vmatprep.subr.mxu0 0.0
    %1692 = vmatpush1.msra.mxu0 0.0
    %1693 = vmatprep.subr.mxu0 0.0
    %1694 = vmatpush1.msra.mxu0 0.0
    %1695 = vmatprep.subr.mxu0 0.0
    %1696 = vmatpush1.msra.mxu0 0.0
    %1697 = vmatprep.subr.mxu0 0.0
    %1698 = vmatpush1.msra.mxu0 0.0
    %1699 = vmatprep.subr.mxu0 0.0
    %1700 = vmatpush1.msra.mxu0 0.0
    %1701 = vmatprep.subr.mxu0 0.0
    %1702 = vmatpush1.msra.mxu0 0.0
    %1703 = vmatprep.mubr.f32.mxu0 0.0
    %1704 = vmatmul.mubr.f32.gmra.mrb[0].mxu0 %v1634
    %v1705 = vpop.f32.mrb[0].mxu0
    %v1706 = vadd.f32 %v1632, %v1705
    %v1707 = vpop.f32.mrb[0].mxu0
    %1708 = vmatprep.mubr.f32.mxu0 0.0
    %1709 = vmatmul.mubr.f32.gmra.mrb[0].mxu0 %v1637
    %v1710 = vpop.f32.mrb[0].mxu0
    %v1711 = vadd.f32 %v1632, %v1710
    %v1712 = vpop.f32.mrb[0].mxu0
    %1713 = vdwg.mxu0
    %v1714 = vmax.f32 %v1706, 0.0
    %v1715 = vmax.f32 %v1711, 0.0
    %v1716 = vlaneseq
    %v1717 = vshrl.u32 %v1716, 7
    %v1718 = vsub.s32 5, %v1717
    %v1719 = vrot.slane %v36, %v1718
    %vm1720 = vcmask 523264
    %v1722 = vsel %vm1720, %v1714, 0
    %v1725 = vsel %vm1720, %v1715, 0
    %1727 = vmatprep.subr.mxu0 0.0
    %1728 = vmatpush1.msra.mxu0 %v28
    %1729 = vmatprep.subr.mxu0 0.0
    %1730 = vmatpush1.msra.mxu0 %v29
    %1731 = vmatprep.subr.mxu0 0.0
    %1732 = vmatpush1.msra.mxu0 %v30
    %1733 = vmatprep.subr.mxu0 0.0
    %1734 = vmatpush1.msra.mxu0 %v31
    %1735 = vmatprep.subr.mxu0 0.0
    %1736 = vmatpush1.msra.mxu0 %v32
    %1737 = vmatprep.subr.mxu0 0.0
    %1738 = vmatpush1.msra.mxu0 %v33
    %1739 = vmatprep.subr.mxu0 0.0
    %1740 = vmatpush1.msra.mxu0 %v34
    %1741 = vmatprep.subr.mxu0 0.0
    %1742 = vmatpush1.msra.mxu0 %v35
    %1743 = vmatprep.subr.mxu0 0.0
    %1744 = vmatpush1.msra.mxu0 0.0
    %1745 = vmatprep.subr.mxu0 0.0
    %1746 = vmatpush1.msra.mxu0 0.0
    %1747 = vmatprep.subr.mxu0 0.0
    %1748 = vmatpush1.msra.mxu0 0.0
    %1749 = vmatprep.subr.mxu0 0.0
    %1750 = vmatpush1.msra.mxu0 0.0
    %1751 = vmatprep.subr.mxu0 0.0
    %1752 = vmatpush1.msra.mxu0 0.0
    %1753 = vmatprep.subr.mxu0 0.0
    %1754 = vmatpush1.msra.mxu0 0.0
    %1755 = vmatprep.subr.mxu0 0.0
    %1756 = vmatpush1.msra.mxu0 0.0
    %1757 = vmatprep.subr.mxu0 0.0
    %1758 = vmatpush1.msra.mxu0 0.0
    %1759 = vmatprep.subr.mxu0 0.0
    %1760 = vmatpush1.msra.mxu0 0.0
    %1761 = vmatprep.subr.mxu0 0.0
    %1762 = vmatpush1.msra.mxu0 0.0
    %1763 = vmatprep.subr.mxu0 0.0
    %1764 = vmatpush1.msra.mxu0 0.0
    %1765 = vmatprep.subr.mxu0 0.0
    %1766 = vmatpush1.msra.mxu0 0.0
    %1767 = vmatprep.subr.mxu0 0.0
    %1768 = vmatpush1.msra.mxu0 0.0
    %1769 = vmatprep.subr.mxu0 0.0
    %1770 = vmatpush1.msra.mxu0 0.0
    %1771 = vmatprep.subr.mxu0 0.0
    %1772 = vmatpush1.msra.mxu0 0.0
    %1773 = vmatprep.subr.mxu0 0.0
    %1774 = vmatpush1.msra.mxu0 0.0
    %1775 = vmatprep.subr.mxu0 0.0
    %1776 = vmatpush1.msra.mxu0 0.0
    %1777 = vmatprep.subr.mxu0 0.0
    %1778 = vmatpush1.msra.mxu0 0.0
    %1779 = vmatprep.subr.mxu0 0.0
    %1780 = vmatpush1.msra.mxu0 0.0
    %1781 = vmatprep.subr.mxu0 0.0
    %1782 = vmatpush1.msra.mxu0 0.0
    %1783 = vmatprep.subr.mxu0 0.0
    %1784 = vmatpush1.msra.mxu0 0.0
    %1785 = vmatprep.subr.mxu0 0.0
    %1786 = vmatpush1.msra.mxu0 0.0
    %1787 = vmatprep.subr.mxu0 0.0
    %1788 = vmatpush1.msra.mxu0 0.0
    %1789 = vmatprep.subr.mxu0 0.0
    %1790 = vmatpush1.msra.mxu0 0.0
    %1791 = vmatprep.mubr.f32.mxu0 0.0
    %1792 = vmatmul.mubr.f32.gmra.mrb[0].mxu0 %v1722
    %v1793 = vpop.f32.mrb[0].mxu0
    %v1794 = vadd.f32 %v1719, %v1793
    %v1795 = vpop.f32.mrb[0].mxu0
    %1796 = vmatprep.mubr.f32.mxu0 0.0
    %1797 = vmatmul.mubr.f32.gmra.mrb[0].mxu0 %v1725
    %v1798 = vpop.f32.mrb[0].mxu0
    %v1799 = vadd.f32 %v1719, %v1798
    %v1800 = vpop.f32.mrb[0].mxu0
    %1801 = vdwg.mxu0
    %v1802 = vadd.f32 %v1794, %v1627
    %v1803 = vadd.f32 %v1799, %v1628
    %v1804 = vsel %vm41, %v1802, 0.0
    %1805 = vadd.xlane.f32.xlu0 %v1804
    %v1806 = vpop.xlane.xlu0 %1805
    %v1807 = vsel %vm41, %v1803, 0.0
    %1808 = vadd.xlane.f32.xlu0 %v1807
    %v1809 = vpop.xlane.xlu0 %1808
    %v1810 = vmul.f32 %v1806, %v1596
    %v1811 = vmul.f32 %v1809, %v1596
    %v1812 = vsub.f32 %v1802, %v1810
    %v1813 = vsub.f32 %v1803, %v1811
    %v1814 = vmul.f32 %v1812, %v1812
    %v1815 = vmul.f32 %v1813, %v1813
    %v1816 = vsel %vm41, %v1814, 0.0
    %1817 = vadd.xlane.f32.xlu0 %v1816
    %v1818 = vpop.xlane.xlu0 %1817
    %v1819 = vsel %vm41, %v1815, 0.0
    %1820 = vadd.xlane.f32.xlu0 %v1819
    %v1821 = vpop.xlane.xlu0 %1820
    %v1822 = vmul.f32 %v1818, %v1596
    %v1823 = vmul.f32 %v1821, %v1596
    %v1824 = vadd.f32 %v1822, 1e-06
    %v1825 = vadd.f32 %v1823, 1e-06
    %v1826 = vrsqrt.pop %v1824
    %v1827 = vrsqrt.pop %v1825
    %v1828 = vmul.f32 %v1812, %v1826
    %v1829 = vmul.f32 %v1813, %v1827
    %v1830 = vlaneseq
    %v1831 = vshrl.u32 %v1830, 7
    %v1832 = vsub.s32 6, %v1831
    %v1833 = vrot.slane %v36, %v1832
    %v1834 = vmul.f32 %v1828, %v1833
    %v1835 = vmul.f32 %v1829, %v1833
    %v1836 = vlaneseq
    %v1837 = vshrl.u32 %v1836, 7
    %v1838 = vsub.s32 7, %v1837
    %v1839 = vrot.slane %v36, %v1838
    %v1840 = vadd.f32 %v1834, %v1839
    %v1841 = vadd.f32 %v1835, %v1839
    %s1842 = scalar_lea.vmem %s1, 64
    %v1843 = vld [vmem:[%s1842] sm:$0xff]
    %v1844 = vld [vmem:[%s1842 + $0x8] sm:$0xff]
    %v1845 = vld [vmem:[%s1842 + $0x10] sm:$0xff]
    %v1846 = vld [vmem:[%s1842 + $0x18] sm:$0xff]
    %v1847 = vld [vmem:[%s1842 + $0x20] sm:$0xff]
    %v1848 = vld [vmem:[%s1842 + $0x28] sm:$0xff]
    %v1849 = vld [vmem:[%s1842 + $0x30] sm:$0xff]
    %v1850 = vld [vmem:[%s1842 + $0x38] sm:$0xff]
    %s1851 = scalar_lea.vmem %s2, 64
    %v1852 = vld [vmem:[%s1851] sm:$0xff]
    %v1853 = vld [vmem:[%s1851 + $0x8] sm:$0xff]
    %v1854 = vld [vmem:[%s1851 + $0x10] sm:$0xff]
    %v1855 = vld [vmem:[%s1851 + $0x18] sm:$0xff]
    %v1856 = vld [vmem:[%s1851 + $0x20] sm:$0xff]
    %v1857 = vld [vmem:[%s1851 + $0x28] sm:$0xff]
    %v1858 = vld [vmem:[%s1851 + $0x30] sm:$0xff]
    %v1859 = vld [vmem:[%s1851 + $0x38] sm:$0xff]
    %s1860 = scalar_lea.vmem %s3, 8
    %v1861 = vld [vmem:[%s1860] sm:$0xff]
    %v1862 = vlaneseq
    %v1863 = vshrl.u32 %v1862, 7
    %v1864 = vsub.s32 0, %v1863
    %v1865 = vrot.slane %v1861, %v1864
    %v1867 = vsel %vm41, %v1840, 0
    %v1870 = vsel %vm41, %v1841, 0
    %1872 = vmatprep.subr.mxu0 0.0
    %1873 = vmatpush1.msra.mxu0 %v1843
    %1874 = vmatprep.subr.mxu0 0.0
    %1875 = vmatpush1.msra.mxu0 %v1845
    %1876 = vmatprep.subr.mxu0 0.0
    %1877 = vmatpush1.msra.mxu0 %v1847
    %1878 = vmatprep.subr.mxu0 0.0
    %1879 = vmatpush1.msra.mxu0 %v1849
    %1880 = vmatprep.subr.mxu0 0.0
    %1881 = vmatpush1.msra.mxu0 0.0
    %1882 = vmatprep.subr.mxu0 0.0
    %1883 = vmatpush1.msra.mxu0 0.0
    %1884 = vmatprep.subr.mxu0 0.0
    %1885 = vmatpush1.msra.mxu0 0.0
    %1886 = vmatprep.subr.mxu0 0.0
    %1887 = vmatpush1.msra.mxu0 0.0
    %1888 = vmatprep.subr.mxu0 0.0
    %1889 = vmatpush1.msra.mxu0 0.0
    %1890 = vmatprep.subr.mxu0 0.0
    %1891 = vmatpush1.msra.mxu0 0.0
    %1892 = vmatprep.subr.mxu0 0.0
    %1893 = vmatpush1.msra.mxu0 0.0
    %1894 = vmatprep.subr.mxu0 0.0
    %1895 = vmatpush1.msra.mxu0 0.0
    %1896 = vmatprep.subr.mxu0 0.0
    %1897 = vmatpush1.msra.mxu0 0.0
    %1898 = vmatprep.subr.mxu0 0.0
    %1899 = vmatpush1.msra.mxu0 0.0
    %1900 = vmatprep.subr.mxu0 0.0
    %1901 = vmatpush1.msra.mxu0 0.0
    %1902 = vmatprep.subr.mxu0 0.0
    %1903 = vmatpush1.msra.mxu0 0.0
    %1904 = vmatprep.subr.mxu0 0.0
    %1905 = vmatpush1.msra.mxu0 0.0
    %1906 = vmatprep.subr.mxu0 0.0
    %1907 = vmatpush1.msra.mxu0 0.0
    %1908 = vmatprep.subr.mxu0 0.0
    %1909 = vmatpush1.msra.mxu0 0.0
    %1910 = vmatprep.subr.mxu0 0.0
    %1911 = vmatpush1.msra.mxu0 0.0
    %1912 = vmatprep.subr.mxu0 0.0
    %1913 = vmatpush1.msra.mxu0 0.0
    %1914 = vmatprep.subr.mxu0 0.0
    %1915 = vmatpush1.msra.mxu0 0.0
    %1916 = vmatprep.subr.mxu0 0.0
    %1917 = vmatpush1.msra.mxu0 0.0
    %1918 = vmatprep.subr.mxu0 0.0
    %1919 = vmatpush1.msra.mxu0 0.0
    %1920 = vmatprep.subr.mxu0 0.0
    %1921 = vmatpush1.msra.mxu0 0.0
    %1922 = vmatprep.subr.mxu0 0.0
    %1923 = vmatpush1.msra.mxu0 0.0
    %1924 = vmatprep.subr.mxu0 0.0
    %1925 = vmatpush1.msra.mxu0 0.0
    %1926 = vmatprep.subr.mxu0 0.0
    %1927 = vmatpush1.msra.mxu0 0.0
    %1928 = vmatprep.subr.mxu0 0.0
    %1929 = vmatpush1.msra.mxu0 0.0
    %1930 = vmatprep.subr.mxu0 0.0
    %1931 = vmatpush1.msra.mxu0 0.0
    %1932 = vmatprep.subr.mxu0 0.0
    %1933 = vmatpush1.msra.mxu0 0.0
    %1934 = vmatprep.subr.mxu0 0.0
    %1935 = vmatpush1.msra.mxu0 0.0
    %1936 = vmatprep.mubr.f32.mxu0 0.0
    %1937 = vmatmul.mubr.f32.gmra.mrb[0].mxu0 %v1867
    %v1938 = vpop.f32.mrb[0].mxu0
    %v1939 = vadd.f32 %v1865, %v1938
    %v1940 = vpop.f32.mrb[0].mxu0
    %1941 = vmatprep.mubr.f32.mxu0 0.0
    %1942 = vmatmul.mubr.f32.gmra.mrb[0].mxu0 %v1870
    %v1943 = vpop.f32.mrb[0].mxu0
    %v1944 = vadd.f32 %v1865, %v1943
    %v1945 = vpop.f32.mrb[0].mxu0
    %1946 = vdwg.mxu0
    %1948 = vrot.lane.b32.xlu0 %v1939, 96
    %v1949 = vpop.permute.xlu0 %1948
    %v1950 = vsel %vm126, %v1939, 0
    %v1952 = vsel %vm126, %v1949, 0
    %1954 = vmatprep.subr.mxu0 0.0
    %1955 = vmatpush1.xpose.msra.mxu0 %v1952
    %1956 = vmatprep.subr.mxu0 0.0
    %1957 = vmatpush1.xpose.msra.mxu0 0.0
    %1958 = vmatprep.subr.mxu0 0.0
    %1959 = vmatpush1.xpose.msra.mxu0 0.0
    %1960 = vmatprep.subr.mxu0 0.0
    %1961 = vmatpush1.xpose.msra.mxu0 0.0
    %1962 = vmatprep.subr.mxu0 0.0
    %1963 = vmatpush1.xpose.msra.mxu0 0.0
    %1964 = vmatprep.subr.mxu0 0.0
    %1965 = vmatpush1.xpose.msra.mxu0 0.0
    %1966 = vmatprep.subr.mxu0 0.0
    %1967 = vmatpush1.xpose.msra.mxu0 0.0
    %1968 = vmatprep.subr.mxu0 0.0
    %1969 = vmatpush1.xpose.msra.mxu0 0.0
    %1970 = vmatprep.subr.mxu0 0.0
    %1971 = vmatpush1.xpose.msra.mxu0 0.0
    %1972 = vmatprep.subr.mxu0 0.0
    %1973 = vmatpush1.xpose.msra.mxu0 0.0
    %1974 = vmatprep.subr.mxu0 0.0
    %1975 = vmatpush1.xpose.msra.mxu0 0.0
    %1976 = vmatprep.subr.mxu0 0.0
    %1977 = vmatpush1.xpose.msra.mxu0 0.0
    %1978 = vmatprep.subr.mxu0 0.0
    %1979 = vmatpush1.xpose.msra.mxu0 0.0
    %1980 = vmatprep.subr.mxu0 0.0
    %1981 = vmatpush1.xpose.msra.mxu0 0.0
    %1982 = vmatprep.subr.mxu0 0.0
    %1983 = vmatpush1.xpose.msra.mxu0 0.0
    %1984 = vmatprep.subr.mxu0 0.0
    %1985 = vmatpush1.xpose.msra.mxu0 0.0
    %1986 = vmatprep.subr.mxu0 0.0
    %1987 = vmatpush1.xpose.msra.mxu0 0.0
    %1988 = vmatprep.subr.mxu0 0.0
    %1989 = vmatpush1.xpose.msra.mxu0 0.0
    %1990 = vmatprep.subr.mxu0 0.0
    %1991 = vmatpush1.xpose.msra.mxu0 0.0
    %1992 = vmatprep.subr.mxu0 0.0
    %1993 = vmatpush1.xpose.msra.mxu0 0.0
    %1994 = vmatprep.subr.mxu0 0.0
    %1995 = vmatpush1.xpose.msra.mxu0 0.0
    %1996 = vmatprep.subr.mxu0 0.0
    %1997 = vmatpush1.xpose.msra.mxu0 0.0
    %1998 = vmatprep.subr.mxu0 0.0
    %1999 = vmatpush1.xpose.msra.mxu0 0.0
    %2000 = vmatprep.subr.mxu0 0.0
    %2001 = vmatpush1.xpose.msra.mxu0 0.0
    %2002 = vmatprep.subr.mxu0 0.0
    %2003 = vmatpush1.xpose.msra.mxu0 0.0
    %2004 = vmatprep.subr.mxu0 0.0
    %2005 = vmatpush1.xpose.msra.mxu0 0.0
    %2006 = vmatprep.subr.mxu0 0.0
    %2007 = vmatpush1.xpose.msra.mxu0 0.0
    %2008 = vmatprep.subr.mxu0 0.0
    %2009 = vmatpush1.xpose.msra.mxu0 0.0
    %2010 = vmatprep.subr.mxu0 0.0
    %2011 = vmatpush1.xpose.msra.mxu0 0.0
    %2012 = vmatprep.subr.mxu0 0.0
    %2013 = vmatpush1.xpose.msra.mxu0 0.0
    %2014 = vmatprep.subr.mxu0 0.0
    %2015 = vmatpush1.xpose.msra.mxu0 0.0
    %2016 = vmatprep.subr.mxu0 0.0
    %2017 = vmatpush1.xpose.msra.mxu0 0.0
    %2018 = vmatprep.mubr.f32.mxu0 0.0
    %2019 = vmatmul.mubr.f32.gmra.mrb[0].mxu0 %v1950
    %v2020 = vpop.f32.mrb[0].mxu0
    %v2021 = vadd.f32 0.0, %v2020
    %v2022 = vpop.f32.mrb[0].mxu0
    %2023 = vdwg.mxu0
    %2025 = vrot.lane.b32.xlu0 %v1944, 96
    %v2026 = vpop.permute.xlu0 %2025
    %v2027 = vsel %vm126, %v1944, 0
    %v2029 = vsel %vm126, %v2026, 0
    %2031 = vmatprep.subr.mxu0 0.0
    %2032 = vmatpush1.xpose.msra.mxu0 %v2029
    %2033 = vmatprep.subr.mxu0 0.0
    %2034 = vmatpush1.xpose.msra.mxu0 0.0
    %2035 = vmatprep.subr.mxu0 0.0
    %2036 = vmatpush1.xpose.msra.mxu0 0.0
    %2037 = vmatprep.subr.mxu0 0.0
    %2038 = vmatpush1.xpose.msra.mxu0 0.0
    %2039 = vmatprep.subr.mxu0 0.0
    %2040 = vmatpush1.xpose.msra.mxu0 0.0
    %2041 = vmatprep.subr.mxu0 0.0
    %2042 = vmatpush1.xpose.msra.mxu0 0.0
    %2043 = vmatprep.subr.mxu0 0.0
    %2044 = vmatpush1.xpose.msra.mxu0 0.0
    %2045 = vmatprep.subr.mxu0 0.0
    %2046 = vmatpush1.xpose.msra.mxu0 0.0
    %2047 = vmatprep.subr.mxu0 0.0
    %2048 = vmatpush1.xpose.msra.mxu0 0.0
    %2049 = vmatprep.subr.mxu0 0.0
    %2050 = vmatpush1.xpose.msra.mxu0 0.0
    %2051 = vmatprep.subr.mxu0 0.0
    %2052 = vmatpush1.xpose.msra.mxu0 0.0
    %2053 = vmatprep.subr.mxu0 0.0
    %2054 = vmatpush1.xpose.msra.mxu0 0.0
    %2055 = vmatprep.subr.mxu0 0.0
    %2056 = vmatpush1.xpose.msra.mxu0 0.0
    %2057 = vmatprep.subr.mxu0 0.0
    %2058 = vmatpush1.xpose.msra.mxu0 0.0
    %2059 = vmatprep.subr.mxu0 0.0
    %2060 = vmatpush1.xpose.msra.mxu0 0.0
    %2061 = vmatprep.subr.mxu0 0.0
    %2062 = vmatpush1.xpose.msra.mxu0 0.0
    %2063 = vmatprep.subr.mxu0 0.0
    %2064 = vmatpush1.xpose.msra.mxu0 0.0
    %2065 = vmatprep.subr.mxu0 0.0
    %2066 = vmatpush1.xpose.msra.mxu0 0.0
    %2067 = vmatprep.subr.mxu0 0.0
    %2068 = vmatpush1.xpose.msra.mxu0 0.0
    %2069 = vmatprep.subr.mxu0 0.0
    %2070 = vmatpush1.xpose.msra.mxu0 0.0
    %2071 = vmatprep.subr.mxu0 0.0
    %2072 = vmatpush1.xpose.msra.mxu0 0.0
    %2073 = vmatprep.subr.mxu0 0.0
    %2074 = vmatpush1.xpose.msra.mxu0 0.0
    %2075 = vmatprep.subr.mxu0 0.0
    %2076 = vmatpush1.xpose.msra.mxu0 0.0
    %2077 = vmatprep.subr.mxu0 0.0
    %2078 = vmatpush1.xpose.msra.mxu0 0.0
    %2079 = vmatprep.subr.mxu0 0.0
    %2080 = vmatpush1.xpose.msra.mxu0 0.0
    %2081 = vmatprep.subr.mxu0 0.0
    %2082 = vmatpush1.xpose.msra.mxu0 0.0
    %2083 = vmatprep.subr.mxu0 0.0
    %2084 = vmatpush1.xpose.msra.mxu0 0.0
    %2085 = vmatprep.subr.mxu0 0.0
    %2086 = vmatpush1.xpose.msra.mxu0 0.0
    %2087 = vmatprep.subr.mxu0 0.0
    %2088 = vmatpush1.xpose.msra.mxu0 0.0
    %2089 = vmatprep.subr.mxu0 0.0
    %2090 = vmatpush1.xpose.msra.mxu0 0.0
    %2091 = vmatprep.subr.mxu0 0.0
    %2092 = vmatpush1.xpose.msra.mxu0 0.0
    %2093 = vmatprep.subr.mxu0 0.0
    %2094 = vmatpush1.xpose.msra.mxu0 0.0
    %2095 = vmatprep.mubr.f32.mxu0 0.0
    %2096 = vmatmul.mubr.f32.gmra.mrb[0].mxu0 %v2027
    %v2097 = vpop.f32.mrb[0].mxu0
    %v2098 = vadd.f32 0.0, %v2097
    %v2099 = vpop.f32.mrb[0].mxu0
    %2100 = vdwg.mxu0
    %v2101 = vmul.f32 %v2021, 0.35355338
    %v2102 = vmul.f32 %v2098, 0.35355338
    %v2103 = vsel %vm126, %v2101, -inf
    %2104 = vmax.xlane.f32.xlu0 %v2103
    %v2105 = vpop.xlane.xlu0 %2104
    %v2106 = vsel %vm126, %v2102, -inf
    %2107 = vmax.xlane.f32.xlu0 %v2106
    %v2108 = vpop.xlane.xlu0 %2107
    %v2109 = vsub.f32 %v2101, %v2105
    %v2110 = vsub.f32 %v2102, %v2108
    %v2111 = vmul.f32 %v2109, 1.442695
    %v2112 = vpow.pop %v2111
    %v2113 = vmul.f32 %v2110, 1.442695
    %v2114 = vpow.pop %v2113
    %v2115 = vsel %vm126, %v2112, 0.0
    %2116 = vadd.xlane.f32.xlu0 %v2115
    %v2117 = vpop.xlane.xlu0 %2116
    %v2118 = vsel %vm126, %v2114, 0.0
    %2119 = vadd.xlane.f32.xlu0 %v2118
    %v2120 = vpop.xlane.xlu0 %2119
    %v2121 = vrcp.pop %v2117
    %v2122 = vrcp.pop %v2120
    %v2123 = vmul.f32 %v2112, %v2121
    %v2124 = vmul.f32 %v2114, %v2122
    %2125 = vrot.lane.b32.xlu0 %v1939, 64
    %v2126 = vpop.permute.xlu0 %2125
    %v2129 = vsel %vm126, %v2123, 0
    %2131 = vmatprep.subr.mxu0 0.0
    %2132 = vmatpush1.msra.mxu0 %v2126
    %2133 = vmatprep.subr.mxu0 0.0
    %2134 = vmatpush1.msra.mxu0 0.0
    %2135 = vmatprep.subr.mxu0 0.0
    %2136 = vmatpush1.msra.mxu0 0.0
    %2137 = vmatprep.subr.mxu0 0.0
    %2138 = vmatpush1.msra.mxu0 0.0
    %2139 = vmatprep.subr.mxu0 0.0
    %2140 = vmatpush1.msra.mxu0 0.0
    %2141 = vmatprep.subr.mxu0 0.0
    %2142 = vmatpush1.msra.mxu0 0.0
    %2143 = vmatprep.subr.mxu0 0.0
    %2144 = vmatpush1.msra.mxu0 0.0
    %2145 = vmatprep.subr.mxu0 0.0
    %2146 = vmatpush1.msra.mxu0 0.0
    %2147 = vmatprep.subr.mxu0 0.0
    %2148 = vmatpush1.msra.mxu0 0.0
    %2149 = vmatprep.subr.mxu0 0.0
    %2150 = vmatpush1.msra.mxu0 0.0
    %2151 = vmatprep.subr.mxu0 0.0
    %2152 = vmatpush1.msra.mxu0 0.0
    %2153 = vmatprep.subr.mxu0 0.0
    %2154 = vmatpush1.msra.mxu0 0.0
    %2155 = vmatprep.subr.mxu0 0.0
    %2156 = vmatpush1.msra.mxu0 0.0
    %2157 = vmatprep.subr.mxu0 0.0
    %2158 = vmatpush1.msra.mxu0 0.0
    %2159 = vmatprep.subr.mxu0 0.0
    %2160 = vmatpush1.msra.mxu0 0.0
    %2161 = vmatprep.subr.mxu0 0.0
    %2162 = vmatpush1.msra.mxu0 0.0
    %2163 = vmatprep.subr.mxu0 0.0
    %2164 = vmatpush1.msra.mxu0 0.0
    %2165 = vmatprep.subr.mxu0 0.0
    %2166 = vmatpush1.msra.mxu0 0.0
    %2167 = vmatprep.subr.mxu0 0.0
    %2168 = vmatpush1.msra.mxu0 0.0
    %2169 = vmatprep.subr.mxu0 0.0
    %2170 = vmatpush1.msra.mxu0 0.0
    %2171 = vmatprep.subr.mxu0 0.0
    %2172 = vmatpush1.msra.mxu0 0.0
    %2173 = vmatprep.subr.mxu0 0.0
    %2174 = vmatpush1.msra.mxu0 0.0
    %2175 = vmatprep.subr.mxu0 0.0
    %2176 = vmatpush1.msra.mxu0 0.0
    %2177 = vmatprep.subr.mxu0 0.0
    %2178 = vmatpush1.msra.mxu0 0.0
    %2179 = vmatprep.subr.mxu0 0.0
    %2180 = vmatpush1.msra.mxu0 0.0
    %2181 = vmatprep.subr.mxu0 0.0
    %2182 = vmatpush1.msra.mxu0 0.0
    %2183 = vmatprep.subr.mxu0 0.0
    %2184 = vmatpush1.msra.mxu0 0.0
    %2185 = vmatprep.subr.mxu0 0.0
    %2186 = vmatpush1.msra.mxu0 0.0
    %2187 = vmatprep.subr.mxu0 0.0
    %2188 = vmatpush1.msra.mxu0 0.0
    %2189 = vmatprep.subr.mxu0 0.0
    %2190 = vmatpush1.msra.mxu0 0.0
    %2191 = vmatprep.subr.mxu0 0.0
    %2192 = vmatpush1.msra.mxu0 0.0
    %2193 = vmatprep.subr.mxu0 0.0
    %2194 = vmatpush1.msra.mxu0 0.0
    %2195 = vmatprep.mubr.f32.mxu0 0.0
    %2196 = vmatmul.mubr.f32.gmra.mrb[0].mxu0 %v2129
    %v2197 = vpop.f32.mrb[0].mxu0
    %v2198 = vadd.f32 0.0, %v2197
    %v2199 = vpop.f32.mrb[0].mxu0
    %2200 = vdwg.mxu0
    %2201 = vrot.lane.b32.xlu0 %v1944, 64
    %v2202 = vpop.permute.xlu0 %2201
    %v2205 = vsel %vm126, %v2124, 0
    %2207 = vmatprep.subr.mxu0 0.0
    %2208 = vmatpush1.msra.mxu0 %v2202
    %2209 = vmatprep.subr.mxu0 0.0
    %2210 = vmatpush1.msra.mxu0 0.0
    %2211 = vmatprep.subr.mxu0 0.0
    %2212 = vmatpush1.msra.mxu0 0.0
    %2213 = vmatprep.subr.mxu0 0.0
    %2214 = vmatpush1.msra.mxu0 0.0
    %2215 = vmatprep.subr.mxu0 0.0
    %2216 = vmatpush1.msra.mxu0 0.0
    %2217 = vmatprep.subr.mxu0 0.0
    %2218 = vmatpush1.msra.mxu0 0.0
    %2219 = vmatprep.subr.mxu0 0.0
    %2220 = vmatpush1.msra.mxu0 0.0
    %2221 = vmatprep.subr.mxu0 0.0
    %2222 = vmatpush1.msra.mxu0 0.0
    %2223 = vmatprep.subr.mxu0 0.0
    %2224 = vmatpush1.msra.mxu0 0.0
    %2225 = vmatprep.subr.mxu0 0.0
    %2226 = vmatpush1.msra.mxu0 0.0
    %2227 = vmatprep.subr.mxu0 0.0
    %2228 = vmatpush1.msra.mxu0 0.0
    %2229 = vmatprep.subr.mxu0 0.0
    %2230 = vmatpush1.msra.mxu0 0.0
    %2231 = vmatprep.subr.mxu0 0.0
    %2232 = vmatpush1.msra.mxu0 0.0
    %2233 = vmatprep.subr.mxu0 0.0
    %2234 = vmatpush1.msra.mxu0 0.0
    %2235 = vmatprep.subr.mxu0 0.0
    %2236 = vmatpush1.msra.mxu0 0.0
    %2237 = vmatprep.subr.mxu0 0.0
    %2238 = vmatpush1.msra.mxu0 0.0
    %2239 = vmatprep.subr.mxu0 0.0
    %2240 = vmatpush1.msra.mxu0 0.0
    %2241 = vmatprep.subr.mxu0 0.0
    %2242 = vmatpush1.msra.mxu0 0.0
    %2243 = vmatprep.subr.mxu0 0.0
    %2244 = vmatpush1.msra.mxu0 0.0
    %2245 = vmatprep.subr.mxu0 0.0
    %2246 = vmatpush1.msra.mxu0 0.0
    %2247 = vmatprep.subr.mxu0 0.0
    %2248 = vmatpush1.msra.mxu0 0.0
    %2249 = vmatprep.subr.mxu0 0.0
    %2250 = vmatpush1.msra.mxu0 0.0
    %2251 = vmatprep.subr.mxu0 0.0
    %2252 = vmatpush1.msra.mxu0 0.0
    %2253 = vmatprep.subr.mxu0 0.0
    %2254 = vmatpush1.msra.mxu0 0.0
    %2255 = vmatprep.subr.mxu0 0.0
    %2256 = vmatpush1.msra.mxu0 0.0
    %2257 = vmatprep.subr.mxu0 0.0
    %2258 = vmatpush1.msra.mxu0 0.0
    %2259 = vmatprep.subr.mxu0 0.0
    %2260 = vmatpush1.msra.mxu0 0.0
    %2261 = vmatprep.subr.mxu0 0.0
    %2262 = vmatpush1.msra.mxu0 0.0
    %2263 = vmatprep.subr.mxu0 0.0
    %2264 = vmatpush1.msra.mxu0 0.0
    %2265 = vmatprep.subr.mxu0 0.0
    %2266 = vmatpush1.msra.mxu0 0.0
    %2267 = vmatprep.subr.mxu0 0.0
    %2268 = vmatpush1.msra.mxu0 0.0
    %2269 = vmatprep.subr.mxu0 0.0
    %2270 = vmatpush1.msra.mxu0 0.0
    %2271 = vmatprep.mubr.f32.mxu0 0.0
    %2272 = vmatmul.mubr.f32.gmra.mrb[0].mxu0 %v2205
    %v2273 = vpop.f32.mrb[0].mxu0
    %v2274 = vadd.f32 0.0, %v2273
    %v2275 = vpop.f32.mrb[0].mxu0
    %2276 = vdwg.mxu0
    %2277 = vst.msk [vmem:[#allocation2] sm:$0xff] %vm126, %v2198
    %2278 = vst.msk [vmem:[#allocation2 + $0x8] sm:$0xff] %vm126, %v2274
    %2279 = vrot.lane.b32.xlu0 %v1939, 120
    %v2280 = vpop.permute.xlu0 %2279
    %2281 = vrot.lane.b32.xlu0 %v1939, 88
    %v2282 = vpop.permute.xlu0 %2281
    %v2283 = vsel %vm126, %v2280, 0
    %v2285 = vsel %vm126, %v2282, 0
    %2287 = vmatprep.subr.mxu0 0.0
    %2288 = vmatpush1.xpose.msra.mxu0 %v2285
    %2289 = vmatprep.subr.mxu0 0.0
    %2290 = vmatpush1.xpose.msra.mxu0 0.0
    %2291 = vmatprep.subr.mxu0 0.0
    %2292 = vmatpush1.xpose.msra.mxu0 0.0
    %2293 = vmatprep.subr.mxu0 0.0
    %2294 = vmatpush1.xpose.msra.mxu0 0.0
    %2295 = vmatprep.subr.mxu0 0.0
    %2296 = vmatpush1.xpose.msra.mxu0 0.0
    %2297 = vmatprep.subr.mxu0 0.0
    %2298 = vmatpush1.xpose.msra.mxu0 0.0
    %2299 = vmatprep.subr.mxu0 0.0
    %2300 = vmatpush1.xpose.msra.mxu0 0.0
    %2301 = vmatprep.subr.mxu0 0.0
    %2302 = vmatpush1.xpose.msra.mxu0 0.0
    %2303 = vmatprep.subr.mxu0 0.0
    %2304 = vmatpush1.xpose.msra.mxu0 0.0
    %2305 = vmatprep.subr.mxu0 0.0
    %2306 = vmatpush1.xpose.msra.mxu0 0.0
    %2307 = vmatprep.subr.mxu0 0.0
    %2308 = vmatpush1.xpose.msra.mxu0 0.0
    %2309 = vmatprep.subr.mxu0 0.0
    %2310 = vmatpush1.xpose.msra.mxu0 0.0
    %2311 = vmatprep.subr.mxu0 0.0
    %2312 = vmatpush1.xpose.msra.mxu0 0.0
    %2313 = vmatprep.subr.mxu0 0.0
    %2314 = vmatpush1.xpose.msra.mxu0 0.0
    %2315 = vmatprep.subr.mxu0 0.0
    %2316 = vmatpush1.xpose.msra.mxu0 0.0
    %2317 = vmatprep.subr.mxu0 0.0
    %2318 = vmatpush1.xpose.msra.mxu0 0.0
    %2319 = vmatprep.subr.mxu0 0.0
    %2320 = vmatpush1.xpose.msra.mxu0 0.0
    %2321 = vmatprep.subr.mxu0 0.0
    %2322 = vmatpush1.xpose.msra.mxu0 0.0
    %2323 = vmatprep.subr.mxu0 0.0
    %2324 = vmatpush1.xpose.msra.mxu0 0.0
    %2325 = vmatprep.subr.mxu0 0.0
    %2326 = vmatpush1.xpose.msra.mxu0 0.0
    %2327 = vmatprep.subr.mxu0 0.0
    %2328 = vmatpush1.xpose.msra.mxu0 0.0
    %2329 = vmatprep.subr.mxu0 0.0
    %2330 = vmatpush1.xpose.msra.mxu0 0.0
    %2331 = vmatprep.subr.mxu0 0.0
    %2332 = vmatpush1.xpose.msra.mxu0 0.0
    %2333 = vmatprep.subr.mxu0 0.0
    %2334 = vmatpush1.xpose.msra.mxu0 0.0
    %2335 = vmatprep.subr.mxu0 0.0
    %2336 = vmatpush1.xpose.msra.mxu0 0.0
    %2337 = vmatprep.subr.mxu0 0.0
    %2338 = vmatpush1.xpose.msra.mxu0 0.0
    %2339 = vmatprep.subr.mxu0 0.0
    %2340 = vmatpush1.xpose.msra.mxu0 0.0
    %2341 = vmatprep.subr.mxu0 0.0
    %2342 = vmatpush1.xpose.msra.mxu0 0.0
    %2343 = vmatprep.subr.mxu0 0.0
    %2344 = vmatpush1.xpose.msra.mxu0 0.0
    %2345 = vmatprep.subr.mxu0 0.0
    %2346 = vmatpush1.xpose.msra.mxu0 0.0
    %2347 = vmatprep.subr.mxu0 0.0
    %2348 = vmatpush1.xpose.msra.mxu0 0.0
    %2349 = vmatprep.subr.mxu0 0.0
    %2350 = vmatpush1.xpose.msra.mxu0 0.0
    %2351 = vmatprep.mubr.f32.mxu0 0.0
    %2352 = vmatmul.mubr.f32.gmra.mrb[0].mxu0 %v2283
    %v2353 = vpop.f32.mrb[0].mxu0
    %v2354 = vadd.f32 0.0, %v2353
    %v2355 = vpop.f32.mrb[0].mxu0
    %2356 = vdwg.mxu0
    %2357 = vrot.lane.b32.xlu0 %v1944, 120
    %v2358 = vpop.permute.xlu0 %2357
    %2359 = vrot.lane.b32.xlu0 %v1944, 88
    %v2360 = vpop.permute.xlu0 %2359
    %v2361 = vsel %vm126, %v2358, 0
    %v2363 = vsel %vm126, %v2360, 0
    %2365 = vmatprep.subr.mxu0 0.0
    %2366 = vmatpush1.xpose.msra.mxu0 %v2363
    %2367 = vmatprep.subr.mxu0 0.0
    %2368 = vmatpush1.xpose.msra.mxu0 0.0
    %2369 = vmatprep.subr.mxu0 0.0
    %2370 = vmatpush1.xpose.msra.mxu0 0.0
    %2371 = vmatprep.subr.mxu0 0.0
    %2372 = vmatpush1.xpose.msra.mxu0 0.0
    %2373 = vmatprep.subr.mxu0 0.0
    %2374 = vmatpush1.xpose.msra.mxu0 0.0
    %2375 = vmatprep.subr.mxu0 0.0
    %2376 = vmatpush1.xpose.msra.mxu0 0.0
    %2377 = vmatprep.subr.mxu0 0.0
    %2378 = vmatpush1.xpose.msra.mxu0 0.0
    %2379 = vmatprep.subr.mxu0 0.0
    %2380 = vmatpush1.xpose.msra.mxu0 0.0
    %2381 = vmatprep.subr.mxu0 0.0
    %2382 = vmatpush1.xpose.msra.mxu0 0.0
    %2383 = vmatprep.subr.mxu0 0.0
    %2384 = vmatpush1.xpose.msra.mxu0 0.0
    %2385 = vmatprep.subr.mxu0 0.0
    %2386 = vmatpush1.xpose.msra.mxu0 0.0
    %2387 = vmatprep.subr.mxu0 0.0
    %2388 = vmatpush1.xpose.msra.mxu0 0.0
    %2389 = vmatprep.subr.mxu0 0.0
    %2390 = vmatpush1.xpose.msra.mxu0 0.0
    %2391 = vmatprep.subr.mxu0 0.0
    %2392 = vmatpush1.xpose.msra.mxu0 0.0
    %2393 = vmatprep.subr.mxu0 0.0
    %2394 = vmatpush1.xpose.msra.mxu0 0.0
    %2395 = vmatprep.subr.mxu0 0.0
    %2396 = vmatpush1.xpose.msra.mxu0 0.0
    %2397 = vmatprep.subr.mxu0 0.0
    %2398 = vmatpush1.xpose.msra.mxu0 0.0
    %2399 = vmatprep.subr.mxu0 0.0
    %2400 = vmatpush1.xpose.msra.mxu0 0.0
    %2401 = vmatprep.subr.mxu0 0.0
    %2402 = vmatpush1.xpose.msra.mxu0 0.0
    %2403 = vmatprep.subr.mxu0 0.0
    %2404 = vmatpush1.xpose.msra.mxu0 0.0
    %2405 = vmatprep.subr.mxu0 0.0
    %2406 = vmatpush1.xpose.msra.mxu0 0.0
    %2407 = vmatprep.subr.mxu0 0.0
    %2408 = vmatpush1.xpose.msra.mxu0 0.0
    %2409 = vmatprep.subr.mxu0 0.0
    %2410 = vmatpush1.xpose.msra.mxu0 0.0
    %2411 = vmatprep.subr.mxu0 0.0
    %2412 = vmatpush1.xpose.msra.mxu0 0.0
    %2413 = vmatprep.subr.mxu0 0.0
    %2414 = vmatpush1.xpose.msra.mxu0 0.0
    %2415 = vmatprep.subr.mxu0 0.0
    %2416 = vmatpush1.xpose.msra.mxu0 0.0
    %2417 = vmatprep.subr.mxu0 0.0
    %2418 = vmatpush1.xpose.msra.mxu0 0.0
    %2419 = vmatprep.subr.mxu0 0.0
    %2420 = vmatpush1.xpose.msra.mxu0 0.0
    %2421 = vmatprep.subr.mxu0 0.0
    %2422 = vmatpush1.xpose.msra.mxu0 0.0
    %2423 = vmatprep.subr.mxu0 0.0
    %2424 = vmatpush1.xpose.msra.mxu0 0.0
    %2425 = vmatprep.subr.mxu0 0.0
    %2426 = vmatpush1.xpose.msra.mxu0 0.0
    %2427 = vmatprep.subr.mxu0 0.0
    %2428 = vmatpush1.xpose.msra.mxu0 0.0
    %2429 = vmatprep.mubr.f32.mxu0 0.0
    %2430 = vmatmul.mubr.f32.gmra.mrb[0].mxu0 %v2361
    %v2431 = vpop.f32.mrb[0].mxu0
    %v2432 = vadd.f32 0.0, %v2431
    %v2433 = vpop.f32.mrb[0].mxu0
    %2434 = vdwg.mxu0
    %v2435 = vmul.f32 %v2354, 0.35355338
    %v2436 = vmul.f32 %v2432, 0.35355338
    %v2437 = vsel %vm126, %v2435, -inf
    %2438 = vmax.xlane.f32.xlu0 %v2437
    %v2439 = vpop.xlane.xlu0 %2438
    %v2440 = vsel %vm126, %v2436, -inf
    %2441 = vmax.xlane.f32.xlu0 %v2440
    %v2442 = vpop.xlane.xlu0 %2441
    %v2443 = vsub.f32 %v2435, %v2439
    %v2444 = vsub.f32 %v2436, %v2442
    %v2445 = vmul.f32 %v2443, 1.442695
    %v2446 = vpow.pop %v2445
    %v2447 = vmul.f32 %v2444, 1.442695
    %v2448 = vpow.pop %v2447
    %v2449 = vsel %vm126, %v2446, 0.0
    %2450 = vadd.xlane.f32.xlu0 %v2449
    %v2451 = vpop.xlane.xlu0 %2450
    %v2452 = vsel %vm126, %v2448, 0.0
    %2453 = vadd.xlane.f32.xlu0 %v2452
    %v2454 = vpop.xlane.xlu0 %2453
    %v2455 = vrcp.pop %v2451
    %v2456 = vrcp.pop %v2454
    %v2457 = vmul.f32 %v2446, %v2455
    %v2458 = vmul.f32 %v2448, %v2456
    %2459 = vrot.lane.b32.xlu0 %v1939, 56
    %v2460 = vpop.permute.xlu0 %2459
    %v2463 = vsel %vm126, %v2457, 0
    %2465 = vmatprep.subr.mxu0 0.0
    %2466 = vmatpush1.msra.mxu0 %v2460
    %2467 = vmatprep.subr.mxu0 0.0
    %2468 = vmatpush1.msra.mxu0 0.0
    %2469 = vmatprep.subr.mxu0 0.0
    %2470 = vmatpush1.msra.mxu0 0.0
    %2471 = vmatprep.subr.mxu0 0.0
    %2472 = vmatpush1.msra.mxu0 0.0
    %2473 = vmatprep.subr.mxu0 0.0
    %2474 = vmatpush1.msra.mxu0 0.0
    %2475 = vmatprep.subr.mxu0 0.0
    %2476 = vmatpush1.msra.mxu0 0.0
    %2477 = vmatprep.subr.mxu0 0.0
    %2478 = vmatpush1.msra.mxu0 0.0
    %2479 = vmatprep.subr.mxu0 0.0
    %2480 = vmatpush1.msra.mxu0 0.0
    %2481 = vmatprep.subr.mxu0 0.0
    %2482 = vmatpush1.msra.mxu0 0.0
    %2483 = vmatprep.subr.mxu0 0.0
    %2484 = vmatpush1.msra.mxu0 0.0
    %2485 = vmatprep.subr.mxu0 0.0
    %2486 = vmatpush1.msra.mxu0 0.0
    %2487 = vmatprep.subr.mxu0 0.0
    %2488 = vmatpush1.msra.mxu0 0.0
    %2489 = vmatprep.subr.mxu0 0.0
    %2490 = vmatpush1.msra.mxu0 0.0
    %2491 = vmatprep.subr.mxu0 0.0
    %2492 = vmatpush1.msra.mxu0 0.0
    %2493 = vmatprep.subr.mxu0 0.0
    %2494 = vmatpush1.msra.mxu0 0.0
    %2495 = vmatprep.subr.mxu0 0.0
    %2496 = vmatpush1.msra.mxu0 0.0
    %2497 = vmatprep.subr.mxu0 0.0
    %2498 = vmatpush1.msra.mxu0 0.0
    %2499 = vmatprep.subr.mxu0 0.0
    %2500 = vmatpush1.msra.mxu0 0.0
    %2501 = vmatprep.subr.mxu0 0.0
    %2502 = vmatpush1.msra.mxu0 0.0
    %2503 = vmatprep.subr.mxu0 0.0
    %2504 = vmatpush1.msra.mxu0 0.0
    %2505 = vmatprep.subr.mxu0 0.0
    %2506 = vmatpush1.msra.mxu0 0.0
    %2507 = vmatprep.subr.mxu0 0.0
    %2508 = vmatpush1.msra.mxu0 0.0
    %2509 = vmatprep.subr.mxu0 0.0
    %2510 = vmatpush1.msra.mxu0 0.0
    %2511 = vmatprep.subr.mxu0 0.0
    %2512 = vmatpush1.msra.mxu0 0.0
    %2513 = vmatprep.subr.mxu0 0.0
    %2514 = vmatpush1.msra.mxu0 0.0
    %2515 = vmatprep.subr.mxu0 0.0
    %2516 = vmatpush1.msra.mxu0 0.0
    %2517 = vmatprep.subr.mxu0 0.0
    %2518 = vmatpush1.msra.mxu0 0.0
    %2519 = vmatprep.subr.mxu0 0.0
    %2520 = vmatpush1.msra.mxu0 0.0
    %2521 = vmatprep.subr.mxu0 0.0
    %2522 = vmatpush1.msra.mxu0 0.0
    %2523 = vmatprep.subr.mxu0 0.0
    %2524 = vmatpush1.msra.mxu0 0.0
    %2525 = vmatprep.subr.mxu0 0.0
    %2526 = vmatpush1.msra.mxu0 0.0
    %2527 = vmatprep.subr.mxu0 0.0
    %2528 = vmatpush1.msra.mxu0 0.0
    %2529 = vmatprep.mubr.f32.mxu0 0.0
    %2530 = vmatmul.mubr.f32.gmra.mrb[0].mxu0 %v2463
    %v2531 = vpop.f32.mrb[0].mxu0
    %v2532 = vadd.f32 0.0, %v2531
    %v2533 = vpop.f32.mrb[0].mxu0
    %2534 = vdwg.mxu0
    %2535 = vrot.lane.b32.xlu0 %v1944, 56
    %v2536 = vpop.permute.xlu0 %2535
    %v2539 = vsel %vm126, %v2458, 0
    %2541 = vmatprep.subr.mxu0 0.0
    %2542 = vmatpush1.msra.mxu0 %v2536
    %2543 = vmatprep.subr.mxu0 0.0
    %2544 = vmatpush1.msra.mxu0 0.0
    %2545 = vmatprep.subr.mxu0 0.0
    %2546 = vmatpush1.msra.mxu0 0.0
    %2547 = vmatprep.subr.mxu0 0.0
    %2548 = vmatpush1.msra.mxu0 0.0
    %2549 = vmatprep.subr.mxu0 0.0
    %2550 = vmatpush1.msra.mxu0 0.0
    %2551 = vmatprep.subr.mxu0 0.0
    %2552 = vmatpush1.msra.mxu0 0.0
    %2553 = vmatprep.subr.mxu0 0.0
    %2554 = vmatpush1.msra.mxu0 0.0
    %2555 = vmatprep.subr.mxu0 0.0
    %2556 = vmatpush1.msra.mxu0 0.0
    %2557 = vmatprep.subr.mxu0 0.0
    %2558 = vmatpush1.msra.mxu0 0.0
    %2559 = vmatprep.subr.mxu0 0.0
    %2560 = vmatpush1.msra.mxu0 0.0
    %2561 = vmatprep.subr.mxu0 0.0
    %2562 = vmatpush1.msra.mxu0 0.0
    %2563 = vmatprep.subr.mxu0 0.0
    %2564 = vmatpush1.msra.mxu0 0.0
    %2565 = vmatprep.subr.mxu0 0.0
    %2566 = vmatpush1.msra.mxu0 0.0
    %2567 = vmatprep.subr.mxu0 0.0
    %2568 = vmatpush1.msra.mxu0 0.0
    %2569 = vmatprep.subr.mxu0 0.0
    %2570 = vmatpush1.msra.mxu0 0.0
    %2571 = vmatprep.subr.mxu0 0.0
    %2572 = vmatpush1.msra.mxu0 0.0
    %2573 = vmatprep.subr.mxu0 0.0
    %2574 = vmatpush1.msra.mxu0 0.0
    %2575 = vmatprep.subr.mxu0 0.0
    %2576 = vmatpush1.msra.mxu0 0.0
    %2577 = vmatprep.subr.mxu0 0.0
    %2578 = vmatpush1.msra.mxu0 0.0
    %2579 = vmatprep.subr.mxu0 0.0
    %2580 = vmatpush1.msra.mxu0 0.0
    %2581 = vmatprep.subr.mxu0 0.0
    %2582 = vmatpush1.msra.mxu0 0.0
    %2583 = vmatprep.subr.mxu0 0.0
    %2584 = vmatpush1.msra.mxu0 0.0
    %2585 = vmatprep.subr.mxu0 0.0
    %2586 = vmatpush1.msra.mxu0 0.0
    %2587 = vmatprep.subr.mxu0 0.0
    %2588 = vmatpush1.msra.mxu0 0.0
    %2589 = vmatprep.subr.mxu0 0.0
    %2590 = vmatpush1.msra.mxu0 0.0
    %2591 = vmatprep.subr.mxu0 0.0
    %2592 = vmatpush1.msra.mxu0 0.0
    %2593 = vmatprep.subr.mxu0 0.0
    %2594 = vmatpush1.msra.mxu0 0.0
    %2595 = vmatprep.subr.mxu0 0.0
    %2596 = vmatpush1.msra.mxu0 0.0
    %2597 = vmatprep.subr.mxu0 0.0
    %2598 = vmatpush1.msra.mxu0 0.0
    %2599 = vmatprep.subr.mxu0 0.0
    %2600 = vmatpush1.msra.mxu0 0.0
    %2601 = vmatprep.subr.mxu0 0.0
    %2602 = vmatpush1.msra.mxu0 0.0
    %2603 = vmatprep.subr.mxu0 0.0
    %2604 = vmatpush1.msra.mxu0 0.0
    %2605 = vmatprep.mubr.f32.mxu0 0.0
    %2606 = vmatmul.mubr.f32.gmra.mrb[0].mxu0 %v2539
    %v2607 = vpop.f32.mrb[0].mxu0
    %v2608 = vadd.f32 0.0, %v2607
    %v2609 = vpop.f32.mrb[0].mxu0
    %2610 = vdwg.mxu0
    %2613 = vrot.lane.b32.xlu0 %v2532, 8
    %v2614 = vpop.permute.xlu0 %2613
    %2615 = vrot.lane.b32.xlu0 %v2608, 8
    %v2616 = vpop.permute.xlu0 %2615
    %2619 = vst.msk [vmem:[#allocation2] sm:$0xff] %vm796, %v2614
    %2620 = vst.msk [vmem:[#allocation2 + $0x8] sm:$0xff] %vm796, %v2616
    %2621 = vrot.lane.b32.xlu0 %v1939, 112
    %v2622 = vpop.permute.xlu0 %2621
    %2623 = vrot.lane.b32.xlu0 %v1939, 80
    %v2624 = vpop.permute.xlu0 %2623
    %v2625 = vsel %vm126, %v2622, 0
    %v2627 = vsel %vm126, %v2624, 0
    %2629 = vmatprep.subr.mxu0 0.0
    %2630 = vmatpush1.xpose.msra.mxu0 %v2627
    %2631 = vmatprep.subr.mxu0 0.0
    %2632 = vmatpush1.xpose.msra.mxu0 0.0
    %2633 = vmatprep.subr.mxu0 0.0
    %2634 = vmatpush1.xpose.msra.mxu0 0.0
    %2635 = vmatprep.subr.mxu0 0.0
    %2636 = vmatpush1.xpose.msra.mxu0 0.0
    %2637 = vmatprep.subr.mxu0 0.0
    %2638 = vmatpush1.xpose.msra.mxu0 0.0
    %2639 = vmatprep.subr.mxu0 0.0
    %2640 = vmatpush1.xpose.msra.mxu0 0.0
    %2641 = vmatprep.subr.mxu0 0.0
    %2642 = vmatpush1.xpose.msra.mxu0 0.0
    %2643 = vmatprep.subr.mxu0 0.0
    %2644 = vmatpush1.xpose.msra.mxu0 0.0
    %2645 = vmatprep.subr.mxu0 0.0
    %2646 = vmatpush1.xpose.msra.mxu0 0.0
    %2647 = vmatprep.subr.mxu0 0.0
    %2648 = vmatpush1.xpose.msra.mxu0 0.0
    %2649 = vmatprep.subr.mxu0 0.0
    %2650 = vmatpush1.xpose.msra.mxu0 0.0
    %2651 = vmatprep.subr.mxu0 0.0
    %2652 = vmatpush1.xpose.msra.mxu0 0.0
    %2653 = vmatprep.subr.mxu0 0.0
    %2654 = vmatpush1.xpose.msra.mxu0 0.0
    %2655 = vmatprep.subr.mxu0 0.0
    %2656 = vmatpush1.xpose.msra.mxu0 0.0
    %2657 = vmatprep.subr.mxu0 0.0
    %2658 = vmatpush1.xpose.msra.mxu0 0.0
    %2659 = vmatprep.subr.mxu0 0.0
    %2660 = vmatpush1.xpose.msra.mxu0 0.0
    %2661 = vmatprep.subr.mxu0 0.0
    %2662 = vmatpush1.xpose.msra.mxu0 0.0
    %2663 = vmatprep.subr.mxu0 0.0
    %2664 = vmatpush1.xpose.msra.mxu0 0.0
    %2665 = vmatprep.subr.mxu0 0.0
    %2666 = vmatpush1.xpose.msra.mxu0 0.0
    %2667 = vmatprep.subr.mxu0 0.0
    %2668 = vmatpush1.xpose.msra.mxu0 0.0
    %2669 = vmatprep.subr.mxu0 0.0
    %2670 = vmatpush1.xpose.msra.mxu0 0.0
    %2671 = vmatprep.subr.mxu0 0.0
    %2672 = vmatpush1.xpose.msra.mxu0 0.0
    %2673 = vmatprep.subr.mxu0 0.0
    %2674 = vmatpush1.xpose.msra.mxu0 0.0
    %2675 = vmatprep.subr.mxu0 0.0
    %2676 = vmatpush1.xpose.msra.mxu0 0.0
    %2677 = vmatprep.subr.mxu0 0.0
    %2678 = vmatpush1.xpose.msra.mxu0 0.0
    %2679 = vmatprep.subr.mxu0 0.0
    %2680 = vmatpush1.xpose.msra.mxu0 0.0
    %2681 = vmatprep.subr.mxu0 0.0
    %2682 = vmatpush1.xpose.msra.mxu0 0.0
    %2683 = vmatprep.subr.mxu0 0.0
    %2684 = vmatpush1.xpose.msra.mxu0 0.0
    %2685 = vmatprep.subr.mxu0 0.0
    %2686 = vmatpush1.xpose.msra.mxu0 0.0
    %2687 = vmatprep.subr.mxu0 0.0
    %2688 = vmatpush1.xpose.msra.mxu0 0.0
    %2689 = vmatprep.subr.mxu0 0.0
    %2690 = vmatpush1.xpose.msra.mxu0 0.0
    %2691 = vmatprep.subr.mxu0 0.0
    %2692 = vmatpush1.xpose.msra.mxu0 0.0
    %2693 = vmatprep.mubr.f32.mxu0 0.0
    %2694 = vmatmul.mubr.f32.gmra.mrb[0].mxu0 %v2625
    %v2695 = vpop.f32.mrb[0].mxu0
    %v2696 = vadd.f32 0.0, %v2695
    %v2697 = vpop.f32.mrb[0].mxu0
    %2698 = vdwg.mxu0
    %2699 = vrot.lane.b32.xlu0 %v1944, 112
    %v2700 = vpop.permute.xlu0 %2699
    %2701 = vrot.lane.b32.xlu0 %v1944, 80
    %v2702 = vpop.permute.xlu0 %2701
    %v2703 = vsel %vm126, %v2700, 0
    %v2705 = vsel %vm126, %v2702, 0
    %2707 = vmatprep.subr.mxu0 0.0
    %2708 = vmatpush1.xpose.msra.mxu0 %v2705
    %2709 = vmatprep.subr.mxu0 0.0
    %2710 = vmatpush1.xpose.msra.mxu0 0.0
    %2711 = vmatprep.subr.mxu0 0.0
    %2712 = vmatpush1.xpose.msra.mxu0 0.0
    %2713 = vmatprep.subr.mxu0 0.0
    %2714 = vmatpush1.xpose.msra.mxu0 0.0
    %2715 = vmatprep.subr.mxu0 0.0
    %2716 = vmatpush1.xpose.msra.mxu0 0.0
    %2717 = vmatprep.subr.mxu0 0.0
    %2718 = vmatpush1.xpose.msra.mxu0 0.0
    %2719 = vmatprep.subr.mxu0 0.0
    %2720 = vmatpush1.xpose.msra.mxu0 0.0
    %2721 = vmatprep.subr.mxu0 0.0
    %2722 = vmatpush1.xpose.msra.mxu0 0.0
    %2723 = vmatprep.subr.mxu0 0.0
    %2724 = vmatpush1.xpose.msra.mxu0 0.0
    %2725 = vmatprep.subr.mxu0 0.0
    %2726 = vmatpush1.xpose.msra.mxu0 0.0
    %2727 = vmatprep.subr.mxu0 0.0
    %2728 = vmatpush1.xpose.msra.mxu0 0.0
    %2729 = vmatprep.subr.mxu0 0.0
    %2730 = vmatpush1.xpose.msra.mxu0 0.0
    %2731 = vmatprep.subr.mxu0 0.0
    %2732 = vmatpush1.xpose.msra.mxu0 0.0
    %2733 = vmatprep.subr.mxu0 0.0
    %2734 = vmatpush1.xpose.msra.mxu0 0.0
    %2735 = vmatprep.subr.mxu0 0.0
    %2736 = vmatpush1.xpose.msra.mxu0 0.0
    %2737 = vmatprep.subr.mxu0 0.0
    %2738 = vmatpush1.xpose.msra.mxu0 0.0
    %2739 = vmatprep.subr.mxu0 0.0
    %2740 = vmatpush1.xpose.msra.mxu0 0.0
    %2741 = vmatprep.subr.mxu0 0.0
    %2742 = vmatpush1.xpose.msra.mxu0 0.0
    %2743 = vmatprep.subr.mxu0 0.0
    %2744 = vmatpush1.xpose.msra.mxu0 0.0
    %2745 = vmatprep.subr.mxu0 0.0
    %2746 = vmatpush1.xpose.msra.mxu0 0.0
    %2747 = vmatprep.subr.mxu0 0.0
    %2748 = vmatpush1.xpose.msra.mxu0 0.0
    %2749 = vmatprep.subr.mxu0 0.0
    %2750 = vmatpush1.xpose.msra.mxu0 0.0
    %2751 = vmatprep.subr.mxu0 0.0
    %2752 = vmatpush1.xpose.msra.mxu0 0.0
    %2753 = vmatprep.subr.mxu0 0.0
    %2754 = vmatpush1.xpose.msra.mxu0 0.0
    %2755 = vmatprep.subr.mxu0 0.0
    %2756 = vmatpush1.xpose.msra.mxu0 0.0
    %2757 = vmatprep.subr.mxu0 0.0
    %2758 = vmatpush1.xpose.msra.mxu0 0.0
    %2759 = vmatprep.subr.mxu0 0.0
    %2760 = vmatpush1.xpose.msra.mxu0 0.0
    %2761 = vmatprep.subr.mxu0 0.0
    %2762 = vmatpush1.xpose.msra.mxu0 0.0
    %2763 = vmatprep.subr.mxu0 0.0
    %2764 = vmatpush1.xpose.msra.mxu0 0.0
    %2765 = vmatprep.subr.mxu0 0.0
    %2766 = vmatpush1.xpose.msra.mxu0 0.0
    %2767 = vmatprep.subr.mxu0 0.0
    %2768 = vmatpush1.xpose.msra.mxu0 0.0
    %2769 = vmatprep.subr.mxu0 0.0
    %2770 = vmatpush1.xpose.msra.mxu0 0.0
    %2771 = vmatprep.mubr.f32.mxu0 0.0
    %2772 = vmatmul.mubr.f32.gmra.mrb[0].mxu0 %v2703
    %v2773 = vpop.f32.mrb[0].mxu0
    %v2774 = vadd.f32 0.0, %v2773
    %v2775 = vpop.f32.mrb[0].mxu0
    %2776 = vdwg.mxu0
    %v2777 = vmul.f32 %v2696, 0.35355338
    %v2778 = vmul.f32 %v2774, 0.35355338
    %v2779 = vsel %vm126, %v2777, -inf
    %2780 = vmax.xlane.f32.xlu0 %v2779
    %v2781 = vpop.xlane.xlu0 %2780
    %v2782 = vsel %vm126, %v2778, -inf
    %2783 = vmax.xlane.f32.xlu0 %v2782
    %v2784 = vpop.xlane.xlu0 %2783
    %v2785 = vsub.f32 %v2777, %v2781
    %v2786 = vsub.f32 %v2778, %v2784
    %v2787 = vmul.f32 %v2785, 1.442695
    %v2788 = vpow.pop %v2787
    %v2789 = vmul.f32 %v2786, 1.442695
    %v2790 = vpow.pop %v2789
    %v2791 = vsel %vm126, %v2788, 0.0
    %2792 = vadd.xlane.f32.xlu0 %v2791
    %v2793 = vpop.xlane.xlu0 %2792
    %v2794 = vsel %vm126, %v2790, 0.0
    %2795 = vadd.xlane.f32.xlu0 %v2794
    %v2796 = vpop.xlane.xlu0 %2795
    %v2797 = vrcp.pop %v2793
    %v2798 = vrcp.pop %v2796
    %v2799 = vmul.f32 %v2788, %v2797
    %v2800 = vmul.f32 %v2790, %v2798
    %2801 = vrot.lane.b32.xlu0 %v1939, 48
    %v2802 = vpop.permute.xlu0 %2801
    %v2805 = vsel %vm126, %v2799, 0
    %2807 = vmatprep.subr.mxu0 0.0
    %2808 = vmatpush1.msra.mxu0 %v2802
    %2809 = vmatprep.subr.mxu0 0.0
    %2810 = vmatpush1.msra.mxu0 0.0
    %2811 = vmatprep.subr.mxu0 0.0
    %2812 = vmatpush1.msra.mxu0 0.0
    %2813 = vmatprep.subr.mxu0 0.0
    %2814 = vmatpush1.msra.mxu0 0.0
    %2815 = vmatprep.subr.mxu0 0.0
    %2816 = vmatpush1.msra.mxu0 0.0
    %2817 = vmatprep.subr.mxu0 0.0
    %2818 = vmatpush1.msra.mxu0 0.0
    %2819 = vmatprep.subr.mxu0 0.0
    %2820 = vmatpush1.msra.mxu0 0.0
    %2821 = vmatprep.subr.mxu0 0.0
    %2822 = vmatpush1.msra.mxu0 0.0
    %2823 = vmatprep.subr.mxu0 0.0
    %2824 = vmatpush1.msra.mxu0 0.0
    %2825 = vmatprep.subr.mxu0 0.0
    %2826 = vmatpush1.msra.mxu0 0.0
    %2827 = vmatprep.subr.mxu0 0.0
    %2828 = vmatpush1.msra.mxu0 0.0
    %2829 = vmatprep.subr.mxu0 0.0
    %2830 = vmatpush1.msra.mxu0 0.0
    %2831 = vmatprep.subr.mxu0 0.0
    %2832 = vmatpush1.msra.mxu0 0.0
    %2833 = vmatprep.subr.mxu0 0.0
    %2834 = vmatpush1.msra.mxu0 0.0
    %2835 = vmatprep.subr.mxu0 0.0
    %2836 = vmatpush1.msra.mxu0 0.0
    %2837 = vmatprep.subr.mxu0 0.0
    %2838 = vmatpush1.msra.mxu0 0.0
    %2839 = vmatprep.subr.mxu0 0.0
    %2840 = vmatpush1.msra.mxu0 0.0
    %2841 = vmatprep.subr.mxu0 0.0
    %2842 = vmatpush1.msra.mxu0 0.0
    %2843 = vmatprep.subr.mxu0 0.0
    %2844 = vmatpush1.msra.mxu0 0.0
    %2845 = vmatprep.subr.mxu0 0.0
    %2846 = vmatpush1.msra.mxu0 0.0
    %2847 = vmatprep.subr.mxu0 0.0
    %2848 = vmatpush1.msra.mxu0 0.0
    %2849 = vmatprep.subr.mxu0 0.0
    %2850 = vmatpush1.msra.mxu0 0.0
    %2851 = vmatprep.subr.mxu0 0.0
    %2852 = vmatpush1.msra.mxu0 0.0
    %2853 = vmatprep.subr.mxu0 0.0
    %2854 = vmatpush1.msra.mxu0 0.0
    %2855 = vmatprep.subr.mxu0 0.0
    %2856 = vmatpush1.msra.mxu0 0.0
    %2857 = vmatprep.subr.mxu0 0.0
    %2858 = vmatpush1.msra.mxu0 0.0
    %2859 = vmatprep.subr.mxu0 0.0
    %2860 = vmatpush1.msra.mxu0 0.0
    %2861 = vmatprep.subr.mxu0 0.0
    %2862 = vmatpush1.msra.mxu0 0.0
    %2863 = vmatprep.subr.mxu0 0.0
    %2864 = vmatpush1.msra.mxu0 0.0
    %2865 = vmatprep.subr.mxu0 0.0
    %2866 = vmatpush1.msra.mxu0 0.0
    %2867 = vmatprep.subr.mxu0 0.0
    %2868 = vmatpush1.msra.mxu0 0.0
    %2869 = vmatprep.subr.mxu0 0.0
    %2870 = vmatpush1.msra.mxu0 0.0
    %2871 = vmatprep.mubr.f32.mxu0 0.0
    %2872 = vmatmul.mubr.f32.gmra.mrb[0].mxu0 %v2805
    %v2873 = vpop.f32.mrb[0].mxu0
    %v2874 = vadd.f32 0.0, %v2873
    %v2875 = vpop.f32.mrb[0].mxu0
    %2876 = vdwg.mxu0
    %2877 = vrot.lane.b32.xlu0 %v1944, 48
    %v2878 = vpop.permute.xlu0 %2877
    %v2881 = vsel %vm126, %v2800, 0
    %2883 = vmatprep.subr.mxu0 0.0
    %2884 = vmatpush1.msra.mxu0 %v2878
    %2885 = vmatprep.subr.mxu0 0.0
    %2886 = vmatpush1.msra.mxu0 0.0
    %2887 = vmatprep.subr.mxu0 0.0
    %2888 = vmatpush1.msra.mxu0 0.0
    %2889 = vmatprep.subr.mxu0 0.0
    %2890 = vmatpush1.msra.mxu0 0.0
    %2891 = vmatprep.subr.mxu0 0.0
    %2892 = vmatpush1.msra.mxu0 0.0
    %2893 = vmatprep.subr.mxu0 0.0
    %2894 = vmatpush1.msra.mxu0 0.0
    %2895 = vmatprep.subr.mxu0 0.0
    %2896 = vmatpush1.msra.mxu0 0.0
    %2897 = vmatprep.subr.mxu0 0.0
    %2898 = vmatpush1.msra.mxu0 0.0
    %2899 = vmatprep.subr.mxu0 0.0
    %2900 = vmatpush1.msra.mxu0 0.0
    %2901 = vmatprep.subr.mxu0 0.0
    %2902 = vmatpush1.msra.mxu0 0.0
    %2903 = vmatprep.subr.mxu0 0.0
    %2904 = vmatpush1.msra.mxu0 0.0
    %2905 = vmatprep.subr.mxu0 0.0
    %2906 = vmatpush1.msra.mxu0 0.0
    %2907 = vmatprep.subr.mxu0 0.0
    %2908 = vmatpush1.msra.mxu0 0.0
    %2909 = vmatprep.subr.mxu0 0.0
    %2910 = vmatpush1.msra.mxu0 0.0
    %2911 = vmatprep.subr.mxu0 0.0
    %2912 = vmatpush1.msra.mxu0 0.0
    %2913 = vmatprep.subr.mxu0 0.0
    %2914 = vmatpush1.msra.mxu0 0.0
    %2915 = vmatprep.subr.mxu0 0.0
    %2916 = vmatpush1.msra.mxu0 0.0
    %2917 = vmatprep.subr.mxu0 0.0
    %2918 = vmatpush1.msra.mxu0 0.0
    %2919 = vmatprep.subr.mxu0 0.0
    %2920 = vmatpush1.msra.mxu0 0.0
    %2921 = vmatprep.subr.mxu0 0.0
    %2922 = vmatpush1.msra.mxu0 0.0
    %2923 = vmatprep.subr.mxu0 0.0
    %2924 = vmatpush1.msra.mxu0 0.0
    %2925 = vmatprep.subr.mxu0 0.0
    %2926 = vmatpush1.msra.mxu0 0.0
    %2927 = vmatprep.subr.mxu0 0.0
    %2928 = vmatpush1.msra.mxu0 0.0
    %2929 = vmatprep.subr.mxu0 0.0
    %2930 = vmatpush1.msra.mxu0 0.0
    %2931 = vmatprep.subr.mxu0 0.0
    %2932 = vmatpush1.msra.mxu0 0.0
    %2933 = vmatprep.subr.mxu0 0.0
    %2934 = vmatpush1.msra.mxu0 0.0
    %2935 = vmatprep.subr.mxu0 0.0
    %2936 = vmatpush1.msra.mxu0 0.0
    %2937 = vmatprep.subr.mxu0 0.0
    %2938 = vmatpush1.msra.mxu0 0.0
    %2939 = vmatprep.subr.mxu0 0.0
    %2940 = vmatpush1.msra.mxu0 0.0
    %2941 = vmatprep.subr.mxu0 0.0
    %2942 = vmatpush1.msra.mxu0 0.0
    %2943 = vmatprep.subr.mxu0 0.0
    %2944 = vmatpush1.msra.mxu0 0.0
    %2945 = vmatprep.subr.mxu0 0.0
    %2946 = vmatpush1.msra.mxu0 0.0
    %2947 = vmatprep.mubr.f32.mxu0 0.0
    %2948 = vmatmul.mubr.f32.gmra.mrb[0].mxu0 %v2881
    %v2949 = vpop.f32.mrb[0].mxu0
    %v2950 = vadd.f32 0.0, %v2949
    %v2951 = vpop.f32.mrb[0].mxu0
    %2952 = vdwg.mxu0
    %2955 = vrot.lane.b32.xlu0 %v2874, 16
    %v2956 = vpop.permute.xlu0 %2955
    %2957 = vrot.lane.b32.xlu0 %v2950, 16
    %v2958 = vpop.permute.xlu0 %2957
    %2961 = vst.msk [vmem:[#allocation2] sm:$0xff] %vm1139, %v2956
    %2962 = vst.msk [vmem:[#allocation2 + $0x8] sm:$0xff] %vm1139, %v2958
    %2963 = vrot.lane.b32.xlu0 %v1939, 104
    %v2964 = vpop.permute.xlu0 %2963
    %2965 = vrot.lane.b32.xlu0 %v1939, 72
    %v2966 = vpop.permute.xlu0 %2965
    %v2967 = vsel %vm126, %v2964, 0
    %v2969 = vsel %vm126, %v2966, 0
    %2971 = vmatprep.subr.mxu0 0.0
    %2972 = vmatpush1.xpose.msra.mxu0 %v2969
    %2973 = vmatprep.subr.mxu0 0.0
    %2974 = vmatpush1.xpose.msra.mxu0 0.0
    %2975 = vmatprep.subr.mxu0 0.0
    %2976 = vmatpush1.xpose.msra.mxu0 0.0
    %2977 = vmatprep.subr.mxu0 0.0
    %2978 = vmatpush1.xpose.msra.mxu0 0.0
    %2979 = vmatprep.subr.mxu0 0.0
    %2980 = vmatpush1.xpose.msra.mxu0 0.0
    %2981 = vmatprep.subr.mxu0 0.0
    %2982 = vmatpush1.xpose.msra.mxu0 0.0
    %2983 = vmatprep.subr.mxu0 0.0
    %2984 = vmatpush1.xpose.msra.mxu0 0.0
    %2985 = vmatprep.subr.mxu0 0.0
    %2986 = vmatpush1.xpose.msra.mxu0 0.0
    %2987 = vmatprep.subr.mxu0 0.0
    %2988 = vmatpush1.xpose.msra.mxu0 0.0
    %2989 = vmatprep.subr.mxu0 0.0
    %2990 = vmatpush1.xpose.msra.mxu0 0.0
    %2991 = vmatprep.subr.mxu0 0.0
    %2992 = vmatpush1.xpose.msra.mxu0 0.0
    %2993 = vmatprep.subr.mxu0 0.0
    %2994 = vmatpush1.xpose.msra.mxu0 0.0
    %2995 = vmatprep.subr.mxu0 0.0
    %2996 = vmatpush1.xpose.msra.mxu0 0.0
    %2997 = vmatprep.subr.mxu0 0.0
    %2998 = vmatpush1.xpose.msra.mxu0 0.0
    %2999 = vmatprep.subr.mxu0 0.0
    %3000 = vmatpush1.xpose.msra.mxu0 0.0
    %3001 = vmatprep.subr.mxu0 0.0
    %3002 = vmatpush1.xpose.msra.mxu0 0.0
    %3003 = vmatprep.subr.mxu0 0.0
    %3004 = vmatpush1.xpose.msra.mxu0 0.0
    %3005 = vmatprep.subr.mxu0 0.0
    %3006 = vmatpush1.xpose.msra.mxu0 0.0
    %3007 = vmatprep.subr.mxu0 0.0
    %3008 = vmatpush1.xpose.msra.mxu0 0.0
    %3009 = vmatprep.subr.mxu0 0.0
    %3010 = vmatpush1.xpose.msra.mxu0 0.0
    %3011 = vmatprep.subr.mxu0 0.0
    %3012 = vmatpush1.xpose.msra.mxu0 0.0
    %3013 = vmatprep.subr.mxu0 0.0
    %3014 = vmatpush1.xpose.msra.mxu0 0.0
    %3015 = vmatprep.subr.mxu0 0.0
    %3016 = vmatpush1.xpose.msra.mxu0 0.0
    %3017 = vmatprep.subr.mxu0 0.0
    %3018 = vmatpush1.xpose.msra.mxu0 0.0
    %3019 = vmatprep.subr.mxu0 0.0
    %3020 = vmatpush1.xpose.msra.mxu0 0.0
    %3021 = vmatprep.subr.mxu0 0.0
    %3022 = vmatpush1.xpose.msra.mxu0 0.0
    %3023 = vmatprep.subr.mxu0 0.0
    %3024 = vmatpush1.xpose.msra.mxu0 0.0
    %3025 = vmatprep.subr.mxu0 0.0
    %3026 = vmatpush1.xpose.msra.mxu0 0.0
    %3027 = vmatprep.subr.mxu0 0.0
    %3028 = vmatpush1.xpose.msra.mxu0 0.0
    %3029 = vmatprep.subr.mxu0 0.0
    %3030 = vmatpush1.xpose.msra.mxu0 0.0
    %3031 = vmatprep.subr.mxu0 0.0
    %3032 = vmatpush1.xpose.msra.mxu0 0.0
    %3033 = vmatprep.subr.mxu0 0.0
    %3034 = vmatpush1.xpose.msra.mxu0 0.0
    %3035 = vmatprep.mubr.f32.mxu0 0.0
    %3036 = vmatmul.mubr.f32.gmra.mrb[0].mxu0 %v2967
    %v3037 = vpop.f32.mrb[0].mxu0
    %v3038 = vadd.f32 0.0, %v3037
    %v3039 = vpop.f32.mrb[0].mxu0
    %3040 = vdwg.mxu0
    %3041 = vrot.lane.b32.xlu0 %v1944, 104
    %v3042 = vpop.permute.xlu0 %3041
    %3043 = vrot.lane.b32.xlu0 %v1944, 72
    %v3044 = vpop.permute.xlu0 %3043
    %v3045 = vsel %vm126, %v3042, 0
    %v3047 = vsel %vm126, %v3044, 0
    %3049 = vmatprep.subr.mxu0 0.0
    %3050 = vmatpush1.xpose.msra.mxu0 %v3047
    %3051 = vmatprep.subr.mxu0 0.0
    %3052 = vmatpush1.xpose.msra.mxu0 0.0
    %3053 = vmatprep.subr.mxu0 0.0
    %3054 = vmatpush1.xpose.msra.mxu0 0.0
    %3055 = vmatprep.subr.mxu0 0.0
    %3056 = vmatpush1.xpose.msra.mxu0 0.0
    %3057 = vmatprep.subr.mxu0 0.0
    %3058 = vmatpush1.xpose.msra.mxu0 0.0
    %3059 = vmatprep.subr.mxu0 0.0
    %3060 = vmatpush1.xpose.msra.mxu0 0.0
    %3061 = vmatprep.subr.mxu0 0.0
    %3062 = vmatpush1.xpose.msra.mxu0 0.0
    %3063 = vmatprep.subr.mxu0 0.0
    %3064 = vmatpush1.xpose.msra.mxu0 0.0
    %3065 = vmatprep.subr.mxu0 0.0
    %3066 = vmatpush1.xpose.msra.mxu0 0.0
    %3067 = vmatprep.subr.mxu0 0.0
    %3068 = vmatpush1.xpose.msra.mxu0 0.0
    %3069 = vmatprep.subr.mxu0 0.0
    %3070 = vmatpush1.xpose.msra.mxu0 0.0
    %3071 = vmatprep.subr.mxu0 0.0
    %3072 = vmatpush1.xpose.msra.mxu0 0.0
    %3073 = vmatprep.subr.mxu0 0.0
    %3074 = vmatpush1.xpose.msra.mxu0 0.0
    %3075 = vmatprep.subr.mxu0 0.0
    %3076 = vmatpush1.xpose.msra.mxu0 0.0
    %3077 = vmatprep.subr.mxu0 0.0
    %3078 = vmatpush1.xpose.msra.mxu0 0.0
    %3079 = vmatprep.subr.mxu0 0.0
    %3080 = vmatpush1.xpose.msra.mxu0 0.0
    %3081 = vmatprep.subr.mxu0 0.0
    %3082 = vmatpush1.xpose.msra.mxu0 0.0
    %3083 = vmatprep.subr.mxu0 0.0
    %3084 = vmatpush1.xpose.msra.mxu0 0.0
    %3085 = vmatprep.subr.mxu0 0.0
    %3086 = vmatpush1.xpose.msra.mxu0 0.0
    %3087 = vmatprep.subr.mxu0 0.0
    %3088 = vmatpush1.xpose.msra.mxu0 0.0
    %3089 = vmatprep.subr.mxu0 0.0
    %3090 = vmatpush1.xpose.msra.mxu0 0.0
    %3091 = vmatprep.subr.mxu0 0.0
    %3092 = vmatpush1.xpose.msra.mxu0 0.0
    %3093 = vmatprep.subr.mxu0 0.0
    %3094 = vmatpush1.xpose.msra.mxu0 0.0
    %3095 = vmatprep.subr.mxu0 0.0
    %3096 = vmatpush1.xpose.msra.mxu0 0.0
    %3097 = vmatprep.subr.mxu0 0.0
    %3098 = vmatpush1.xpose.msra.mxu0 0.0
    %3099 = vmatprep.subr.mxu0 0.0
    %3100 = vmatpush1.xpose.msra.mxu0 0.0
    %3101 = vmatprep.subr.mxu0 0.0
    %3102 = vmatpush1.xpose.msra.mxu0 0.0
    %3103 = vmatprep.subr.mxu0 0.0
    %3104 = vmatpush1.xpose.msra.mxu0 0.0
    %3105 = vmatprep.subr.mxu0 0.0
    %3106 = vmatpush1.xpose.msra.mxu0 0.0
    %3107 = vmatprep.subr.mxu0 0.0
    %3108 = vmatpush1.xpose.msra.mxu0 0.0
    %3109 = vmatprep.subr.mxu0 0.0
    %3110 = vmatpush1.xpose.msra.mxu0 0.0
    %3111 = vmatprep.subr.mxu0 0.0
    %3112 = vmatpush1.xpose.msra.mxu0 0.0
    %3113 = vmatprep.mubr.f32.mxu0 0.0
    %3114 = vmatmul.mubr.f32.gmra.mrb[0].mxu0 %v3045
    %v3115 = vpop.f32.mrb[0].mxu0
    %v3116 = vadd.f32 0.0, %v3115
    %v3117 = vpop.f32.mrb[0].mxu0
    %3118 = vdwg.mxu0
    %v3119 = vmul.f32 %v3038, 0.35355338
    %v3120 = vmul.f32 %v3116, 0.35355338
    %v3121 = vsel %vm126, %v3119, -inf
    %3122 = vmax.xlane.f32.xlu0 %v3121
    %v3123 = vpop.xlane.xlu0 %3122
    %v3124 = vsel %vm126, %v3120, -inf
    %3125 = vmax.xlane.f32.xlu0 %v3124
    %v3126 = vpop.xlane.xlu0 %3125
    %v3127 = vsub.f32 %v3119, %v3123
    %v3128 = vsub.f32 %v3120, %v3126
    %v3129 = vmul.f32 %v3127, 1.442695
    %v3130 = vpow.pop %v3129
    %v3131 = vmul.f32 %v3128, 1.442695
    %v3132 = vpow.pop %v3131
    %v3133 = vsel %vm126, %v3130, 0.0
    %3134 = vadd.xlane.f32.xlu0 %v3133
    %v3135 = vpop.xlane.xlu0 %3134
    %v3136 = vsel %vm126, %v3132, 0.0
    %3137 = vadd.xlane.f32.xlu0 %v3136
    %v3138 = vpop.xlane.xlu0 %3137
    %v3139 = vrcp.pop %v3135
    %v3140 = vrcp.pop %v3138
    %v3141 = vmul.f32 %v3130, %v3139
    %v3142 = vmul.f32 %v3132, %v3140
    %3143 = vrot.lane.b32.xlu0 %v1939, 40
    %v3144 = vpop.permute.xlu0 %3143
    %v3147 = vsel %vm126, %v3141, 0
    %3149 = vmatprep.subr.mxu0 0.0
    %3150 = vmatpush1.msra.mxu0 %v3144
    %3151 = vmatprep.subr.mxu0 0.0
    %3152 = vmatpush1.msra.mxu0 0.0
    %3153 = vmatprep.subr.mxu0 0.0
    %3154 = vmatpush1.msra.mxu0 0.0
    %3155 = vmatprep.subr.mxu0 0.0
    %3156 = vmatpush1.msra.mxu0 0.0
    %3157 = vmatprep.subr.mxu0 0.0
    %3158 = vmatpush1.msra.mxu0 0.0
    %3159 = vmatprep.subr.mxu0 0.0
    %3160 = vmatpush1.msra.mxu0 0.0
    %3161 = vmatprep.subr.mxu0 0.0
    %3162 = vmatpush1.msra.mxu0 0.0
    %3163 = vmatprep.subr.mxu0 0.0
    %3164 = vmatpush1.msra.mxu0 0.0
    %3165 = vmatprep.subr.mxu0 0.0
    %3166 = vmatpush1.msra.mxu0 0.0
    %3167 = vmatprep.subr.mxu0 0.0
    %3168 = vmatpush1.msra.mxu0 0.0
    %3169 = vmatprep.subr.mxu0 0.0
    %3170 = vmatpush1.msra.mxu0 0.0
    %3171 = vmatprep.subr.mxu0 0.0
    %3172 = vmatpush1.msra.mxu0 0.0
    %3173 = vmatprep.subr.mxu0 0.0
    %3174 = vmatpush1.msra.mxu0 0.0
    %3175 = vmatprep.subr.mxu0 0.0
    %3176 = vmatpush1.msra.mxu0 0.0
    %3177 = vmatprep.subr.mxu0 0.0
    %3178 = vmatpush1.msra.mxu0 0.0
    %3179 = vmatprep.subr.mxu0 0.0
    %3180 = vmatpush1.msra.mxu0 0.0
    %3181 = vmatprep.subr.mxu0 0.0
    %3182 = vmatpush1.msra.mxu0 0.0
    %3183 = vmatprep.subr.mxu0 0.0
    %3184 = vmatpush1.msra.mxu0 0.0
    %3185 = vmatprep.subr.mxu0 0.0
    %3186 = vmatpush1.msra.mxu0 0.0
    %3187 = vmatprep.subr.mxu0 0.0
    %3188 = vmatpush1.msra.mxu0 0.0
    %3189 = vmatprep.subr.mxu0 0.0
    %3190 = vmatpush1.msra.mxu0 0.0
    %3191 = vmatprep.subr.mxu0 0.0
    %3192 = vmatpush1.msra.mxu0 0.0
    %3193 = vmatprep.subr.mxu0 0.0
    %3194 = vmatpush1.msra.mxu0 0.0
    %3195 = vmatprep.subr.mxu0 0.0
    %3196 = vmatpush1.msra.mxu0 0.0
    %3197 = vmatprep.subr.mxu0 0.0
    %3198 = vmatpush1.msra.mxu0 0.0
    %3199 = vmatprep.subr.mxu0 0.0
    %3200 = vmatpush1.msra.mxu0 0.0
    %3201 = vmatprep.subr.mxu0 0.0
    %3202 = vmatpush1.msra.mxu0 0.0
    %3203 = vmatprep.subr.mxu0 0.0
    %3204 = vmatpush1.msra.mxu0 0.0
    %3205 = vmatprep.subr.mxu0 0.0
    %3206 = vmatpush1.msra.mxu0 0.0
    %3207 = vmatprep.subr.mxu0 0.0
    %3208 = vmatpush1.msra.mxu0 0.0
    %3209 = vmatprep.subr.mxu0 0.0
    %3210 = vmatpush1.msra.mxu0 0.0
    %3211 = vmatprep.subr.mxu0 0.0
    %3212 = vmatpush1.msra.mxu0 0.0
    %3213 = vmatprep.mubr.f32.mxu0 0.0
    %3214 = vmatmul.mubr.f32.gmra.mrb[0].mxu0 %v3147
    %v3215 = vpop.f32.mrb[0].mxu0
    %v3216 = vadd.f32 0.0, %v3215
    %v3217 = vpop.f32.mrb[0].mxu0
    %3218 = vdwg.mxu0
    %3219 = vrot.lane.b32.xlu0 %v1944, 40
    %v3220 = vpop.permute.xlu0 %3219
    %v3223 = vsel %vm126, %v3142, 0
    %3225 = vmatprep.subr.mxu0 0.0
    %3226 = vmatpush1.msra.mxu0 %v3220
    %3227 = vmatprep.subr.mxu0 0.0
    %3228 = vmatpush1.msra.mxu0 0.0
    %3229 = vmatprep.subr.mxu0 0.0
    %3230 = vmatpush1.msra.mxu0 0.0
    %3231 = vmatprep.subr.mxu0 0.0
    %3232 = vmatpush1.msra.mxu0 0.0
    %3233 = vmatprep.subr.mxu0 0.0
    %3234 = vmatpush1.msra.mxu0 0.0
    %3235 = vmatprep.subr.mxu0 0.0
    %3236 = vmatpush1.msra.mxu0 0.0
    %3237 = vmatprep.subr.mxu0 0.0
    %3238 = vmatpush1.msra.mxu0 0.0
    %3239 = vmatprep.subr.mxu0 0.0
    %3240 = vmatpush1.msra.mxu0 0.0
    %3241 = vmatprep.subr.mxu0 0.0
    %3242 = vmatpush1.msra.mxu0 0.0
    %3243 = vmatprep.subr.mxu0 0.0
    %3244 = vmatpush1.msra.mxu0 0.0
    %3245 = vmatprep.subr.mxu0 0.0
    %3246 = vmatpush1.msra.mxu0 0.0
    %3247 = vmatprep.subr.mxu0 0.0
    %3248 = vmatpush1.msra.mxu0 0.0
    %3249 = vmatprep.subr.mxu0 0.0
    %3250 = vmatpush1.msra.mxu0 0.0
    %3251 = vmatprep.subr.mxu0 0.0
    %3252 = vmatpush1.msra.mxu0 0.0
    %3253 = vmatprep.subr.mxu0 0.0
    %3254 = vmatpush1.msra.mxu0 0.0
    %3255 = vmatprep.subr.mxu0 0.0
    %3256 = vmatpush1.msra.mxu0 0.0
    %3257 = vmatprep.subr.mxu0 0.0
    %3258 = vmatpush1.msra.mxu0 0.0
    %3259 = vmatprep.subr.mxu0 0.0
    %3260 = vmatpush1.msra.mxu0 0.0
    %3261 = vmatprep.subr.mxu0 0.0
    %3262 = vmatpush1.msra.mxu0 0.0
    %3263 = vmatprep.subr.mxu0 0.0
    %3264 = vmatpush1.msra.mxu0 0.0
    %3265 = vmatprep.subr.mxu0 0.0
    %3266 = vmatpush1.msra.mxu0 0.0
    %3267 = vmatprep.subr.mxu0 0.0
    %3268 = vmatpush1.msra.mxu0 0.0
    %3269 = vmatprep.subr.mxu0 0.0
    %3270 = vmatpush1.msra.mxu0 0.0
    %3271 = vmatprep.subr.mxu0 0.0
    %3272 = vmatpush1.msra.mxu0 0.0
    %3273 = vmatprep.subr.mxu0 0.0
    %3274 = vmatpush1.msra.mxu0 0.0
    %3275 = vmatprep.subr.mxu0 0.0
    %3276 = vmatpush1.msra.mxu0 0.0
    %3277 = vmatprep.subr.mxu0 0.0
    %3278 = vmatpush1.msra.mxu0 0.0
    %3279 = vmatprep.subr.mxu0 0.0
    %3280 = vmatpush1.msra.mxu0 0.0
    %3281 = vmatprep.subr.mxu0 0.0
    %3282 = vmatpush1.msra.mxu0 0.0
    %3283 = vmatprep.subr.mxu0 0.0
    %3284 = vmatpush1.msra.mxu0 0.0
    %3285 = vmatprep.subr.mxu0 0.0
    %3286 = vmatpush1.msra.mxu0 0.0
    %3287 = vmatprep.subr.mxu0 0.0
    %3288 = vmatpush1.msra.mxu0 0.0
    %3289 = vmatprep.mubr.f32.mxu0 0.0
    %3290 = vmatmul.mubr.f32.gmra.mrb[0].mxu0 %v3223
    %v3291 = vpop.f32.mrb[0].mxu0
    %v3292 = vadd.f32 0.0, %v3291
    %v3293 = vpop.f32.mrb[0].mxu0
    %3294 = vdwg.mxu0
    %3297 = vrot.lane.b32.xlu0 %v3216, 24
    %v3298 = vpop.permute.xlu0 %3297
    %3299 = vrot.lane.b32.xlu0 %v3292, 24
    %v3300 = vpop.permute.xlu0 %3299
    %3303 = vst.msk [vmem:[#allocation2] sm:$0xff] %vm1482, %v3298
    %3304 = vst.msk [vmem:[#allocation2 + $0x8] sm:$0xff] %vm1482, %v3300
    %v3305 = vld [vmem:[#allocation2] sm:$0xff]
    %v3306 = vld [vmem:[#allocation2 + $0x8] sm:$0xff]
    %v3307 = vlaneseq
    %v3308 = vshrl.u32 %v3307, 7
    %v3309 = vsub.s32 1, %v3308
    %v3310 = vrot.slane %v1861, %v3309
    %3315 = vrot.lane.b32.xlu0 %v1843, 32
    %v3316 = vpop.permute.xlu0 %3315
    %3317 = vrot.lane.b32.xlu0 %v1845, 32
    %v3318 = vpop.permute.xlu0 %3317
    %3319 = vrot.lane.b32.xlu0 %v1847, 32
    %v3320 = vpop.permute.xlu0 %3319
    %3321 = vrot.lane.b32.xlu0 %v1849, 32
    %v3322 = vpop.permute.xlu0 %3321
    %v3328 = vsel %vm41, %v3305, 0
    %v3331 = vsel %vm41, %v3306, 0
    %3333 = vmatprep.subr.mxu0 0.0
    %3334 = vmatpush1.msra.mxu0 %v3316
    %3335 = vmatprep.subr.mxu0 0.0
    %3336 = vmatpush1.msra.mxu0 %v3318
    %3337 = vmatprep.subr.mxu0 0.0
    %3338 = vmatpush1.msra.mxu0 %v3320
    %3339 = vmatprep.subr.mxu0 0.0
    %3340 = vmatpush1.msra.mxu0 %v3322
    %3341 = vmatprep.subr.mxu0 0.0
    %3342 = vmatpush1.msra.mxu0 0.0
    %3343 = vmatprep.subr.mxu0 0.0
    %3344 = vmatpush1.msra.mxu0 0.0
    %3345 = vmatprep.subr.mxu0 0.0
    %3346 = vmatpush1.msra.mxu0 0.0
    %3347 = vmatprep.subr.mxu0 0.0
    %3348 = vmatpush1.msra.mxu0 0.0
    %3349 = vmatprep.subr.mxu0 0.0
    %3350 = vmatpush1.msra.mxu0 0.0
    %3351 = vmatprep.subr.mxu0 0.0
    %3352 = vmatpush1.msra.mxu0 0.0
    %3353 = vmatprep.subr.mxu0 0.0
    %3354 = vmatpush1.msra.mxu0 0.0
    %3355 = vmatprep.subr.mxu0 0.0
    %3356 = vmatpush1.msra.mxu0 0.0
    %3357 = vmatprep.subr.mxu0 0.0
    %3358 = vmatpush1.msra.mxu0 0.0
    %3359 = vmatprep.subr.mxu0 0.0
    %3360 = vmatpush1.msra.mxu0 0.0
    %3361 = vmatprep.subr.mxu0 0.0
    %3362 = vmatpush1.msra.mxu0 0.0
    %3363 = vmatprep.subr.mxu0 0.0
    %3364 = vmatpush1.msra.mxu0 0.0
    %3365 = vmatprep.subr.mxu0 0.0
    %3366 = vmatpush1.msra.mxu0 0.0
    %3367 = vmatprep.subr.mxu0 0.0
    %3368 = vmatpush1.msra.mxu0 0.0
    %3369 = vmatprep.subr.mxu0 0.0
    %3370 = vmatpush1.msra.mxu0 0.0
    %3371 = vmatprep.subr.mxu0 0.0
    %3372 = vmatpush1.msra.mxu0 0.0
    %3373 = vmatprep.subr.mxu0 0.0
    %3374 = vmatpush1.msra.mxu0 0.0
    %3375 = vmatprep.subr.mxu0 0.0
    %3376 = vmatpush1.msra.mxu0 0.0
    %3377 = vmatprep.subr.mxu0 0.0
    %3378 = vmatpush1.msra.mxu0 0.0
    %3379 = vmatprep.subr.mxu0 0.0
    %3380 = vmatpush1.msra.mxu0 0.0
    %3381 = vmatprep.subr.mxu0 0.0
    %3382 = vmatpush1.msra.mxu0 0.0
    %3383 = vmatprep.subr.mxu0 0.0
    %3384 = vmatpush1.msra.mxu0 0.0
    %3385 = vmatprep.subr.mxu0 0.0
    %3386 = vmatpush1.msra.mxu0 0.0
    %3387 = vmatprep.subr.mxu0 0.0
    %3388 = vmatpush1.msra.mxu0 0.0
    %3389 = vmatprep.subr.mxu0 0.0
    %3390 = vmatpush1.msra.mxu0 0.0
    %3391 = vmatprep.subr.mxu0 0.0
    %3392 = vmatpush1.msra.mxu0 0.0
    %3393 = vmatprep.subr.mxu0 0.0
    %3394 = vmatpush1.msra.mxu0 0.0
    %3395 = vmatprep.subr.mxu0 0.0
    %3396 = vmatpush1.msra.mxu0 0.0
    %3397 = vmatprep.mubr.f32.mxu0 0.0
    %3398 = vmatmul.mubr.f32.gmra.mrb[0].mxu0 %v3328
    %v3399 = vpop.f32.mrb[0].mxu0
    %v3400 = vadd.f32 %v3310, %v3399
    %v3401 = vpop.f32.mrb[0].mxu0
    %3402 = vmatprep.mubr.f32.mxu0 0.0
    %3403 = vmatmul.mubr.f32.gmra.mrb[0].mxu0 %v3331
    %v3404 = vpop.f32.mrb[0].mxu0
    %v3405 = vadd.f32 %v3310, %v3404
    %v3406 = vpop.f32.mrb[0].mxu0
    %3407 = vdwg.mxu0
    %v3408 = vadd.f32 %v3400, %v1840
    %v3409 = vadd.f32 %v3405, %v1841
    %v3410 = vsel %vm41, %v3408, 0.0
    %3411 = vadd.xlane.f32.xlu0 %v3410
    %v3412 = vpop.xlane.xlu0 %3411
    %v3413 = vsel %vm41, %v3409, 0.0
    %3414 = vadd.xlane.f32.xlu0 %v3413
    %v3415 = vpop.xlane.xlu0 %3414
    %v3416 = vmul.f32 %v3412, %v1596
    %v3417 = vmul.f32 %v3415, %v1596
    %v3418 = vsub.f32 %v3408, %v3416
    %v3419 = vsub.f32 %v3409, %v3417
    %v3420 = vmul.f32 %v3418, %v3418
    %v3421 = vmul.f32 %v3419, %v3419
    %v3422 = vsel %vm41, %v3420, 0.0
    %3423 = vadd.xlane.f32.xlu0 %v3422
    %v3424 = vpop.xlane.xlu0 %3423
    %v3425 = vsel %vm41, %v3421, 0.0
    %3426 = vadd.xlane.f32.xlu0 %v3425
    %v3427 = vpop.xlane.xlu0 %3426
    %v3428 = vmul.f32 %v3424, %v1596
    %v3429 = vmul.f32 %v3427, %v1596
    %v3430 = vadd.f32 %v3428, 1e-06
    %v3431 = vadd.f32 %v3429, 1e-06
    %v3432 = vrsqrt.pop %v3430
    %v3433 = vrsqrt.pop %v3431
    %v3434 = vmul.f32 %v3418, %v3432
    %v3435 = vmul.f32 %v3419, %v3433
    %v3436 = vlaneseq
    %v3437 = vshrl.u32 %v3436, 7
    %v3438 = vsub.s32 2, %v3437
    %v3439 = vrot.slane %v1861, %v3438
    %v3440 = vmul.f32 %v3434, %v3439
    %v3441 = vmul.f32 %v3435, %v3439
    %v3442 = vlaneseq
    %v3443 = vshrl.u32 %v3442, 7
    %v3444 = vsub.s32 3, %v3443
    %v3445 = vrot.slane %v1861, %v3444
    %v3446 = vadd.f32 %v3440, %v3445
    %v3447 = vadd.f32 %v3441, %v3445
    %v3448 = vlaneseq
    %v3449 = vshrl.u32 %v3448, 7
    %v3450 = vsub.s32 4, %v3449
    %v3451 = vrot.slane %v1861, %v3450
    %v3453 = vsel %vm41, %v3446, 0
    %v3456 = vsel %vm41, %v3447, 0
    %3458 = vmatprep.subr.mxu0 0.0
    %3459 = vmatpush1.msra.mxu0 %v1844
    %3460 = vmatprep.subr.mxu0 0.0
    %3461 = vmatpush1.msra.mxu0 %v1846
    %3462 = vmatprep.subr.mxu0 0.0
    %3463 = vmatpush1.msra.mxu0 %v1848
    %3464 = vmatprep.subr.mxu0 0.0
    %3465 = vmatpush1.msra.mxu0 %v1850
    %3466 = vmatprep.subr.mxu0 0.0
    %3467 = vmatpush1.msra.mxu0 0.0
    %3468 = vmatprep.subr.mxu0 0.0
    %3469 = vmatpush1.msra.mxu0 0.0
    %3470 = vmatprep.subr.mxu0 0.0
    %3471 = vmatpush1.msra.mxu0 0.0
    %3472 = vmatprep.subr.mxu0 0.0
    %3473 = vmatpush1.msra.mxu0 0.0
    %3474 = vmatprep.subr.mxu0 0.0
    %3475 = vmatpush1.msra.mxu0 0.0
    %3476 = vmatprep.subr.mxu0 0.0
    %3477 = vmatpush1.msra.mxu0 0.0
    %3478 = vmatprep.subr.mxu0 0.0
    %3479 = vmatpush1.msra.mxu0 0.0
    %3480 = vmatprep.subr.mxu0 0.0
    %3481 = vmatpush1.msra.mxu0 0.0
    %3482 = vmatprep.subr.mxu0 0.0
    %3483 = vmatpush1.msra.mxu0 0.0
    %3484 = vmatprep.subr.mxu0 0.0
    %3485 = vmatpush1.msra.mxu0 0.0
    %3486 = vmatprep.subr.mxu0 0.0
    %3487 = vmatpush1.msra.mxu0 0.0
    %3488 = vmatprep.subr.mxu0 0.0
    %3489 = vmatpush1.msra.mxu0 0.0
    %3490 = vmatprep.subr.mxu0 0.0
    %3491 = vmatpush1.msra.mxu0 0.0
    %3492 = vmatprep.subr.mxu0 0.0
    %3493 = vmatpush1.msra.mxu0 0.0
    %3494 = vmatprep.subr.mxu0 0.0
    %3495 = vmatpush1.msra.mxu0 0.0
    %3496 = vmatprep.subr.mxu0 0.0
    %3497 = vmatpush1.msra.mxu0 0.0
    %3498 = vmatprep.subr.mxu0 0.0
    %3499 = vmatpush1.msra.mxu0 0.0
    %3500 = vmatprep.subr.mxu0 0.0
    %3501 = vmatpush1.msra.mxu0 0.0
    %3502 = vmatprep.subr.mxu0 0.0
    %3503 = vmatpush1.msra.mxu0 0.0
    %3504 = vmatprep.subr.mxu0 0.0
    %3505 = vmatpush1.msra.mxu0 0.0
    %3506 = vmatprep.subr.mxu0 0.0
    %3507 = vmatpush1.msra.mxu0 0.0
    %3508 = vmatprep.subr.mxu0 0.0
    %3509 = vmatpush1.msra.mxu0 0.0
    %3510 = vmatprep.subr.mxu0 0.0
    %3511 = vmatpush1.msra.mxu0 0.0
    %3512 = vmatprep.subr.mxu0 0.0
    %3513 = vmatpush1.msra.mxu0 0.0
    %3514 = vmatprep.subr.mxu0 0.0
    %3515 = vmatpush1.msra.mxu0 0.0
    %3516 = vmatprep.subr.mxu0 0.0
    %3517 = vmatpush1.msra.mxu0 0.0
    %3518 = vmatprep.subr.mxu0 0.0
    %3519 = vmatpush1.msra.mxu0 0.0
    %3520 = vmatprep.subr.mxu0 0.0
    %3521 = vmatpush1.msra.mxu0 0.0
    %3522 = vmatprep.mubr.f32.mxu0 0.0
    %3523 = vmatmul.mubr.f32.gmra.mrb[0].mxu0 %v3453
    %v3524 = vpop.f32.mrb[0].mxu0
    %v3525 = vadd.f32 %v3451, %v3524
    %v3526 = vpop.f32.mrb[0].mxu0
    %3527 = vmatprep.mubr.f32.mxu0 0.0
    %3528 = vmatmul.mubr.f32.gmra.mrb[0].mxu0 %v3456
    %v3529 = vpop.f32.mrb[0].mxu0
    %v3530 = vadd.f32 %v3451, %v3529
    %v3531 = vpop.f32.mrb[0].mxu0
    %3532 = vdwg.mxu0
    %v3533 = vmax.f32 %v3525, 0.0
    %v3534 = vmax.f32 %v3530, 0.0
    %v3535 = vlaneseq
    %v3536 = vshrl.u32 %v3535, 7
    %v3537 = vsub.s32 5, %v3536
    %v3538 = vrot.slane %v1861, %v3537
    %v3540 = vsel %vm1720, %v3533, 0
    %v3543 = vsel %vm1720, %v3534, 0
    %3545 = vmatprep.subr.mxu0 0.0
    %3546 = vmatpush1.msra.mxu0 %v1852
    %3547 = vmatprep.subr.mxu0 0.0
    %3548 = vmatpush1.msra.mxu0 %v1853
    %3549 = vmatprep.subr.mxu0 0.0
    %3550 = vmatpush1.msra.mxu0 %v1854
    %3551 = vmatprep.subr.mxu0 0.0
    %3552 = vmatpush1.msra.mxu0 %v1855
    %3553 = vmatprep.subr.mxu0 0.0
    %3554 = vmatpush1.msra.mxu0 %v1856
    %3555 = vmatprep.subr.mxu0 0.0
    %3556 = vmatpush1.msra.mxu0 %v1857
    %3557 = vmatprep.subr.mxu0 0.0
    %3558 = vmatpush1.msra.mxu0 %v1858
    %3559 = vmatprep.subr.mxu0 0.0
    %3560 = vmatpush1.msra.mxu0 %v1859
    %3561 = vmatprep.subr.mxu0 0.0
    %3562 = vmatpush1.msra.mxu0 0.0
    %3563 = vmatprep.subr.mxu0 0.0
    %3564 = vmatpush1.msra.mxu0 0.0
    %3565 = vmatprep.subr.mxu0 0.0
    %3566 = vmatpush1.msra.mxu0 0.0
    %3567 = vmatprep.subr.mxu0 0.0
    %3568 = vmatpush1.msra.mxu0 0.0
    %3569 = vmatprep.subr.mxu0 0.0
    %3570 = vmatpush1.msra.mxu0 0.0
    %3571 = vmatprep.subr.mxu0 0.0
    %3572 = vmatpush1.msra.mxu0 0.0
    %3573 = vmatprep.subr.mxu0 0.0
    %3574 = vmatpush1.msra.mxu0 0.0
    %3575 = vmatprep.subr.mxu0 0.0
    %3576 = vmatpush1.msra.mxu0 0.0
    %3577 = vmatprep.subr.mxu0 0.0
    %3578 = vmatpush1.msra.mxu0 0.0
    %3579 = vmatprep.subr.mxu0 0.0
    %3580 = vmatpush1.msra.mxu0 0.0
    %3581 = vmatprep.subr.mxu0 0.0
    %3582 = vmatpush1.msra.mxu0 0.0
    %3583 = vmatprep.subr.mxu0 0.0
    %3584 = vmatpush1.msra.mxu0 0.0
    %3585 = vmatprep.subr.mxu0 0.0
    %3586 = vmatpush1.msra.mxu0 0.0
    %3587 = vmatprep.subr.mxu0 0.0
    %3588 = vmatpush1.msra.mxu0 0.0
    %3589 = vmatprep.subr.mxu0 0.0
    %3590 = vmatpush1.msra.mxu0 0.0
    %3591 = vmatprep.subr.mxu0 0.0
    %3592 = vmatpush1.msra.mxu0 0.0
    %3593 = vmatprep.subr.mxu0 0.0
    %3594 = vmatpush1.msra.mxu0 0.0
    %3595 = vmatprep.subr.mxu0 0.0
    %3596 = vmatpush1.msra.mxu0 0.0
    %3597 = vmatprep.subr.mxu0 0.0
    %3598 = vmatpush1.msra.mxu0 0.0
    %3599 = vmatprep.subr.mxu0 0.0
    %3600 = vmatpush1.msra.mxu0 0.0
    %3601 = vmatprep.subr.mxu0 0.0
    %3602 = vmatpush1.msra.mxu0 0.0
    %3603 = vmatprep.subr.mxu0 0.0
    %3604 = vmatpush1.msra.mxu0 0.0
    %3605 = vmatprep.subr.mxu0 0.0
    %3606 = vmatpush1.msra.mxu0 0.0
    %3607 = vmatprep.subr.mxu0 0.0
    %3608 = vmatpush1.msra.mxu0 0.0
    %3609 = vmatprep.mubr.f32.mxu0 0.0
    %3610 = vmatmul.mubr.f32.gmra.mrb[0].mxu0 %v3540
    %v3611 = vpop.f32.mrb[0].mxu0
    %v3612 = vadd.f32 %v3538, %v3611
    %v3613 = vpop.f32.mrb[0].mxu0
    %3614 = vmatprep.mubr.f32.mxu0 0.0
    %3615 = vmatmul.mubr.f32.gmra.mrb[0].mxu0 %v3543
    %v3616 = vpop.f32.mrb[0].mxu0
    %v3617 = vadd.f32 %v3538, %v3616
    %v3618 = vpop.f32.mrb[0].mxu0
    %3619 = vdwg.mxu0
    %v3620 = vadd.f32 %v3612, %v3446
    %v3621 = vadd.f32 %v3617, %v3447
    %v3622 = vsel %vm41, %v3620, 0.0
    %3623 = vadd.xlane.f32.xlu0 %v3622
    %v3624 = vpop.xlane.xlu0 %3623
    %v3625 = vsel %vm41, %v3621, 0.0
    %3626 = vadd.xlane.f32.xlu0 %v3625
    %v3627 = vpop.xlane.xlu0 %3626
    %v3628 = vmul.f32 %v3624, %v1596
    %v3629 = vmul.f32 %v3627, %v1596
    %v3630 = vsub.f32 %v3620, %v3628
    %v3631 = vsub.f32 %v3621, %v3629
    %v3632 = vmul.f32 %v3630, %v3630
    %v3633 = vmul.f32 %v3631, %v3631
    %v3634 = vsel %vm41, %v3632, 0.0
    %3635 = vadd.xlane.f32.xlu0 %v3634
    %v3636 = vpop.xlane.xlu0 %3635
    %v3637 = vsel %vm41, %v3633, 0.0
    %3638 = vadd.xlane.f32.xlu0 %v3637
    %v3639 = vpop.xlane.xlu0 %3638
    %v3640 = vmul.f32 %v3636, %v1596
    %v3641 = vmul.f32 %v3639, %v1596
    %v3642 = vadd.f32 %v3640, 1e-06
    %v3643 = vadd.f32 %v3641, 1e-06
    %v3644 = vrsqrt.pop %v3642
    %v3645 = vrsqrt.pop %v3643
    %v3646 = vmul.f32 %v3630, %v3644
    %v3647 = vmul.f32 %v3631, %v3645
    %v3648 = vlaneseq
    %v3649 = vshrl.u32 %v3648, 7
    %v3650 = vsub.s32 6, %v3649
    %v3651 = vrot.slane %v1861, %v3650
    %v3652 = vmul.f32 %v3646, %v3651
    %v3653 = vmul.f32 %v3647, %v3651
    %v3654 = vlaneseq
    %v3655 = vshrl.u32 %v3654, 7
    %v3656 = vsub.s32 7, %v3655
    %v3657 = vrot.slane %v1861, %v3656
    %v3658 = vadd.f32 %v3652, %v3657
    %v3659 = vadd.f32 %v3653, %v3657
    %3660 = vst.msk [vmem:[#allocation3] sm:$0xff] %vm41, %v3658
    %3661 = vst.msk [vmem:[#allocation3 + $0x8] sm:$0xff] %vm41, %v3659
    // Predicated region
    $region18: #{encoder_forward.1} parent=1 // pred_check
      _
    $region19: #{encoder_forward.1} parent=1 // pred_check_branch
      %3663 = sbr.rel (0) target = $region21
    $region20: #{encoder_forward.1} parent=1 // pred_region
      %s3665 = ssub.s32 256, 256
      %3666 = vsyncadd [#allocation4], %s3665
      %s3667 = sshll.u32 [#allocation3], 4
      %s3668 = int_to_ptr.vmem [resolvable:$true] %s3667
      %3673 = dma.vmem_to_hbm [thread:$0]  %s3668, 256, %s4, [#allocation4], 128, 128, 8
    $region21: #{encoder_forward.1} parent=1 // pred_fallthru
      _
    // Predicated region
    $region22: #{encoder_forward.1} parent=1 // pred_check
      _
    $region23: #{encoder_forward.1} parent=1 // pred_check_branch
      %3675 = sbr.rel (0) target = $region25
    $region24: #{encoder_forward.1} parent=1 // pred_region
      %3676 = dma.done [#allocation4], 256
    $region25: #{encoder_forward.1} parent=1 // pred_fallthru
      _
    %3677 = vsyncpa [#allocation4], 1

</llo_original>
